<compile_context>
chip_gen: v5e
topology: v5e:2x2
jax: 0.10.0
libtpu: 0.0.40
codegen_flags: <defaults>
</compile_context>

<pallas_src>
import functools

import jax
import jax.numpy as jnp
from jax.experimental import pallas as pl
from jax.experimental.pallas import tpu as pltpu

LEAKY_SLOPE = 0.2
BN_EPS = 1e-5


def _round_up(x, m):
    return ((x + m - 1) // m) * m


def _vmem_spec():
    return pl.BlockSpec(memory_space=pltpu.MemorySpace.VMEM)


# ----------------------------------------------------------------------------
# In-kernel helpers (all f32 except the bf16 MXU inputs)
# ----------------------------------------------------------------------------
def _lin(h, w_ref, b_ref):
    # bf16 weights feed the MXU; accumulate + bias in f32.
    return jnp.dot(h.astype(jnp.bfloat16), w_ref[...],
                   preferred_element_type=jnp.float32) + b_ref[...]


def _leaky(y):
    return jnp.where(y > 0, y, LEAKY_SLOPE * y)


def _bn(y):
    # nn.BatchNorm1d in training mode (module default): biased batch stats,
    # gamma=1 / beta=0 at init.  Running stats are not updated (inference-style).
    mean = jnp.mean(y, axis=0, keepdims=True)
    var = jnp.mean((y - mean) ** 2, axis=0, keepdims=True)
    return (y - mean) * jax.lax.rsqrt(var + BN_EPS)


# ----------------------------------------------------------------------------
# Fused 5-layer generator kernel: z(B,128p) -> img(B,896p)
# ----------------------------------------------------------------------------
def _gen_kernel(z_ref, w1, b1, w2, b2, w3, b3, w4, b4, w5, b5, o_ref):
    h = z_ref[...]                              # (B, 128)  f32
    h = _leaky(_lin(h, w1, b1))                 # (B, 128)  Linear + LeakyReLU
    h = _leaky(_bn(_lin(h, w2, b2)))            # (B, 256)  Linear + BN + LeakyReLU
    h = _leaky(_bn(_lin(h, w3, b3)))            # (B, 512)
    h = _leaky(_bn(_lin(h, w4, b4)))            # (B, 1024)
    o_ref[...] = jnp.tanh(_lin(h, w5, b5))      # (B, 896)  Linear + Tanh


# ----------------------------------------------------------------------------
# Fused 5-layer discriminator kernel: img(B,896p) -> logits(B,128p)
# ----------------------------------------------------------------------------
def _disc_kernel(x_ref, w1, b1, w2, b2, w3, b3, w4, b4, w5, b5, o_ref):
    h = x_ref[...]                              # (B, 896)  f32
    h = _leaky(_lin(h, w1, b1))                 # (B, 1024) Linear + LeakyReLU
    # TODO(synk): nn.Dropout(0.4) after the next two layers is stochastic in
    # train mode; implemented as identity (eval-mode semantics).
    h = _leaky(_lin(h, w2, b2))                 # (B, 512)
    h = _leaky(_lin(h, w3, b3))                 # (B, 256)
    h = _lin(h, w4, b4)                         # (B, 128)  Linear only
    h = _lin(h, w5, b5)                         # (B, 128)  Linear only (col 0 is real)
    o_ref[...] = jax.nn.sigmoid(h)              # Sigmoid


# ----------------------------------------------------------------------------
# Wrappers (jitted per-instance so pad/slice/reshape fuse around one kernel)
# ----------------------------------------------------------------------------
def _cost_estimate(params, batch, transcendentals):
    dims = [(w.shape[0], w.shape[1]) for w, _ in params]
    flops = 2 * batch * sum(di * do for di, do in dims)
    wbytes = sum(di * do * 2 + do * 4 for di, do in dims)          # bf16 W + f32 b
    io = batch * (dims[0][0] + dims[-1][1]) * 4
    return pl.CostEstimate(flops=flops, transcendentals=transcendentals,
                           bytes_accessed=wbytes + io)


def _gen_forward(params, z, *, latent_dim, lat_pad, img_dim, img_pad, img_shape):
    B = z.shape[0]
    z_pad = jnp.pad(z.astype(jnp.float32), ((0, 0), (0, lat_pad - latent_dim)))
    flat = [t for wb in params for t in wb]
    out = pl.pallas_call(
        _gen_kernel,
        out_shape=jax.ShapeDtypeStruct((B, img_pad), jnp.float32),
        in_specs=[_vmem_spec() for _ in range(1 + len(flat))],
        out_specs=_vmem_spec(),
        cost_estimate=_cost_estimate(params, B,
                                     transcendentals=B * img_pad + 2 * 1024),
    )(z_pad, *flat)
    return out[:, :img_dim].reshape(B, *img_shape)


def _disc_forward(params, x, *, img_dim, img_pad, out_pad):
    B = x.shape[0]
    xf = x.reshape(B, -1).astype(jnp.float32)
    x_pad = jnp.pad(xf, ((0, 0), (0, img_pad - img_dim)))
    flat = [t for wb in params for t in wb]
    out = pl.pallas_call(
        _disc_kernel,
        out_shape=jax.ShapeDtypeStruct((B, out_pad), jnp.float32),
        in_specs=[_vmem_spec() for _ in range(1 + len(flat))],
        out_specs=_vmem_spec(),
        cost_estimate=_cost_estimate(params, B, transcendentals=B * out_pad),
    )(x_pad, *flat)
    return out[:, :1]


# ----------------------------------------------------------------------------
# Deterministic parameter construction (shapes from CGAN.__init__, condition=False)
# Weights are zero-padded to 128-aligned dims and stored in bf16.
# ----------------------------------------------------------------------------
def _init_linear(key, real_dims, pad_dims):
    din, dout = real_dims
    din_p, dout_p = pad_dims
    std = (2.0 / (din + dout)) ** 0.5                       # xavier_normal-style
    w = std * jax.random.normal(key, (din, dout), jnp.float32)
    w_pad = jnp.zeros((din_p, dout_p), jnp.float32).at[:din, :dout].set(w)
    b_pad = jnp.zeros((1, dout_p), jnp.float32)             # bias = 0
    return w_pad.astype(jnp.bfloat16), b_pad


class CGANPallas:
    def __init__(self, img_size=28, latent_dim=100, seed=0):
        self.channels = 1
        self.img_size = img_size
        self.latent_dim = latent_dim
        self.img_shape = (self.channels, img_size, img_size)
        img_dim = self.channels * img_size * img_size

        lat_pad = _round_up(latent_dim, 128)
        img_pad = _round_up(img_dim, 128)
        out_pad = 128                                       # disc output 1 -> 128

        keys = jax.random.split(jax.random.PRNGKey(seed), 10)

        gen_real = [(latent_dim, 128), (128, 256), (256, 512),
                    (512, 1024), (1024, img_dim)]
        gen_pad = [(lat_pad, 128), (128, 256), (256, 512),
                   (512, 1024), (1024, img_pad)]
        self.gen_params = [_init_linear(k, r, p)
                           for k, r, p in zip(keys[:5], gen_real, gen_pad)]

        disc_real = [(img_dim, 1024), (1024, 512), (512, 256),
                     (256, 128), (128, 1)]
        disc_pad = [(img_pad, 1024), (1024, 512), (512, 256),
                    (256, 128), (128, out_pad)]
        self.disc_params = [_init_linear(k, r, p)
                            for k, r, p in zip(keys[5:], disc_real, disc_pad)]

        self._gen_fwd = jax.jit(functools.partial(
            _gen_forward, latent_dim=latent_dim, lat_pad=lat_pad,
            img_dim=img_dim, img_pad=img_pad, img_shape=self.img_shape))
        self._disc_fwd = jax.jit(functools.partial(
            _disc_forward, img_dim=img_dim, img_pad=img_pad, out_pad=out_pad))

    def forward(self, x):
        if x.ndim == 2:
            # generator path: (B, latent_dim) -> (B, 1, H, W)
            return self._gen_fwd(self.gen_params, x)
        elif x.ndim == 4:
            # discriminator path: (B, 1, H, W) -> (B, 1)
            return self._disc_fwd(self.disc_params, x)
        else:
            raise ValueError("input must be 2-D (latent) or 4-D (image NCHW)")


# ----------------------------------------------------------------------------
# Demo
# ----------------------------------------------------------------------------
if __name__ == "__main__":
    model = CGANPallas(img_size=28, latent_dim=100, seed=0)

    key = jax.random.PRNGKey(0)
    kz, kimg = jax.random.split(key)

    # generator input: (B, latent_dim)
    z = jax.random.normal(kz, (2, 100), jnp.float32)
    # discriminator input: NCHW image
    img = jax.random.normal(kimg, (2, 1, 28, 28), jnp.float32)

    gen_out = model.forward(z)          # -> (2, 1, 28, 28)
    disc_out = model.forward(img)       # -> (2, 1)

    jax.block_until_ready(gen_out)
    jax.block_until_ready(disc_out)

    assert gen_out.shape == (2, 1, 28, 28)
    assert disc_out.shape == (2, 1)
    assert bool(jnp.all(jnp.abs(gen_out) <= 1.0))            # tanh range
    assert bool(jnp.all((disc_out >= 0) & (disc_out <= 1)))  # sigmoid range
    assert bool(jnp.all(jnp.isfinite(gen_out)))
    assert bool(jnp.all(jnp.isfinite(disc_out)))

    print("KERNEL_OK")
</pallas_src>

<mosaic_0001>
module attributes {stable_mosaic.version = 11 : i64} {
  func.func @_gen_kernel(%arg0: memref<2x128xf32, #tpu.memory_space<vmem>>, %arg1: memref<128x128xbf16, #tpu.memory_space<vmem>>, %arg2: memref<1x128xf32, #tpu.memory_space<vmem>>, %arg3: memref<128x256xbf16, #tpu.memory_space<vmem>>, %arg4: memref<1x256xf32, #tpu.memory_space<vmem>>, %arg5: memref<256x512xbf16, #tpu.memory_space<vmem>>, %arg6: memref<1x512xf32, #tpu.memory_space<vmem>>, %arg7: memref<512x1024xbf16, #tpu.memory_space<vmem>>, %arg8: memref<1x1024xf32, #tpu.memory_space<vmem>>, %arg9: memref<1024x896xbf16, #tpu.memory_space<vmem>>, %arg10: memref<1x896xf32, #tpu.memory_space<vmem>>, %arg11: memref<2x896xf32, #tpu.memory_space<vmem>>) attributes {dimension_semantics = [], scalar_prefetch = 0 : i64, scratch_operands = 0 : i64, tpu.core_type = #tpu.core_type<tc>} {
    %c0 = arith.constant 0 : index
    %c0_0 = arith.constant 0 : index
    %0 = vector.load %arg0[%c0, %c0_0] : memref<2x128xf32, #tpu.memory_space<vmem>>, vector<2x128xf32>
    %1 = arith.truncf %0 : vector<2x128xf32> to vector<2x128xbf16>
    %c0_1 = arith.constant 0 : index
    %c0_2 = arith.constant 0 : index
    %2 = vector.load %arg1[%c0_1, %c0_2] : memref<128x128xbf16, #tpu.memory_space<vmem>>, vector<128x128xbf16>
    %cst = arith.constant dense<0.000000e+00> : vector<2x128xf32>
    %3 = tpu.matmul %1, %2, %cst {dimension_numbers = #tpu.dot_dimension_numbers<[1], [0], [0], [1], [0, 0, 1, 1], [], []>} : vector<2x128xbf16>, vector<128x128xbf16>, vector<2x128xf32> -> vector<2x128xf32>
    %c0_3 = arith.constant 0 : index
    %c0_4 = arith.constant 0 : index
    %4 = vector.load %arg2[%c0_3, %c0_4] : memref<1x128xf32, #tpu.memory_space<vmem>>, vector<1x128xf32>
    %5 = vector.broadcast %4 : vector<1x128xf32> to vector<2x128xf32>
    %6 = arith.addf %3, %5 : vector<2x128xf32>
    %cst_5 = arith.constant 0.000000e+00 : f32
    %7 = vector.broadcast %cst_5 : f32 to vector<2x128xf32>
    %8 = arith.cmpf ogt, %6, %7 : vector<2x128xf32>
    %cst_6 = arith.constant 2.000000e-01 : f32
    %9 = vector.broadcast %cst_6 : f32 to vector<2x128xf32>
    %10 = arith.mulf %9, %6 : vector<2x128xf32>
    %11 = arith.select %8, %6, %10 : vector<2x128xi1>, vector<2x128xf32>
    %12 = arith.truncf %11 : vector<2x128xf32> to vector<2x128xbf16>
    %c0_7 = arith.constant 0 : index
    %c0_8 = arith.constant 0 : index
    %13 = vector.load %arg3[%c0_7, %c0_8] : memref<128x256xbf16, #tpu.memory_space<vmem>>, vector<128x256xbf16>
    %cst_9 = arith.constant dense<0.000000e+00> : vector<2x256xf32>
    %14 = tpu.matmul %12, %13, %cst_9 {dimension_numbers = #tpu.dot_dimension_numbers<[1], [0], [0], [1], [0, 0, 1, 1], [], []>} : vector<2x128xbf16>, vector<128x256xbf16>, vector<2x256xf32> -> vector<2x256xf32>
    %c0_10 = arith.constant 0 : index
    %c0_11 = arith.constant 0 : index
    %15 = vector.load %arg4[%c0_10, %c0_11] : memref<1x256xf32, #tpu.memory_space<vmem>>, vector<1x256xf32>
    %16 = vector.broadcast %15 : vector<1x256xf32> to vector<2x256xf32>
    %17 = arith.addf %14, %16 : vector<2x256xf32>
    %cst_12 = arith.constant dense<0.000000e+00> : vector<256xf32>
    %18 = vector.multi_reduction <add>, %17, %cst_12 [0] : vector<2x256xf32> to vector<256xf32>
    %19 = vector.shape_cast %18 : vector<256xf32> to vector<1x256xf32>
    %cst_13 = arith.constant 2.000000e+00 : f32
    %20 = vector.broadcast %cst_13 : f32 to vector<1x256xf32>
    %21 = arith.divf %19, %20 : vector<1x256xf32>
    %22 = vector.broadcast %21 : vector<1x256xf32> to vector<2x256xf32>
    %23 = arith.subf %17, %22 : vector<2x256xf32>
    %24 = arith.mulf %23, %23 : vector<2x256xf32>
    %cst_14 = arith.constant dense<0.000000e+00> : vector<256xf32>
    %25 = vector.multi_reduction <add>, %24, %cst_14 [0] : vector<2x256xf32> to vector<256xf32>
    %26 = vector.shape_cast %25 : vector<256xf32> to vector<1x256xf32>
    %cst_15 = arith.constant 2.000000e+00 : f32
    %27 = vector.broadcast %cst_15 : f32 to vector<1x256xf32>
    %28 = arith.divf %26, %27 : vector<1x256xf32>
    %29 = vector.broadcast %21 : vector<1x256xf32> to vector<2x256xf32>
    %30 = arith.subf %17, %29 : vector<2x256xf32>
    %cst_16 = arith.constant 9.99999974E-6 : f32
    %31 = vector.broadcast %cst_16 : f32 to vector<1x256xf32>
    %32 = arith.addf %28, %31 : vector<1x256xf32>
    %33 = math.rsqrt %32 : vector<1x256xf32>
    %34 = vector.broadcast %33 : vector<1x256xf32> to vector<2x256xf32>
    %35 = arith.mulf %30, %34 : vector<2x256xf32>
    %cst_17 = arith.constant 0.000000e+00 : f32
    %36 = vector.broadcast %cst_17 : f32 to vector<2x256xf32>
    %37 = arith.cmpf ogt, %35, %36 : vector<2x256xf32>
    %cst_18 = arith.constant 2.000000e-01 : f32
    %38 = vector.broadcast %cst_18 : f32 to vector<2x256xf32>
    %39 = arith.mulf %38, %35 : vector<2x256xf32>
    %40 = arith.select %37, %35, %39 : vector<2x256xi1>, vector<2x256xf32>
    %41 = arith.truncf %40 : vector<2x256xf32> to vector<2x256xbf16>
    %c0_19 = arith.constant 0 : index
    %c0_20 = arith.constant 0 : index
    %42 = vector.load %arg5[%c0_19, %c0_20] : memref<256x512xbf16, #tpu.memory_space<vmem>>, vector<256x512xbf16>
    %cst_21 = arith.constant dense<0.000000e+00> : vector<2x512xf32>
    %43 = tpu.matmul %41, %42, %cst_21 {dimension_numbers = #tpu.dot_dimension_numbers<[1], [0], [0], [1], [0, 0, 1, 1], [], []>} : vector<2x256xbf16>, vector<256x512xbf16>, vector<2x512xf32> -> vector<2x512xf32>
    %c0_22 = arith.constant 0 : index
    %c0_23 = arith.constant 0 : index
    %44 = vector.load %arg6[%c0_22, %c0_23] : memref<1x512xf32, #tpu.memory_space<vmem>>, vector<1x512xf32>
    %45 = vector.broadcast %44 : vector<1x512xf32> to vector<2x512xf32>
    %46 = arith.addf %43, %45 : vector<2x512xf32>
    %cst_24 = arith.constant dense<0.000000e+00> : vector<512xf32>
    %47 = vector.multi_reduction <add>, %46, %cst_24 [0] : vector<2x512xf32> to vector<512xf32>
    %48 = vector.shape_cast %47 : vector<512xf32> to vector<1x512xf32>
    %cst_25 = arith.constant 2.000000e+00 : f32
    %49 = vector.broadcast %cst_25 : f32 to vector<1x512xf32>
    %50 = arith.divf %48, %49 : vector<1x512xf32>
    %51 = vector.broadcast %50 : vector<1x512xf32> to vector<2x512xf32>
    %52 = arith.subf %46, %51 : vector<2x512xf32>
    %53 = arith.mulf %52, %52 : vector<2x512xf32>
    %cst_26 = arith.constant dense<0.000000e+00> : vector<512xf32>
    %54 = vector.multi_reduction <add>, %53, %cst_26 [0] : vector<2x512xf32> to vector<512xf32>
    %55 = vector.shape_cast %54 : vector<512xf32> to vector<1x512xf32>
    %cst_27 = arith.constant 2.000000e+00 : f32
    %56 = vector.broadcast %cst_27 : f32 to vector<1x512xf32>
    %57 = arith.divf %55, %56 : vector<1x512xf32>
    %58 = vector.broadcast %50 : vector<1x512xf32> to vector<2x512xf32>
    %59 = arith.subf %46, %58 : vector<2x512xf32>
    %cst_28 = arith.constant 9.99999974E-6 : f32
    %60 = vector.broadcast %cst_28 : f32 to vector<1x512xf32>
    %61 = arith.addf %57, %60 : vector<1x512xf32>
    %62 = math.rsqrt %61 : vector<1x512xf32>
    %63 = vector.broadcast %62 : vector<1x512xf32> to vector<2x512xf32>
    %64 = arith.mulf %59, %63 : vector<2x512xf32>
    %cst_29 = arith.constant 0.000000e+00 : f32
    %65 = vector.broadcast %cst_29 : f32 to vector<2x512xf32>
    %66 = arith.cmpf ogt, %64, %65 : vector<2x512xf32>
    %cst_30 = arith.constant 2.000000e-01 : f32
    %67 = vector.broadcast %cst_30 : f32 to vector<2x512xf32>
    %68 = arith.mulf %67, %64 : vector<2x512xf32>
    %69 = arith.select %66, %64, %68 : vector<2x512xi1>, vector<2x512xf32>
    %70 = arith.truncf %69 : vector<2x512xf32> to vector<2x512xbf16>
    %c0_31 = arith.constant 0 : index
    %c0_32 = arith.constant 0 : index
    %71 = vector.load %arg7[%c0_31, %c0_32] : memref<512x1024xbf16, #tpu.memory_space<vmem>>, vector<512x1024xbf16>
    %cst_33 = arith.constant dense<0.000000e+00> : vector<2x1024xf32>
    %72 = tpu.matmul %70, %71, %cst_33 {dimension_numbers = #tpu.dot_dimension_numbers<[1], [0], [0], [1], [0, 0, 1, 1], [], []>} : vector<2x512xbf16>, vector<512x1024xbf16>, vector<2x1024xf32> -> vector<2x1024xf32>
    %c0_34 = arith.constant 0 : index
    %c0_35 = arith.constant 0 : index
    %73 = vector.load %arg8[%c0_34, %c0_35] : memref<1x1024xf32, #tpu.memory_space<vmem>>, vector<1x1024xf32>
    %74 = vector.broadcast %73 : vector<1x1024xf32> to vector<2x1024xf32>
    %75 = arith.addf %72, %74 : vector<2x1024xf32>
    %cst_36 = arith.constant dense<0.000000e+00> : vector<1024xf32>
    %76 = vector.multi_reduction <add>, %75, %cst_36 [0] : vector<2x1024xf32> to vector<1024xf32>
    %77 = vector.shape_cast %76 : vector<1024xf32> to vector<1x1024xf32>
    %cst_37 = arith.constant 2.000000e+00 : f32
    %78 = vector.broadcast %cst_37 : f32 to vector<1x1024xf32>
    %79 = arith.divf %77, %78 : vector<1x1024xf32>
    %80 = vector.broadcast %79 : vector<1x1024xf32> to vector<2x1024xf32>
    %81 = arith.subf %75, %80 : vector<2x1024xf32>
    %82 = arith.mulf %81, %81 : vector<2x1024xf32>
    %cst_38 = arith.constant dense<0.000000e+00> : vector<1024xf32>
    %83 = vector.multi_reduction <add>, %82, %cst_38 [0] : vector<2x1024xf32> to vector<1024xf32>
    %84 = vector.shape_cast %83 : vector<1024xf32> to vector<1x1024xf32>
    %cst_39 = arith.constant 2.000000e+00 : f32
    %85 = vector.broadcast %cst_39 : f32 to vector<1x1024xf32>
    %86 = arith.divf %84, %85 : vector<1x1024xf32>
    %87 = vector.broadcast %79 : vector<1x1024xf32> to vector<2x1024xf32>
    %88 = arith.subf %75, %87 : vector<2x1024xf32>
    %cst_40 = arith.constant 9.99999974E-6 : f32
    %89 = vector.broadcast %cst_40 : f32 to vector<1x1024xf32>
    %90 = arith.addf %86, %89 : vector<1x1024xf32>
    %91 = math.rsqrt %90 : vector<1x1024xf32>
    %92 = vector.broadcast %91 : vector<1x1024xf32> to vector<2x1024xf32>
    %93 = arith.mulf %88, %92 : vector<2x1024xf32>
    %cst_41 = arith.constant 0.000000e+00 : f32
    %94 = vector.broadcast %cst_41 : f32 to vector<2x1024xf32>
    %95 = arith.cmpf ogt, %93, %94 : vector<2x1024xf32>
    %cst_42 = arith.constant 2.000000e-01 : f32
    %96 = vector.broadcast %cst_42 : f32 to vector<2x1024xf32>
    %97 = arith.mulf %96, %93 : vector<2x1024xf32>
    %98 = arith.select %95, %93, %97 : vector<2x1024xi1>, vector<2x1024xf32>
    %99 = arith.truncf %98 : vector<2x1024xf32> to vector<2x1024xbf16>
    %c0_43 = arith.constant 0 : index
    %c0_44 = arith.constant 0 : index
    %100 = vector.load %arg9[%c0_43, %c0_44] : memref<1024x896xbf16, #tpu.memory_space<vmem>>, vector<1024x896xbf16>
    %cst_45 = arith.constant dense<0.000000e+00> : vector<2x896xf32>
    %101 = tpu.matmul %99, %100, %cst_45 {dimension_numbers = #tpu.dot_dimension_numbers<[1], [0], [0], [1], [0, 0, 1, 1], [], []>} : vector<2x1024xbf16>, vector<1024x896xbf16>, vector<2x896xf32> -> vector<2x896xf32>
    %c0_46 = arith.constant 0 : index
    %c0_47 = arith.constant 0 : index
    %102 = vector.load %arg10[%c0_46, %c0_47] : memref<1x896xf32, #tpu.memory_space<vmem>>, vector<1x896xf32>
    %103 = vector.broadcast %102 : vector<1x896xf32> to vector<2x896xf32>
    %104 = arith.addf %101, %103 : vector<2x896xf32>
    %105 = math.tanh %104 : vector<2x896xf32>
    %c0_48 = arith.constant 0 : index
    %c0_49 = arith.constant 0 : index
    %106 = vector.load %arg11[%c0_48, %c0_49] : memref<2x896xf32, #tpu.memory_space<vmem>>, vector<2x896xf32>
    tpu.vector_store %arg11[%c0_48, %c0_49], %105 {strides = array<i32>} : memref<2x896xf32, #tpu.memory_space<vmem>>, vector<2x896xf32>,
    return
  }
}

</mosaic_0001>

<llo_original>
// kernel: _gen_forward.1
$region0: #{_gen_forward.1}
  #allocation0 [shape = 'u32[]', space=smem, size = 0x4, offset = 0x4, fixed_abs, tag = 'smem constant byte address 0x4 - core index']
  #allocation1 [shape = 'u32[72,128]{1,0:T(1,128)}', space=vmem, size = 0x9000, scoped, tag = 'internal scratch']
  %s0 = inlined_call_operand.vmem [shape: f32[2,128], index: 0, kind: input, shape index: {}]
  %s1 = inlined_call_operand.hbm [shape: bf16[128,128], index: 1, kind: input, shape index: {}]
  %s2 = inlined_call_operand.hbm [shape: f32[1,128], index: 2, kind: input, shape index: {}]
  %s3 = inlined_call_operand.hbm [shape: bf16[128,256], index: 3, kind: input, shape index: {}]
  %s4 = inlined_call_operand.hbm [shape: f32[1,256], index: 4, kind: input, shape index: {}]
  %s5 = inlined_call_operand.hbm [shape: bf16[256,512], index: 5, kind: input, shape index: {}]
  %s6 = inlined_call_operand.hbm [shape: f32[1,512], index: 6, kind: input, shape index: {}]
  %s7 = inlined_call_operand.hbm [shape: bf16[512,1024], index: 7, kind: input, shape index: {}]
  %s8 = inlined_call_operand.hbm [shape: f32[1,1024], index: 8, kind: input, shape index: {}]
  %s9 = inlined_call_operand.hbm [shape: bf16[1024,896], index: 9, kind: input, shape index: {}]
  %s10 = inlined_call_operand.hbm [shape: f32[1,896], index: 10, kind: input, shape index: {}]
  %s11 = inlined_call_operand.vmem [shape: f32[2,896], index: 11, kind: output, shape index: {}]
  %s12 = sld [smem:[#allocation0]]
  $region94: #{_gen_forward.1} parent=0
    _
  %s14 = ssub.s32 1, %s12
  %s15 = scalar_select 0, %s14, %s12
  $region1: #{_gen_forward.1} parent=0
    #allocation2 [shape = 'u8[32768]{0}', space=vmem, size = 0x8000, scoped, tag = 'input window, operand 1, single buffered']
    #allocation3 [shape = 's32[1]{0}', space=sflag, size = 0x4, scoped, tag = 'scoped memory for _gen_forward.1']
    #allocation4 [shape = 'u8[512]{0}', space=vmem, size = 0x400, scoped, tag = 'input window, operand 2, single buffered']
    #allocation5 [shape = 's32[1]{0}', space=sflag, size = 0x4, scoped, tag = 'scoped memory for _gen_forward.1']
    #allocation6 [shape = 'u8[65536]{0}', space=vmem, size = 0x10000, scoped, tag = 'input window, operand 3, single buffered']
    #allocation7 [shape = 'u8[1024]{0}', space=vmem, size = 0x400, scoped, tag = 'input window, operand 4, single buffered']
    #allocation8 [shape = 's32[1]{0}', space=sflag, size = 0x4, scoped, tag = 'scoped memory for _gen_forward.1']
    #allocation9 [shape = 'u8[262144]{0}', space=vmem, size = 0x40000, scoped, tag = 'input window, operand 5, single buffered']
    #allocation10 [shape = 'u8[2048]{0}', space=vmem, size = 0x800, scoped, tag = 'input window, operand 6, single buffered']
    #allocation11 [shape = 's32[1]{0}', space=sflag, size = 0x4, scoped, tag = 'scoped memory for _gen_forward.1']
    #allocation12 [shape = 'u8[1048576]{0}', space=vmem, size = 0x100000, scoped, tag = 'input window, operand 7, single buffered']
    #allocation13 [shape = 'u8[4096]{0}', space=vmem, size = 0x1000, scoped, tag = 'input window, operand 8, single buffered']
    #allocation14 [shape = 's32[1]{0}', space=sflag, size = 0x4, scoped, tag = 'scoped memory for _gen_forward.1']
    #allocation15 [shape = 'u8[1835008]{0}', space=vmem, size = 0x1c0000, scoped, tag = 'input window, operand 9, single buffered']
    #allocation16 [shape = 'u8[3584]{0}', space=vmem, size = 0x1000, scoped, tag = 'input window, operand 10, single buffered']
    #allocation17 [shape = 's32[1]{0}', space=sflag, size = 0x4, scoped, tag = 'scoped memory for _gen_forward.1']
    %16 = vsyncpa [#allocation3], 0
    %17 = vsyncpa [#allocation5], 0
    %18 = vsyncpa [#allocation8], 0
    %19 = vsyncpa [#allocation11], 0
    %20 = vsyncpa [#allocation14], 0
    %21 = vsyncpa [#allocation17], 0
    // Predicated region
    $region2: #{_gen_forward.1} parent=1 // pred_check
      _
    $region3: #{_gen_forward.1} parent=1 // pred_check_branch
      %23 = sbr.rel (0) target = $region5
    $region4: #{_gen_forward.1} parent=1 // pred_region
      _
    $region5: #{_gen_forward.1} parent=1 // pred_fallthru
      _
    // Predicated region
    $region6: #{_gen_forward.1} parent=1 // pred_check
      _
    $region7: #{_gen_forward.1} parent=1 // pred_check_branch
      %25 = sbr.rel (0) target = $region9
    $region8: #{_gen_forward.1} parent=1 // pred_region
      %27 = vsyncadd [#allocation3], 0
      %s28 = sshll.u32 %s1, 4
      %s29 = int_to_ptr.hbm [resolvable:$true] %s28
      %s30 = sshll.u32 [#allocation2], 4
      %s31 = int_to_ptr.vmem [resolvable:$true] %s30
      %36 = dma.hbm_to_vmem [thread:$0]  %s29, 1024, %s31, [#allocation3], 64, 64, 4
    $region9: #{_gen_forward.1} parent=1 // pred_fallthru
      _
    // Predicated region
    $region10: #{_gen_forward.1} parent=1 // pred_check
      _
    $region11: #{_gen_forward.1} parent=1 // pred_check_branch
      %38 = sbr.rel (0) target = $region13
    $region12: #{_gen_forward.1} parent=1 // pred_region
      %40 = vsyncadd [#allocation5], 0
      %s42 = sshll.u32 %s2, 4
      %s43 = int_to_ptr.hbm [resolvable:$true] %s42
      %s44 = sshll.u32 [#allocation4], 4
      %s45 = int_to_ptr.vmem [resolvable:$true] %s44
      %47 = dma.hbm_to_vmem [thread:$0]  %s43, 16, %s45, [#allocation5]
    $region13: #{_gen_forward.1} parent=1 // pred_fallthru
      _
    // Predicated region
    $region14: #{_gen_forward.1} parent=1 // pred_check
      _
    $region15: #{_gen_forward.1} parent=1 // pred_check_branch
      %49 = sbr.rel (0) target = $region17
    $region16: #{_gen_forward.1} parent=1 // pred_region
      %51 = vsyncadd [#allocation5], 0
      %s52 = sshll.u32 %s3, 4
      %s53 = int_to_ptr.hbm [resolvable:$true] %s52
      %s54 = sshll.u32 [#allocation6], 4
      %s55 = int_to_ptr.vmem [resolvable:$true] %s54
      %60 = dma.hbm_to_vmem [thread:$0]  %s53, 2048, %s55, [#allocation5], 128, 128, 8
    $region17: #{_gen_forward.1} parent=1 // pred_fallthru
      _
    // Predicated region
    $region18: #{_gen_forward.1} parent=1 // pred_check
      _
    $region19: #{_gen_forward.1} parent=1 // pred_check_branch
      %62 = sbr.rel (0) target = $region21
    $region20: #{_gen_forward.1} parent=1 // pred_region
      %64 = vsyncadd [#allocation8], 0
      %s66 = sshll.u32 %s4, 4
      %s67 = int_to_ptr.hbm [resolvable:$true] %s66
      %s68 = sshll.u32 [#allocation7], 4
      %s69 = int_to_ptr.vmem [resolvable:$true] %s68
      %71 = dma.hbm_to_vmem [thread:$0]  %s67, 32, %s69, [#allocation8]
    $region21: #{_gen_forward.1} parent=1 // pred_fallthru
      _
    // Predicated region
    $region22: #{_gen_forward.1} parent=1 // pred_check
      _
    $region23: #{_gen_forward.1} parent=1 // pred_check_branch
      %73 = sbr.rel (0) target = $region25
    $region24: #{_gen_forward.1} parent=1 // pred_region
      %75 = vsyncadd [#allocation8], 0
      %s76 = sshll.u32 %s5, 4
      %s77 = int_to_ptr.hbm [resolvable:$true] %s76
      %s78 = sshll.u32 [#allocation9], 4
      %s79 = int_to_ptr.vmem [resolvable:$true] %s78
      %84 = dma.hbm_to_vmem [thread:$0]  %s77, 8192, %s79, [#allocation8], 256, 256, 16
    $region25: #{_gen_forward.1} parent=1 // pred_fallthru
      _
    // Predicated region
    $region26: #{_gen_forward.1} parent=1 // pred_check
      _
    $region27: #{_gen_forward.1} parent=1 // pred_check_branch
      %86 = sbr.rel (0) target = $region29
    $region28: #{_gen_forward.1} parent=1 // pred_region
      %88 = vsyncadd [#allocation11], 0
      %s90 = sshll.u32 %s6, 4
      %s91 = int_to_ptr.hbm [resolvable:$true] %s90
      %s92 = sshll.u32 [#allocation10], 4
      %s93 = int_to_ptr.vmem [resolvable:$true] %s92
      %95 = dma.hbm_to_vmem [thread:$0]  %s91, 64, %s93, [#allocation11]
    $region29: #{_gen_forward.1} parent=1 // pred_fallthru
      _
    // Predicated region
    $region30: #{_gen_forward.1} parent=1 // pred_check
      _
    $region31: #{_gen_forward.1} parent=1 // pred_check_branch
      %97 = sbr.rel (0) target = $region33
    $region32: #{_gen_forward.1} parent=1 // pred_region
      %99 = vsyncadd [#allocation11], 0
      %s100 = sshll.u32 %s7, 4
      %s101 = int_to_ptr.hbm [resolvable:$true] %s100
      %s102 = sshll.u32 [#allocation12], 4
      %s103 = int_to_ptr.vmem [resolvable:$true] %s102
      %108 = dma.hbm_to_vmem [thread:$0]  %s101, 32768, %s103, [#allocation11], 512, 512, 32
    $region33: #{_gen_forward.1} parent=1 // pred_fallthru
      _
    // Predicated region
    $region34: #{_gen_forward.1} parent=1 // pred_check
      _
    $region35: #{_gen_forward.1} parent=1 // pred_check_branch
      %110 = sbr.rel (0) target = $region37
    $region36: #{_gen_forward.1} parent=1 // pred_region
      %112 = vsyncadd [#allocation14], 0
      %s114 = sshll.u32 %s8, 4
      %s115 = int_to_ptr.hbm [resolvable:$true] %s114
      %s116 = sshll.u32 [#allocation13], 4
      %s117 = int_to_ptr.vmem [resolvable:$true] %s116
      %119 = dma.hbm_to_vmem [thread:$0]  %s115, 128, %s117, [#allocation14]
    $region37: #{_gen_forward.1} parent=1 // pred_fallthru
      _
    // Predicated region
    $region38: #{_gen_forward.1} parent=1 // pred_check
      _
    $region39: #{_gen_forward.1} parent=1 // pred_check_branch
      %121 = sbr.rel (0) target = $region41
    $region40: #{_gen_forward.1} parent=1 // pred_region
      %123 = vsyncadd [#allocation14], 0
      %s124 = sshll.u32 %s9, 4
      %s125 = int_to_ptr.hbm [resolvable:$true] %s124
      %s126 = sshll.u32 [#allocation15], 4
      %s127 = int_to_ptr.vmem [resolvable:$true] %s126
      %132 = dma.hbm_to_vmem [thread:$0]  %s125, 57344, %s127, [#allocation14], 448, 448, 28
    $region41: #{_gen_forward.1} parent=1 // pred_fallthru
      _
    // Predicated region
    $region42: #{_gen_forward.1} parent=1 // pred_check
      _
    $region43: #{_gen_forward.1} parent=1 // pred_check_branch
      %134 = sbr.rel (0) target = $region45
    $region44: #{_gen_forward.1} parent=1 // pred_region
      %136 = vsyncadd [#allocation17], 0
      %s138 = sshll.u32 %s10, 4
      %s139 = int_to_ptr.hbm [resolvable:$true] %s138
      %s140 = sshll.u32 [#allocation16], 4
      %s141 = int_to_ptr.vmem [resolvable:$true] %s140
      %143 = dma.hbm_to_vmem [thread:$0]  %s139, 112, %s141, [#allocation17]
    $region45: #{_gen_forward.1} parent=1 // pred_fallthru
      _
    // Predicated region
    $region46: #{_gen_forward.1} parent=1 // pred_check
      _
    $region47: #{_gen_forward.1} parent=1 // pred_check_branch
      %145 = sbr.rel (0) target = $region49
    $region48: #{_gen_forward.1} parent=1 // pred_region
      %147 = dma.done [#allocation3], 1024
    $region49: #{_gen_forward.1} parent=1 // pred_fallthru
      _
    // Predicated region
    $region50: #{_gen_forward.1} parent=1 // pred_check
      _
    $region51: #{_gen_forward.1} parent=1 // pred_check_branch
      %149 = sbr.rel (0) target = $region53
    $region52: #{_gen_forward.1} parent=1 // pred_region
      %151 = dma.done [#allocation5], 16
    $region53: #{_gen_forward.1} parent=1 // pred_fallthru
      _
    // Predicated region
    $region54: #{_gen_forward.1} parent=1 // pred_check
      _
    $region55: #{_gen_forward.1} parent=1 // pred_check_branch
      %153 = sbr.rel (0) target = $region57
    $region56: #{_gen_forward.1} parent=1 // pred_region
      %155 = dma.done [#allocation5], 2048
    $region57: #{_gen_forward.1} parent=1 // pred_fallthru
      _
    // Predicated region
    $region58: #{_gen_forward.1} parent=1 // pred_check
      _
    $region59: #{_gen_forward.1} parent=1 // pred_check_branch
      %157 = sbr.rel (0) target = $region61
    $region60: #{_gen_forward.1} parent=1 // pred_region
      %159 = dma.done [#allocation8], 32
    $region61: #{_gen_forward.1} parent=1 // pred_fallthru
      _
    // Predicated region
    $region62: #{_gen_forward.1} parent=1 // pred_check
      _
    $region63: #{_gen_forward.1} parent=1 // pred_check_branch
      %161 = sbr.rel (0) target = $region65
    $region64: #{_gen_forward.1} parent=1 // pred_region
      %163 = dma.done [#allocation8], 8192
    $region65: #{_gen_forward.1} parent=1 // pred_fallthru
      _
    // Predicated region
    $region66: #{_gen_forward.1} parent=1 // pred_check
      _
    $region67: #{_gen_forward.1} parent=1 // pred_check_branch
      %165 = sbr.rel (0) target = $region69
    $region68: #{_gen_forward.1} parent=1 // pred_region
      %167 = dma.done [#allocation11], 64
    $region69: #{_gen_forward.1} parent=1 // pred_fallthru
      _
    // Predicated region
    $region70: #{_gen_forward.1} parent=1 // pred_check
      _
    $region71: #{_gen_forward.1} parent=1 // pred_check_branch
      %169 = sbr.rel (0) target = $region73
    $region72: #{_gen_forward.1} parent=1 // pred_region
      %171 = dma.done [#allocation11], 32768
    $region73: #{_gen_forward.1} parent=1 // pred_fallthru
      _
    // Predicated region
    $region74: #{_gen_forward.1} parent=1 // pred_check
      _
    $region75: #{_gen_forward.1} parent=1 // pred_check_branch
      %173 = sbr.rel (0) target = $region77
    $region76: #{_gen_forward.1} parent=1 // pred_region
      %175 = dma.done [#allocation14], 128
    $region77: #{_gen_forward.1} parent=1 // pred_fallthru
      _
    // Predicated region
    $region78: #{_gen_forward.1} parent=1 // pred_check
      _
    $region79: #{_gen_forward.1} parent=1 // pred_check_branch
      %177 = sbr.rel (0) target = $region81
    $region80: #{_gen_forward.1} parent=1 // pred_region
      %179 = dma.done [#allocation14], 57344
    $region81: #{_gen_forward.1} parent=1 // pred_fallthru
      _
    // Predicated region
    $region82: #{_gen_forward.1} parent=1 // pred_check
      _
    $region83: #{_gen_forward.1} parent=1 // pred_check_branch
      %181 = sbr.rel (0) target = $region85
    $region84: #{_gen_forward.1} parent=1 // pred_region
      %183 = dma.done [#allocation17], 112
    $region85: #{_gen_forward.1} parent=1 // pred_fallthru
      _
    %v184 = vld [vmem:[%s0] sm:$0x3]
    %v185 = vpack.c.bf16 %v184, %v184
    %v186 = vld [vmem:[#allocation2] sm:$0xf]
    %v187 = vld [vmem:[#allocation2 + $0x4] sm:$0xf]
    %v188 = vld [vmem:[#allocation2 + $0x8] sm:$0xf]
    %v189 = vld [vmem:[#allocation2 + $0xc] sm:$0xf]
    %v190 = vld [vmem:[#allocation2 + $0x10] sm:$0xf]
    %v191 = vld [vmem:[#allocation2 + $0x14] sm:$0xf]
    %v192 = vld [vmem:[#allocation2 + $0x18] sm:$0xf]
    %v193 = vld [vmem:[#allocation2 + $0x1c] sm:$0xf]
    %v194 = vld [vmem:[#allocation2 + $0x20] sm:$0xf]
    %v195 = vld [vmem:[#allocation2 + $0x24] sm:$0xf]
    %v196 = vld [vmem:[#allocation2 + $0x28] sm:$0xf]
    %v197 = vld [vmem:[#allocation2 + $0x2c] sm:$0xf]
    %v198 = vld [vmem:[#allocation2 + $0x30] sm:$0xf]
    %v199 = vld [vmem:[#allocation2 + $0x34] sm:$0xf]
    %v200 = vld [vmem:[#allocation2 + $0x38] sm:$0xf]
    %v201 = vld [vmem:[#allocation2 + $0x3c] sm:$0xf]
    %v202 = vld [vmem:[#allocation4] sm:$0x1]
    %v204 = vperm.slane %v202, 0
    %v222 = vunpack.c.l.b16 %v186
    %v223 = vunpack.c.l.b16 %v187
    %v224 = vunpack.c.l.b16 %v188
    %v225 = vunpack.c.l.b16 %v189
    %v226 = vunpack.c.l.b16 %v190
    %v227 = vunpack.c.l.b16 %v191
    %v228 = vunpack.c.l.b16 %v192
    %v229 = vunpack.c.l.b16 %v193
    %v230 = vunpack.c.l.b16 %v194
    %v231 = vunpack.c.l.b16 %v195
    %v232 = vunpack.c.l.b16 %v196
    %v233 = vunpack.c.l.b16 %v197
    %v234 = vunpack.c.l.b16 %v198
    %v235 = vunpack.c.l.b16 %v199
    %v236 = vunpack.c.l.b16 %v200
    %v237 = vunpack.c.l.b16 %v201
    %v238 = vpack.c.b16 %v223, %v222
    %v239 = vpack.c.b16 %v225, %v224
    %v240 = vpack.c.b16 %v227, %v226
    %v241 = vpack.c.b16 %v229, %v228
    %v242 = vpack.c.b16 %v231, %v230
    %v243 = vpack.c.b16 %v233, %v232
    %v244 = vpack.c.b16 %v235, %v234
    %v245 = vpack.c.b16 %v237, %v236
    %254 = vmatpush.bf16.msra.mxu0 %v245
    %255 = vmatpush.bf16.msra.mxu0 %v244
    %256 = vmatpush.bf16.msra.mxu0 %v243
    %257 = vmatpush.bf16.msra.mxu0 %v242
    %258 = vmatpush.bf16.msra.mxu0 %v241
    %259 = vmatpush.bf16.msra.mxu0 %v240
    %260 = vmatpush.bf16.msra.mxu0 %v239
    %261 = vmatpush.bf16.msra.mxu0 %v238
    %262 = vmatmul.bf16.gmra.mxu0 %v185
    %v263 = vpop.f32.mrf.mxu0
    %v264 = vadd.f32 %v204, %v263
    %v265 = vpop.f32.mrf.mxu0
    %266 = vdwg.mxu0
    %vm267 = vcmp.gt.f32.partialorder %v264, 0.0
    %v268 = vmul.f32 %v264, 0.2
    %v269 = vsel %vm267, %v264, %v268
    %v270 = vpack.c.bf16 %v269, %v269
    %v271 = vld [vmem:[#allocation6] sm:$0xff]
    %v272 = vld [vmem:[#allocation6 + $0x8] sm:$0xff]
    %v273 = vld [vmem:[#allocation6 + $0x10] sm:$0xff]
    %v274 = vld [vmem:[#allocation6 + $0x18] sm:$0xff]
    %v275 = vld [vmem:[#allocation6 + $0x20] sm:$0xff]
    %v276 = vld [vmem:[#allocation6 + $0x28] sm:$0xff]
    %v277 = vld [vmem:[#allocation6 + $0x30] sm:$0xff]
    %v278 = vld [vmem:[#allocation6 + $0x38] sm:$0xff]
    %v279 = vld [vmem:[#allocation6 + $0x40] sm:$0xff]
    %v280 = vld [vmem:[#allocation6 + $0x48] sm:$0xff]
    %v281 = vld [vmem:[#allocation6 + $0x50] sm:$0xff]
    %v282 = vld [vmem:[#allocation6 + $0x58] sm:$0xff]
    %v283 = vld [vmem:[#allocation6 + $0x60] sm:$0xff]
    %v284 = vld [vmem:[#allocation6 + $0x68] sm:$0xff]
    %v285 = vld [vmem:[#allocation6 + $0x70] sm:$0xff]
    %v286 = vld [vmem:[#allocation6 + $0x78] sm:$0xff]
    %v287 = vld [vmem:[#allocation7] sm:$0x3]
    %v289 = vperm.slane %v287, 0
    %v290 = vperm.slane %v287, 1
    %v309 = vunpack.c.l.b16 %v271
    %v310 = vunpack.c.h.b16 %v271
    %v311 = vunpack.c.l.b16 %v272
    %v312 = vunpack.c.h.b16 %v272
    %v313 = vunpack.c.l.b16 %v273
    %v314 = vunpack.c.h.b16 %v273
    %v315 = vunpack.c.l.b16 %v274
    %v316 = vunpack.c.h.b16 %v274
    %v317 = vunpack.c.l.b16 %v275
    %v318 = vunpack.c.h.b16 %v275
    %v319 = vunpack.c.l.b16 %v276
    %v320 = vunpack.c.h.b16 %v276
    %v321 = vunpack.c.l.b16 %v277
    %v322 = vunpack.c.h.b16 %v277
    %v323 = vunpack.c.l.b16 %v278
    %v324 = vunpack.c.h.b16 %v278
    %v325 = vunpack.c.l.b16 %v279
    %v326 = vunpack.c.h.b16 %v279
    %v327 = vunpack.c.l.b16 %v280
    %v328 = vunpack.c.h.b16 %v280
    %v329 = vunpack.c.l.b16 %v281
    %v330 = vunpack.c.h.b16 %v281
    %v331 = vunpack.c.l.b16 %v282
    %v332 = vunpack.c.h.b16 %v282
    %v333 = vunpack.c.l.b16 %v283
    %v334 = vunpack.c.h.b16 %v283
    %v335 = vunpack.c.l.b16 %v284
    %v336 = vunpack.c.h.b16 %v284
    %v337 = vunpack.c.l.b16 %v285
    %v338 = vunpack.c.h.b16 %v285
    %v339 = vunpack.c.l.b16 %v286
    %v340 = vunpack.c.h.b16 %v286
    %v341 = vpack.c.b16 %v311, %v309
    %v342 = vpack.c.b16 %v312, %v310
    %v343 = vpack.c.b16 %v315, %v313
    %v344 = vpack.c.b16 %v316, %v314
    %v345 = vpack.c.b16 %v319, %v317
    %v346 = vpack.c.b16 %v320, %v318
    %v347 = vpack.c.b16 %v323, %v321
    %v348 = vpack.c.b16 %v324, %v322
    %v349 = vpack.c.b16 %v327, %v325
    %v350 = vpack.c.b16 %v328, %v326
    %v351 = vpack.c.b16 %v331, %v329
    %v352 = vpack.c.b16 %v332, %v330
    %v353 = vpack.c.b16 %v335, %v333
    %v354 = vpack.c.b16 %v336, %v334
    %v355 = vpack.c.b16 %v339, %v337
    %v356 = vpack.c.b16 %v340, %v338
    %373 = vmatpush.bf16.msra.mxu0 %v355
    %374 = vmatpush.bf16.msra.mxu0 %v353
    %375 = vmatpush.bf16.msra.mxu0 %v351
    %376 = vmatpush.bf16.msra.mxu0 %v349
    %377 = vmatpush.bf16.msra.mxu0 %v347
    %378 = vmatpush.bf16.msra.mxu0 %v345
    %379 = vmatpush.bf16.msra.mxu0 %v343
    %380 = vmatpush.bf16.msra.mxu0 %v341
    %381 = vmatmul.bf16.gmra.mxu0 %v270
    %v382 = vpop.f32.mrf.mxu0
    %v383 = vadd.f32 %v289, %v382
    %v384 = vpop.f32.mrf.mxu0
    %385 = vdwg.mxu0
    %386 = vmatpush.bf16.msra.mxu0 %v356
    %387 = vmatpush.bf16.msra.mxu0 %v354
    %388 = vmatpush.bf16.msra.mxu0 %v352
    %389 = vmatpush.bf16.msra.mxu0 %v350
    %390 = vmatpush.bf16.msra.mxu0 %v348
    %391 = vmatpush.bf16.msra.mxu0 %v346
    %392 = vmatpush.bf16.msra.mxu0 %v344
    %393 = vmatpush.bf16.msra.mxu0 %v342
    %394 = vmatmul.bf16.gmra.mxu0 %v270
    %v395 = vpop.f32.mrf.mxu0
    %v396 = vadd.f32 %v290, %v395
    %v397 = vpop.f32.mrf.mxu0
    %398 = vdwg.mxu0
    %vm399 = vcmask 1041408
    %v400 = vsel %vm399, %v383, 0.0
    %v401 = vrot.slane %v400, 4
    %v402 = vadd.f32 %v400, %v401
    %v403 = vrot.slane %v402, 2
    %v404 = vadd.f32 %v402, %v403
    %v405 = vrot.slane %v404, 1
    %v406 = vadd.f32 %v404, %v405
    %v407 = vsel %vm399, %v396, 0.0
    %v408 = vrot.slane %v407, 4
    %v409 = vadd.f32 %v407, %v408
    %v410 = vrot.slane %v409, 2
    %v411 = vadd.f32 %v409, %v410
    %v412 = vrot.slane %v411, 1
    %v413 = vadd.f32 %v411, %v412
    %v414 = vrcp.pop 2.0
    %v415 = vmul.f32 2.0, %v414
    %v416 = vsub.f32 1.0, %v415
    %v417 = vmul.f32 %v414, %v416
    %v418 = vadd.f32 %v414, %v417
    %vm419 = vweird.f32 %v414
    %v420 = vsel %vm419, %v414, %v418
    %v421 = vmul.f32 %v406, %v420
    %v422 = vmul.f32 %v413, %v420
    %v423 = vsub.f32 %v383, %v421
    %v424 = vsub.f32 %v396, %v422
    %v425 = vmul.f32 %v423, %v423
    %v426 = vmul.f32 %v424, %v424
    %v427 = vsel %vm399, %v425, 0.0
    %v428 = vrot.slane %v427, 4
    %v429 = vadd.f32 %v427, %v428
    %v430 = vrot.slane %v429, 2
    %v431 = vadd.f32 %v429, %v430
    %v432 = vrot.slane %v431, 1
    %v433 = vadd.f32 %v431, %v432
    %v434 = vsel %vm399, %v426, 0.0
    %v435 = vrot.slane %v434, 4
    %v436 = vadd.f32 %v434, %v435
    %v437 = vrot.slane %v436, 2
    %v438 = vadd.f32 %v436, %v437
    %v439 = vrot.slane %v438, 1
    %v440 = vadd.f32 %v438, %v439
    %v441 = vmul.f32 %v433, %v420
    %v442 = vmul.f32 %v440, %v420
    %v443 = vadd.f32 %v441, 1e-05
    %v444 = vadd.f32 %v442, 1e-05
    %v445 = vrsqrt.pop %v443
    %v446 = vmul.f32 %v445, %v443
    %v447 = vmul.f32 %v446, %v445
    %v448 = vmul.f32 0.5, %v447
    %v449 = vsub.f32 1.5, %v448
    %v450 = vmul.f32 %v445, %v449
    %vm451 = vweird.f32 %v443
    %vm452 = vweird.f32 %v445
    %vm453 = vmor %vm451, %vm452
    %v454 = vsel %vm453, %v445, %v450
    %v455 = vrsqrt.pop %v444
    %v456 = vmul.f32 %v455, %v444
    %v457 = vmul.f32 %v456, %v455
    %v458 = vmul.f32 0.5, %v457
    %v459 = vsub.f32 1.5, %v458
    %v460 = vmul.f32 %v455, %v459
    %vm461 = vweird.f32 %v444
    %vm462 = vweird.f32 %v455
    %vm463 = vmor %vm461, %vm462
    %v464 = vsel %vm463, %v455, %v460
    %v465 = vmul.f32 %v423, %v454
    %v466 = vmul.f32 %v424, %v464
    %vm467 = vcmp.gt.f32.partialorder %v465, 0.0
    %vm468 = vcmp.gt.f32.partialorder %v466, 0.0
    %v469 = vmul.f32 %v465, 0.2
    %v470 = vmul.f32 %v466, 0.2
    %v471 = vsel %vm467, %v465, %v469
    %v472 = vsel %vm468, %v466, %v470
    %v473 = vpack.c.bf16 %v471, %v471
    %v474 = vpack.c.bf16 %v472, %v472
    %v475 = vld [vmem:[#allocation9] sm:$0xff]
    %v476 = vld [vmem:[#allocation9 + $0x8] sm:$0xff]
    %v477 = vld [vmem:[#allocation9 + $0x10] sm:$0xff]
    %v478 = vld [vmem:[#allocation9 + $0x18] sm:$0xff]
    %v479 = vld [vmem:[#allocation9 + $0x20] sm:$0xff]
    %v480 = vld [vmem:[#allocation9 + $0x28] sm:$0xff]
    %v481 = vld [vmem:[#allocation9 + $0x30] sm:$0xff]
    %v482 = vld [vmem:[#allocation9 + $0x38] sm:$0xff]
    %v483 = vld [vmem:[#allocation9 + $0x40] sm:$0xff]
    %v484 = vld [vmem:[#allocation9 + $0x48] sm:$0xff]
    %v485 = vld [vmem:[#allocation9 + $0x50] sm:$0xff]
    %v486 = vld [vmem:[#allocation9 + $0x58] sm:$0xff]
    %v487 = vld [vmem:[#allocation9 + $0x60] sm:$0xff]
    %v488 = vld [vmem:[#allocation9 + $0x68] sm:$0xff]
    %v489 = vld [vmem:[#allocation9 + $0x70] sm:$0xff]
    %v490 = vld [vmem:[#allocation9 + $0x78] sm:$0xff]
    %v491 = vld [vmem:[#allocation9 + $0x80] sm:$0xff]
    %v492 = vld [vmem:[#allocation9 + $0x88] sm:$0xff]
    %v493 = vld [vmem:[#allocation9 + $0x90] sm:$0xff]
    %v494 = vld [vmem:[#allocation9 + $0x98] sm:$0xff]
    %v495 = vld [vmem:[#allocation9 + $0xa0] sm:$0xff]
    %v496 = vld [vmem:[#allocation9 + $0xa8] sm:$0xff]
    %v497 = vld [vmem:[#allocation9 + $0xb0] sm:$0xff]
    %v498 = vld [vmem:[#allocation9 + $0xb8] sm:$0xff]
    %v499 = vld [vmem:[#allocation9 + $0xc0] sm:$0xff]
    %v500 = vld [vmem:[#allocation9 + $0xc8] sm:$0xff]
    %v501 = vld [vmem:[#allocation9 + $0xd0] sm:$0xff]
    %v502 = vld [vmem:[#allocation9 + $0xd8] sm:$0xff]
    %v503 = vld [vmem:[#allocation9 + $0xe0] sm:$0xff]
    %v504 = vld [vmem:[#allocation9 + $0xe8] sm:$0xff]
    %v505 = vld [vmem:[#allocation9 + $0xf0] sm:$0xff]
    %v506 = vld [vmem:[#allocation9 + $0xf8] sm:$0xff]
    %v507 = vld [vmem:[#allocation9 + $0x100] sm:$0xff]
    %v508 = vld [vmem:[#allocation9 + $0x108] sm:$0xff]
    %v509 = vld [vmem:[#allocation9 + $0x110] sm:$0xff]
    %v510 = vld [vmem:[#allocation9 + $0x118] sm:$0xff]
    %v511 = vld [vmem:[#allocation9 + $0x120] sm:$0xff]
    %v512 = vld [vmem:[#allocation9 + $0x128] sm:$0xff]
    %v513 = vld [vmem:[#allocation9 + $0x130] sm:$0xff]
    %v514 = vld [vmem:[#allocation9 + $0x138] sm:$0xff]
    %v515 = vld [vmem:[#allocation9 + $0x140] sm:$0xff]
    %v516 = vld [vmem:[#allocation9 + $0x148] sm:$0xff]
    %v517 = vld [vmem:[#allocation9 + $0x150] sm:$0xff]
    %v518 = vld [vmem:[#allocation9 + $0x158] sm:$0xff]
    %v519 = vld [vmem:[#allocation9 + $0x160] sm:$0xff]
    %v520 = vld [vmem:[#allocation9 + $0x168] sm:$0xff]
    %v521 = vld [vmem:[#allocation9 + $0x170] sm:$0xff]
    %v522 = vld [vmem:[#allocation9 + $0x178] sm:$0xff]
    %v523 = vld [vmem:[#allocation9 + $0x180] sm:$0xff]
    %v524 = vld [vmem:[#allocation9 + $0x188] sm:$0xff]
    %v525 = vld [vmem:[#allocation9 + $0x190] sm:$0xff]
    %v526 = vld [vmem:[#allocation9 + $0x198] sm:$0xff]
    %v527 = vld [vmem:[#allocation9 + $0x1a0] sm:$0xff]
    %v528 = vld [vmem:[#allocation9 + $0x1a8] sm:$0xff]
    %v529 = vld [vmem:[#allocation9 + $0x1b0] sm:$0xff]
    %v530 = vld [vmem:[#allocation9 + $0x1b8] sm:$0xff]
    %v531 = vld [vmem:[#allocation9 + $0x1c0] sm:$0xff]
    %v532 = vld [vmem:[#allocation9 + $0x1c8] sm:$0xff]
    %v533 = vld [vmem:[#allocation9 + $0x1d0] sm:$0xff]
    %v534 = vld [vmem:[#allocation9 + $0x1d8] sm:$0xff]
    %v535 = vld [vmem:[#allocation9 + $0x1e0] sm:$0xff]
    %v536 = vld [vmem:[#allocation9 + $0x1e8] sm:$0xff]
    %v537 = vld [vmem:[#allocation9 + $0x1f0] sm:$0xff]
    %v538 = vld [vmem:[#allocation9 + $0x1f8] sm:$0xff]
    %v539 = vld [vmem:[#allocation10] sm:$0xf]
    %v541 = vperm.slane %v539, 0
    %v542 = vperm.slane %v539, 1
    %v543 = vperm.slane %v539, 2
    %v544 = vperm.slane %v539, 3
    %v613 = vunpack.c.l.b16 %v475
    %v614 = vunpack.c.h.b16 %v475
    %v615 = vunpack.c.l.b16 %v476
    %v616 = vunpack.c.h.b16 %v476
    %v617 = vunpack.c.l.b16 %v477
    %v618 = vunpack.c.h.b16 %v477
    %v619 = vunpack.c.l.b16 %v478
    %v620 = vunpack.c.h.b16 %v478
    %v621 = vunpack.c.l.b16 %v479
    %v622 = vunpack.c.h.b16 %v479
    %v623 = vunpack.c.l.b16 %v480
    %v624 = vunpack.c.h.b16 %v480
    %v625 = vunpack.c.l.b16 %v481
    %v626 = vunpack.c.h.b16 %v481
    %v627 = vunpack.c.l.b16 %v482
    %v628 = vunpack.c.h.b16 %v482
    %v629 = vunpack.c.l.b16 %v483
    %v630 = vunpack.c.h.b16 %v483
    %v631 = vunpack.c.l.b16 %v484
    %v632 = vunpack.c.h.b16 %v484
    %v633 = vunpack.c.l.b16 %v485
    %v634 = vunpack.c.h.b16 %v485
    %v635 = vunpack.c.l.b16 %v486
    %v636 = vunpack.c.h.b16 %v486
    %v637 = vunpack.c.l.b16 %v487
    %v638 = vunpack.c.h.b16 %v487
    %v639 = vunpack.c.l.b16 %v488
    %v640 = vunpack.c.h.b16 %v488
    %v641 = vunpack.c.l.b16 %v489
    %v642 = vunpack.c.h.b16 %v489
    %v643 = vunpack.c.l.b16 %v490
    %v644 = vunpack.c.h.b16 %v490
    %v645 = vunpack.c.l.b16 %v491
    %v646 = vunpack.c.h.b16 %v491
    %v647 = vunpack.c.l.b16 %v492
    %v648 = vunpack.c.h.b16 %v492
    %v649 = vunpack.c.l.b16 %v493
    %v650 = vunpack.c.h.b16 %v493
    %v651 = vunpack.c.l.b16 %v494
    %v652 = vunpack.c.h.b16 %v494
    %v653 = vunpack.c.l.b16 %v495
    %v654 = vunpack.c.h.b16 %v495
    %v655 = vunpack.c.l.b16 %v496
    %v656 = vunpack.c.h.b16 %v496
    %v657 = vunpack.c.l.b16 %v497
    %v658 = vunpack.c.h.b16 %v497
    %v659 = vunpack.c.l.b16 %v498
    %v660 = vunpack.c.h.b16 %v498
    %v661 = vunpack.c.l.b16 %v499
    %v662 = vunpack.c.h.b16 %v499
    %v663 = vunpack.c.l.b16 %v500
    %v664 = vunpack.c.h.b16 %v500
    %v665 = vunpack.c.l.b16 %v501
    %v666 = vunpack.c.h.b16 %v501
    %v667 = vunpack.c.l.b16 %v502
    %v668 = vunpack.c.h.b16 %v502
    %v669 = vunpack.c.l.b16 %v503
    %v670 = vunpack.c.h.b16 %v503
    %v671 = vunpack.c.l.b16 %v504
    %v672 = vunpack.c.h.b16 %v504
    %v673 = vunpack.c.l.b16 %v505
    %v674 = vunpack.c.h.b16 %v505
    %v675 = vunpack.c.l.b16 %v506
    %v676 = vunpack.c.h.b16 %v506
    %v677 = vunpack.c.l.b16 %v507
    %v678 = vunpack.c.h.b16 %v507
    %v679 = vunpack.c.l.b16 %v508
    %v680 = vunpack.c.h.b16 %v508
    %v681 = vunpack.c.l.b16 %v509
    %v682 = vunpack.c.h.b16 %v509
    %v683 = vunpack.c.l.b16 %v510
    %v684 = vunpack.c.h.b16 %v510
    %v685 = vunpack.c.l.b16 %v511
    %v686 = vunpack.c.h.b16 %v511
    %v687 = vunpack.c.l.b16 %v512
    %v688 = vunpack.c.h.b16 %v512
    %v689 = vunpack.c.l.b16 %v513
    %v690 = vunpack.c.h.b16 %v513
    %v691 = vunpack.c.l.b16 %v514
    %v692 = vunpack.c.h.b16 %v514
    %v693 = vunpack.c.l.b16 %v515
    %v694 = vunpack.c.h.b16 %v515
    %v695 = vunpack.c.l.b16 %v516
    %v696 = vunpack.c.h.b16 %v516
    %v697 = vunpack.c.l.b16 %v517
    %v698 = vunpack.c.h.b16 %v517
    %v699 = vunpack.c.l.b16 %v518
    %v700 = vunpack.c.h.b16 %v518
    %v701 = vunpack.c.l.b16 %v519
    %v702 = vunpack.c.h.b16 %v519
    %v703 = vunpack.c.l.b16 %v520
    %v704 = vunpack.c.h.b16 %v520
    %v705 = vunpack.c.l.b16 %v521
    %v706 = vunpack.c.h.b16 %v521
    %v707 = vunpack.c.l.b16 %v522
    %v708 = vunpack.c.h.b16 %v522
    %v709 = vunpack.c.l.b16 %v523
    %v710 = vunpack.c.h.b16 %v523
    %v711 = vunpack.c.l.b16 %v524
    %v712 = vunpack.c.h.b16 %v524
    %v713 = vunpack.c.l.b16 %v525
    %v714 = vunpack.c.h.b16 %v525
    %v715 = vunpack.c.l.b16 %v526
    %v716 = vunpack.c.h.b16 %v526
    %v717 = vunpack.c.l.b16 %v527
    %v718 = vunpack.c.h.b16 %v527
    %v719 = vunpack.c.l.b16 %v528
    %v720 = vunpack.c.h.b16 %v528
    %v721 = vunpack.c.l.b16 %v529
    %v722 = vunpack.c.h.b16 %v529
    %v723 = vunpack.c.l.b16 %v530
    %v724 = vunpack.c.h.b16 %v530
    %v725 = vunpack.c.l.b16 %v531
    %v726 = vunpack.c.h.b16 %v531
    %v727 = vunpack.c.l.b16 %v532
    %v728 = vunpack.c.h.b16 %v532
    %v729 = vunpack.c.l.b16 %v533
    %v730 = vunpack.c.h.b16 %v533
    %v731 = vunpack.c.l.b16 %v534
    %v732 = vunpack.c.h.b16 %v534
    %v733 = vunpack.c.l.b16 %v535
    %v734 = vunpack.c.h.b16 %v535
    %v735 = vunpack.c.l.b16 %v536
    %v736 = vunpack.c.h.b16 %v536
    %v737 = vunpack.c.l.b16 %v537
    %v738 = vunpack.c.h.b16 %v537
    %v739 = vunpack.c.l.b16 %v538
    %v740 = vunpack.c.h.b16 %v538
    %v741 = vpack.c.b16 %v617, %v613
    %v742 = vpack.c.b16 %v618, %v614
    %v743 = vpack.c.b16 %v619, %v615
    %v744 = vpack.c.b16 %v620, %v616
    %v745 = vpack.c.b16 %v625, %v621
    %v746 = vpack.c.b16 %v626, %v622
    %v747 = vpack.c.b16 %v627, %v623
    %v748 = vpack.c.b16 %v628, %v624
    %v749 = vpack.c.b16 %v633, %v629
    %v750 = vpack.c.b16 %v634, %v630
    %v751 = vpack.c.b16 %v635, %v631
    %v752 = vpack.c.b16 %v636, %v632
    %v753 = vpack.c.b16 %v641, %v637
    %v754 = vpack.c.b16 %v642, %v638
    %v755 = vpack.c.b16 %v643, %v639
    %v756 = vpack.c.b16 %v644, %v640
    %v757 = vpack.c.b16 %v649, %v645
    %v758 = vpack.c.b16 %v650, %v646
    %v759 = vpack.c.b16 %v651, %v647
    %v760 = vpack.c.b16 %v652, %v648
    %v761 = vpack.c.b16 %v657, %v653
    %v762 = vpack.c.b16 %v658, %v654
    %v763 = vpack.c.b16 %v659, %v655
    %v764 = vpack.c.b16 %v660, %v656
    %v765 = vpack.c.b16 %v665, %v661
    %v766 = vpack.c.b16 %v666, %v662
    %v767 = vpack.c.b16 %v667, %v663
    %v768 = vpack.c.b16 %v668, %v664
    %v769 = vpack.c.b16 %v673, %v669
    %v770 = vpack.c.b16 %v674, %v670
    %v771 = vpack.c.b16 %v675, %v671
    %v772 = vpack.c.b16 %v676, %v672
    %v773 = vpack.c.b16 %v681, %v677
    %v774 = vpack.c.b16 %v682, %v678
    %v775 = vpack.c.b16 %v683, %v679
    %v776 = vpack.c.b16 %v684, %v680
    %v777 = vpack.c.b16 %v689, %v685
    %v778 = vpack.c.b16 %v690, %v686
    %v779 = vpack.c.b16 %v691, %v687
    %v780 = vpack.c.b16 %v692, %v688
    %v781 = vpack.c.b16 %v697, %v693
    %v782 = vpack.c.b16 %v698, %v694
    %v783 = vpack.c.b16 %v699, %v695
    %v784 = vpack.c.b16 %v700, %v696
    %v785 = vpack.c.b16 %v705, %v701
    %v786 = vpack.c.b16 %v706, %v702
    %v787 = vpack.c.b16 %v707, %v703
    %v788 = vpack.c.b16 %v708, %v704
    %v789 = vpack.c.b16 %v713, %v709
    %v790 = vpack.c.b16 %v714, %v710
    %v791 = vpack.c.b16 %v715, %v711
    %v792 = vpack.c.b16 %v716, %v712
    %v793 = vpack.c.b16 %v721, %v717
    %v794 = vpack.c.b16 %v722, %v718
    %v795 = vpack.c.b16 %v723, %v719
    %v796 = vpack.c.b16 %v724, %v720
    %v797 = vpack.c.b16 %v729, %v725
    %v798 = vpack.c.b16 %v730, %v726
    %v799 = vpack.c.b16 %v731, %v727
    %v800 = vpack.c.b16 %v732, %v728
    %v801 = vpack.c.b16 %v737, %v733
    %v802 = vpack.c.b16 %v738, %v734
    %v803 = vpack.c.b16 %v739, %v735
    %v804 = vpack.c.b16 %v740, %v736
    %869 = vmatpush.bf16.msra.mxu0 %v769
    %870 = vmatpush.bf16.msra.mxu0 %v765
    %871 = vmatpush.bf16.msra.mxu0 %v761
    %872 = vmatpush.bf16.msra.mxu0 %v757
    %873 = vmatpush.bf16.msra.mxu0 %v753
    %874 = vmatpush.bf16.msra.mxu0 %v749
    %875 = vmatpush.bf16.msra.mxu0 %v745
    %876 = vmatpush.bf16.msra.mxu0 %v741
    %877 = vmatmul.bf16.gmra.mxu0 %v473
    %v878 = vpop.f32.mrf.mxu0
    %v879 = vadd.f32 %v541, %v878
    %v880 = vpop.f32.mrf.mxu0
    %881 = vdwg.mxu0
    %882 = vmatpush.bf16.msra.mxu0 %v801
    %883 = vmatpush.bf16.msra.mxu0 %v797
    %884 = vmatpush.bf16.msra.mxu0 %v793
    %885 = vmatpush.bf16.msra.mxu0 %v789
    %886 = vmatpush.bf16.msra.mxu0 %v785
    %887 = vmatpush.bf16.msra.mxu0 %v781
    %888 = vmatpush.bf16.msra.mxu0 %v777
    %889 = vmatpush.bf16.msra.mxu0 %v773
    %890 = vmatmul.bf16.gmra.mxu0 %v474
    %v891 = vpop.f32.mrf.mxu0
    %v892 = vadd.f32 %v879, %v891
    %v893 = vpop.f32.mrf.mxu0
    %894 = vdwg.mxu0
    %895 = vmatpush.bf16.msra.mxu0 %v770
    %896 = vmatpush.bf16.msra.mxu0 %v766
    %897 = vmatpush.bf16.msra.mxu0 %v762
    %898 = vmatpush.bf16.msra.mxu0 %v758
    %899 = vmatpush.bf16.msra.mxu0 %v754
    %900 = vmatpush.bf16.msra.mxu0 %v750
    %901 = vmatpush.bf16.msra.mxu0 %v746
    %902 = vmatpush.bf16.msra.mxu0 %v742
    %903 = vmatmul.bf16.gmra.mxu0 %v473
    %v904 = vpop.f32.mrf.mxu0
    %v905 = vadd.f32 %v542, %v904
    %v906 = vpop.f32.mrf.mxu0
    %907 = vdwg.mxu0
    %908 = vmatpush.bf16.msra.mxu0 %v802
    %909 = vmatpush.bf16.msra.mxu0 %v798
    %910 = vmatpush.bf16.msra.mxu0 %v794
    %911 = vmatpush.bf16.msra.mxu0 %v790
    %912 = vmatpush.bf16.msra.mxu0 %v786
    %913 = vmatpush.bf16.msra.mxu0 %v782
    %914 = vmatpush.bf16.msra.mxu0 %v778
    %915 = vmatpush.bf16.msra.mxu0 %v774
    %916 = vmatmul.bf16.gmra.mxu0 %v474
    %v917 = vpop.f32.mrf.mxu0
    %v918 = vadd.f32 %v905, %v917
    %v919 = vpop.f32.mrf.mxu0
    %920 = vdwg.mxu0
    %921 = vmatpush.bf16.msra.mxu0 %v771
    %922 = vmatpush.bf16.msra.mxu0 %v767
    %923 = vmatpush.bf16.msra.mxu0 %v763
    %924 = vmatpush.bf16.msra.mxu0 %v759
    %925 = vmatpush.bf16.msra.mxu0 %v755
    %926 = vmatpush.bf16.msra.mxu0 %v751
    %927 = vmatpush.bf16.msra.mxu0 %v747
    %928 = vmatpush.bf16.msra.mxu0 %v743
    %929 = vmatmul.bf16.gmra.mxu0 %v473
    %v930 = vpop.f32.mrf.mxu0
    %v931 = vadd.f32 %v543, %v930
    %v932 = vpop.f32.mrf.mxu0
    %933 = vdwg.mxu0
    %934 = vmatpush.bf16.msra.mxu0 %v803
    %935 = vmatpush.bf16.msra.mxu0 %v799
    %936 = vmatpush.bf16.msra.mxu0 %v795
    %937 = vmatpush.bf16.msra.mxu0 %v791
    %938 = vmatpush.bf16.msra.mxu0 %v787
    %939 = vmatpush.bf16.msra.mxu0 %v783
    %940 = vmatpush.bf16.msra.mxu0 %v779
    %941 = vmatpush.bf16.msra.mxu0 %v775
    %942 = vmatmul.bf16.gmra.mxu0 %v474
    %v943 = vpop.f32.mrf.mxu0
    %v944 = vadd.f32 %v931, %v943
    %v945 = vpop.f32.mrf.mxu0
    %946 = vdwg.mxu0
    %947 = vmatpush.bf16.msra.mxu0 %v772
    %948 = vmatpush.bf16.msra.mxu0 %v768
    %949 = vmatpush.bf16.msra.mxu0 %v764
    %950 = vmatpush.bf16.msra.mxu0 %v760
    %951 = vmatpush.bf16.msra.mxu0 %v756
    %952 = vmatpush.bf16.msra.mxu0 %v752
    %953 = vmatpush.bf16.msra.mxu0 %v748
    %954 = vmatpush.bf16.msra.mxu0 %v744
    %955 = vmatmul.bf16.gmra.mxu0 %v473
    %v956 = vpop.f32.mrf.mxu0
    %v957 = vadd.f32 %v544, %v956
    %v958 = vpop.f32.mrf.mxu0
    %959 = vdwg.mxu0
    %960 = vmatpush.bf16.msra.mxu0 %v804
    %961 = vmatpush.bf16.msra.mxu0 %v800
    %962 = vmatpush.bf16.msra.mxu0 %v796
    %963 = vmatpush.bf16.msra.mxu0 %v792
    %964 = vmatpush.bf16.msra.mxu0 %v788
    %965 = vmatpush.bf16.msra.mxu0 %v784
    %966 = vmatpush.bf16.msra.mxu0 %v780
    %967 = vmatpush.bf16.msra.mxu0 %v776
    %968 = vmatmul.bf16.gmra.mxu0 %v474
    %v969 = vpop.f32.mrf.mxu0
    %v970 = vadd.f32 %v957, %v969
    %v971 = vpop.f32.mrf.mxu0
    %972 = vdwg.mxu0
    %v973 = vsel %vm399, %v892, 0.0
    %v974 = vrot.slane %v973, 4
    %v975 = vadd.f32 %v973, %v974
    %v976 = vrot.slane %v975, 2
    %v977 = vadd.f32 %v975, %v976
    %v978 = vrot.slane %v977, 1
    %v979 = vadd.f32 %v977, %v978
    %v980 = vsel %vm399, %v918, 0.0
    %v981 = vrot.slane %v980, 4
    %v982 = vadd.f32 %v980, %v981
    %v983 = vrot.slane %v982, 2
    %v984 = vadd.f32 %v982, %v983
    %v985 = vrot.slane %v984, 1
    %v986 = vadd.f32 %v984, %v985
    %v987 = vsel %vm399, %v944, 0.0
    %v988 = vrot.slane %v987, 4
    %v989 = vadd.f32 %v987, %v988
    %v990 = vrot.slane %v989, 2
    %v991 = vadd.f32 %v989, %v990
    %v992 = vrot.slane %v991, 1
    %v993 = vadd.f32 %v991, %v992
    %v994 = vsel %vm399, %v970, 0.0
    %v995 = vrot.slane %v994, 4
    %v996 = vadd.f32 %v994, %v995
    %v997 = vrot.slane %v996, 2
    %v998 = vadd.f32 %v996, %v997
    %v999 = vrot.slane %v998, 1
    %v1000 = vadd.f32 %v998, %v999
    %v1001 = vmul.f32 %v979, %v420
    %v1002 = vmul.f32 %v986, %v420
    %v1003 = vmul.f32 %v993, %v420
    %v1004 = vmul.f32 %v1000, %v420
    %v1005 = vsub.f32 %v892, %v1001
    %v1006 = vsub.f32 %v918, %v1002
    %v1007 = vsub.f32 %v944, %v1003
    %v1008 = vsub.f32 %v970, %v1004
    %v1009 = vmul.f32 %v1005, %v1005
    %v1010 = vmul.f32 %v1006, %v1006
    %v1011 = vmul.f32 %v1007, %v1007
    %v1012 = vmul.f32 %v1008, %v1008
    %v1013 = vsel %vm399, %v1009, 0.0
    %v1014 = vrot.slane %v1013, 4
    %v1015 = vadd.f32 %v1013, %v1014
    %v1016 = vrot.slane %v1015, 2
    %v1017 = vadd.f32 %v1015, %v1016
    %v1018 = vrot.slane %v1017, 1
    %v1019 = vadd.f32 %v1017, %v1018
    %v1020 = vsel %vm399, %v1010, 0.0
    %v1021 = vrot.slane %v1020, 4
    %v1022 = vadd.f32 %v1020, %v1021
    %v1023 = vrot.slane %v1022, 2
    %v1024 = vadd.f32 %v1022, %v1023
    %v1025 = vrot.slane %v1024, 1
    %v1026 = vadd.f32 %v1024, %v1025
    %v1027 = vsel %vm399, %v1011, 0.0
    %v1028 = vrot.slane %v1027, 4
    %v1029 = vadd.f32 %v1027, %v1028
    %v1030 = vrot.slane %v1029, 2
    %v1031 = vadd.f32 %v1029, %v1030
    %v1032 = vrot.slane %v1031, 1
    %v1033 = vadd.f32 %v1031, %v1032
    %v1034 = vsel %vm399, %v1012, 0.0
    %v1035 = vrot.slane %v1034, 4
    %v1036 = vadd.f32 %v1034, %v1035
    %v1037 = vrot.slane %v1036, 2
    %v1038 = vadd.f32 %v1036, %v1037
    %v1039 = vrot.slane %v1038, 1
    %v1040 = vadd.f32 %v1038, %v1039
    %v1041 = vmul.f32 %v1019, %v420
    %v1042 = vmul.f32 %v1026, %v420
    %v1043 = vmul.f32 %v1033, %v420
    %v1044 = vmul.f32 %v1040, %v420
    %v1045 = vadd.f32 %v1041, 1e-05
    %v1046 = vadd.f32 %v1042, 1e-05
    %v1047 = vadd.f32 %v1043, 1e-05
    %v1048 = vadd.f32 %v1044, 1e-05
    %v1049 = vrsqrt.pop %v1045
    %v1050 = vmul.f32 %v1049, %v1045
    %v1051 = vmul.f32 %v1050, %v1049
    %v1052 = vmul.f32 0.5, %v1051
    %v1053 = vsub.f32 1.5, %v1052
    %v1054 = vmul.f32 %v1049, %v1053
    %vm1055 = vweird.f32 %v1045
    %vm1056 = vweird.f32 %v1049
    %vm1057 = vmor %vm1055, %vm1056
    %v1058 = vsel %vm1057, %v1049, %v1054
    %v1059 = vrsqrt.pop %v1046
    %v1060 = vmul.f32 %v1059, %v1046
    %v1061 = vmul.f32 %v1060, %v1059
    %v1062 = vmul.f32 0.5, %v1061
    %v1063 = vsub.f32 1.5, %v1062
    %v1064 = vmul.f32 %v1059, %v1063
    %vm1065 = vweird.f32 %v1046
    %vm1066 = vweird.f32 %v1059
    %vm1067 = vmor %vm1065, %vm1066
    %v1068 = vsel %vm1067, %v1059, %v1064
    %v1069 = vrsqrt.pop %v1047
    %v1070 = vmul.f32 %v1069, %v1047
    %v1071 = vmul.f32 %v1070, %v1069
    %v1072 = vmul.f32 0.5, %v1071
    %v1073 = vsub.f32 1.5, %v1072
    %v1074 = vmul.f32 %v1069, %v1073
    %vm1075 = vweird.f32 %v1047
    %vm1076 = vweird.f32 %v1069
    %vm1077 = vmor %vm1075, %vm1076
    %v1078 = vsel %vm1077, %v1069, %v1074
    %v1079 = vrsqrt.pop %v1048
    %v1080 = vmul.f32 %v1079, %v1048
    %v1081 = vmul.f32 %v1080, %v1079
    %v1082 = vmul.f32 0.5, %v1081
    %v1083 = vsub.f32 1.5, %v1082
    %v1084 = vmul.f32 %v1079, %v1083
    %vm1085 = vweird.f32 %v1048
    %vm1086 = vweird.f32 %v1079
    %vm1087 = vmor %vm1085, %vm1086
    %v1088 = vsel %vm1087, %v1079, %v1084
    %v1089 = vmul.f32 %v1005, %v1058
    %v1090 = vmul.f32 %v1006, %v1068
    %v1091 = vmul.f32 %v1007, %v1078
    %v1092 = vmul.f32 %v1008, %v1088
    %vm1093 = vcmp.gt.f32.partialorder %v1089, 0.0
    %vm1094 = vcmp.gt.f32.partialorder %v1090, 0.0
    %vm1095 = vcmp.gt.f32.partialorder %v1091, 0.0
    %vm1096 = vcmp.gt.f32.partialorder %v1092, 0.0
    %v1097 = vmul.f32 %v1089, 0.2
    %v1098 = vmul.f32 %v1090, 0.2
    %v1099 = vmul.f32 %v1091, 0.2
    %v1100 = vmul.f32 %v1092, 0.2
    %v1101 = vsel %vm1093, %v1089, %v1097
    %v1102 = vsel %vm1094, %v1090, %v1098
    %v1103 = vsel %vm1095, %v1091, %v1099
    %v1104 = vsel %vm1096, %v1092, %v1100
    %v1105 = vpack.c.bf16 %v1101, %v1101
    %v1106 = vpack.c.bf16 %v1102, %v1102
    %v1107 = vpack.c.bf16 %v1103, %v1103
    %v1108 = vpack.c.bf16 %v1104, %v1104
    %v1109 = vld [vmem:[#allocation12] sm:$0xff]
    %v1110 = vld [vmem:[#allocation12 + $0x8] sm:$0xff]
    %v1111 = vld [vmem:[#allocation12 + $0x10] sm:$0xff]
    %v1112 = vld [vmem:[#allocation12 + $0x18] sm:$0xff]
    %v1113 = vld [vmem:[#allocation12 + $0x20] sm:$0xff]
    %v1114 = vld [vmem:[#allocation12 + $0x28] sm:$0xff]
    %v1115 = vld [vmem:[#allocation12 + $0x30] sm:$0xff]
    %v1116 = vld [vmem:[#allocation12 + $0x38] sm:$0xff]
    %v1117 = vld [vmem:[#allocation12 + $0x40] sm:$0xff]
    %v1118 = vld [vmem:[#allocation12 + $0x48] sm:$0xff]
    %v1119 = vld [vmem:[#allocation12 + $0x50] sm:$0xff]
    %v1120 = vld [vmem:[#allocation12 + $0x58] sm:$0xff]
    %v1121 = vld [vmem:[#allocation12 + $0x60] sm:$0xff]
    %v1122 = vld [vmem:[#allocation12 + $0x68] sm:$0xff]
    %v1123 = vld [vmem:[#allocation12 + $0x70] sm:$0xff]
    %v1124 = vld [vmem:[#allocation12 + $0x78] sm:$0xff]
    %v1125 = vld [vmem:[#allocation12 + $0x80] sm:$0xff]
    %v1126 = vld [vmem:[#allocation12 + $0x88] sm:$0xff]
    %v1127 = vld [vmem:[#allocation12 + $0x90] sm:$0xff]
    %v1128 = vld [vmem:[#allocation12 + $0x98] sm:$0xff]
    %v1129 = vld [vmem:[#allocation12 + $0xa0] sm:$0xff]
    %v1130 = vld [vmem:[#allocation12 + $0xa8] sm:$0xff]
    %v1131 = vld [vmem:[#allocation12 + $0xb0] sm:$0xff]
    %v1132 = vld [vmem:[#allocation12 + $0xb8] sm:$0xff]
    %v1133 = vld [vmem:[#allocation12 + $0xc0] sm:$0xff]
    %v1134 = vld [vmem:[#allocation12 + $0xc8] sm:$0xff]
    %v1135 = vld [vmem:[#allocation12 + $0xd0] sm:$0xff]
    %v1136 = vld [vmem:[#allocation12 + $0xd8] sm:$0xff]
    %v1137 = vld [vmem:[#allocation12 + $0xe0] sm:$0xff]
    %v1138 = vld [vmem:[#allocation12 + $0xe8] sm:$0xff]
    %v1139 = vld [vmem:[#allocation12 + $0xf0] sm:$0xff]
    %v1140 = vld [vmem:[#allocation12 + $0xf8] sm:$0xff]
    %v1141 = vld [vmem:[#allocation12 + $0x100] sm:$0xff]
    %v1142 = vld [vmem:[#allocation12 + $0x108] sm:$0xff]
    %v1143 = vld [vmem:[#allocation12 + $0x110] sm:$0xff]
    %v1144 = vld [vmem:[#allocation12 + $0x118] sm:$0xff]
    %v1145 = vld [vmem:[#allocation12 + $0x120] sm:$0xff]
    %v1146 = vld [vmem:[#allocation12 + $0x128] sm:$0xff]
    %v1147 = vld [vmem:[#allocation12 + $0x130] sm:$0xff]
    %v1148 = vld [vmem:[#allocation12 + $0x138] sm:$0xff]
    %v1149 = vld [vmem:[#allocation12 + $0x140] sm:$0xff]
    %v1150 = vld [vmem:[#allocation12 + $0x148] sm:$0xff]
    %v1151 = vld [vmem:[#allocation12 + $0x150] sm:$0xff]
    %v1152 = vld [vmem:[#allocation12 + $0x158] sm:$0xff]
    %v1153 = vld [vmem:[#allocation12 + $0x160] sm:$0xff]
    %v1154 = vld [vmem:[#allocation12 + $0x168] sm:$0xff]
    %v1155 = vld [vmem:[#allocation12 + $0x170] sm:$0xff]
    %v1156 = vld [vmem:[#allocation12 + $0x178] sm:$0xff]
    %v1157 = vld [vmem:[#allocation12 + $0x180] sm:$0xff]
    %v1158 = vld [vmem:[#allocation12 + $0x188] sm:$0xff]
    %v1159 = vld [vmem:[#allocation12 + $0x190] sm:$0xff]
    %v1160 = vld [vmem:[#allocation12 + $0x198] sm:$0xff]
    %v1161 = vld [vmem:[#allocation12 + $0x1a0] sm:$0xff]
    %v1162 = vld [vmem:[#allocation12 + $0x1a8] sm:$0xff]
    %v1163 = vld [vmem:[#allocation12 + $0x1b0] sm:$0xff]
    %v1164 = vld [vmem:[#allocation12 + $0x1b8] sm:$0xff]
    %v1165 = vld [vmem:[#allocation12 + $0x1c0] sm:$0xff]
    %v1166 = vld [vmem:[#allocation12 + $0x1c8] sm:$0xff]
    %v1167 = vld [vmem:[#allocation12 + $0x1d0] sm:$0xff]
    %v1168 = vld [vmem:[#allocation12 + $0x1d8] sm:$0xff]
    %v1169 = vld [vmem:[#allocation12 + $0x1e0] sm:$0xff]
    %v1170 = vld [vmem:[#allocation12 + $0x1e8] sm:$0xff]
    %v1171 = vld [vmem:[#allocation12 + $0x1f0] sm:$0xff]
    %v1172 = vld [vmem:[#allocation12 + $0x1f8] sm:$0xff]
    %v1173 = vld [vmem:[#allocation12 + $0x200] sm:$0xff]
    %v1174 = vld [vmem:[#allocation12 + $0x208] sm:$0xff]
    %v1175 = vld [vmem:[#allocation12 + $0x210] sm:$0xff]
    %v1176 = vld [vmem:[#allocation12 + $0x218] sm:$0xff]
    %v1177 = vld [vmem:[#allocation12 + $0x220] sm:$0xff]
    %v1178 = vld [vmem:[#allocation12 + $0x228] sm:$0xff]
    %v1179 = vld [vmem:[#allocation12 + $0x230] sm:$0xff]
    %v1180 = vld [vmem:[#allocation12 + $0x238] sm:$0xff]
    %v1181 = vld [vmem:[#allocation12 + $0x240] sm:$0xff]
    %v1182 = vld [vmem:[#allocation12 + $0x248] sm:$0xff]
    %v1183 = vld [vmem:[#allocation12 + $0x250] sm:$0xff]
    %v1184 = vld [vmem:[#allocation12 + $0x258] sm:$0xff]
    %v1185 = vld [vmem:[#allocation12 + $0x260] sm:$0xff]
    %v1186 = vld [vmem:[#allocation12 + $0x268] sm:$0xff]
    %v1187 = vld [vmem:[#allocation12 + $0x270] sm:$0xff]
    %v1188 = vld [vmem:[#allocation12 + $0x278] sm:$0xff]
    %v1189 = vld [vmem:[#allocation12 + $0x280] sm:$0xff]
    %v1190 = vld [vmem:[#allocation12 + $0x288] sm:$0xff]
    %v1191 = vld [vmem:[#allocation12 + $0x290] sm:$0xff]
    %v1192 = vld [vmem:[#allocation12 + $0x298] sm:$0xff]
    %v1193 = vld [vmem:[#allocation12 + $0x2a0] sm:$0xff]
    %v1194 = vld [vmem:[#allocation12 + $0x2a8] sm:$0xff]
    %v1195 = vld [vmem:[#allocation12 + $0x2b0] sm:$0xff]
    %v1196 = vld [vmem:[#allocation12 + $0x2b8] sm:$0xff]
    %v1197 = vld [vmem:[#allocation12 + $0x2c0] sm:$0xff]
    %v1198 = vld [vmem:[#allocation12 + $0x2c8] sm:$0xff]
    %v1199 = vld [vmem:[#allocation12 + $0x2d0] sm:$0xff]
    %v1200 = vld [vmem:[#allocation12 + $0x2d8] sm:$0xff]
    %v1201 = vld [vmem:[#allocation12 + $0x2e0] sm:$0xff]
    %v1202 = vld [vmem:[#allocation12 + $0x2e8] sm:$0xff]
    %v1203 = vld [vmem:[#allocation12 + $0x2f0] sm:$0xff]
    %v1204 = vld [vmem:[#allocation12 + $0x2f8] sm:$0xff]
    %v1205 = vld [vmem:[#allocation12 + $0x300] sm:$0xff]
    %v1206 = vld [vmem:[#allocation12 + $0x308] sm:$0xff]
    %v1207 = vld [vmem:[#allocation12 + $0x310] sm:$0xff]
    %v1208 = vld [vmem:[#allocation12 + $0x318] sm:$0xff]
    %v1209 = vld [vmem:[#allocation12 + $0x320] sm:$0xff]
    %v1210 = vld [vmem:[#allocation12 + $0x328] sm:$0xff]
    %v1211 = vld [vmem:[#allocation12 + $0x330] sm:$0xff]
    %v1212 = vld [vmem:[#allocation12 + $0x338] sm:$0xff]
    %v1213 = vld [vmem:[#allocation12 + $0x340] sm:$0xff]
    %v1214 = vld [vmem:[#allocation12 + $0x348] sm:$0xff]
    %v1215 = vld [vmem:[#allocation12 + $0x350] sm:$0xff]
    %v1216 = vld [vmem:[#allocation12 + $0x358] sm:$0xff]
    %v1217 = vld [vmem:[#allocation12 + $0x360] sm:$0xff]
    %v1218 = vld [vmem:[#allocation12 + $0x368] sm:$0xff]
    %v1219 = vld [vmem:[#allocation12 + $0x370] sm:$0xff]
    %v1220 = vld [vmem:[#allocation12 + $0x378] sm:$0xff]
    %v1221 = vld [vmem:[#allocation12 + $0x380] sm:$0xff]
    %v1222 = vld [vmem:[#allocation12 + $0x388] sm:$0xff]
    %v1223 = vld [vmem:[#allocation12 + $0x390] sm:$0xff]
    %v1224 = vld [vmem:[#allocation12 + $0x398] sm:$0xff]
    %v1225 = vld [vmem:[#allocation12 + $0x3a0] sm:$0xff]
    %v1226 = vld [vmem:[#allocation12 + $0x3a8] sm:$0xff]
    %v1227 = vld [vmem:[#allocation12 + $0x3b0] sm:$0xff]
    %v1228 = vld [vmem:[#allocation12 + $0x3b8] sm:$0xff]
    %v1229 = vld [vmem:[#allocation12 + $0x3c0] sm:$0xff]
    %v1230 = vld [vmem:[#allocation12 + $0x3c8] sm:$0xff]
    %v1231 = vld [vmem:[#allocation12 + $0x3d0] sm:$0xff]
    %v1232 = vld [vmem:[#allocation12 + $0x3d8] sm:$0xff]
    %v1233 = vld [vmem:[#allocation12 + $0x3e0] sm:$0xff]
    %v1234 = vld [vmem:[#allocation12 + $0x3e8] sm:$0xff]
    %v1235 = vld [vmem:[#allocation12 + $0x3f0] sm:$0xff]
    %v1236 = vld [vmem:[#allocation12 + $0x3f8] sm:$0xff]
    %v1237 = vld [vmem:[#allocation12 + $0x400] sm:$0xff]
    %v1238 = vld [vmem:[#allocation12 + $0x408] sm:$0xff]
    %v1239 = vld [vmem:[#allocation12 + $0x410] sm:$0xff]
    %v1240 = vld [vmem:[#allocation12 + $0x418] sm:$0xff]
    %v1241 = vld [vmem:[#allocation12 + $0x420] sm:$0xff]
    %v1242 = vld [vmem:[#allocation12 + $0x428] sm:$0xff]
    %v1243 = vld [vmem:[#allocation12 + $0x430] sm:$0xff]
    %v1244 = vld [vmem:[#allocation12 + $0x438] sm:$0xff]
    %v1245 = vld [vmem:[#allocation12 + $0x440] sm:$0xff]
    %v1246 = vld [vmem:[#allocation12 + $0x448] sm:$0xff]
    %v1247 = vld [vmem:[#allocation12 + $0x450] sm:$0xff]
    %v1248 = vld [vmem:[#allocation12 + $0x458] sm:$0xff]
    %v1249 = vld [vmem:[#allocation12 + $0x460] sm:$0xff]
    %v1250 = vld [vmem:[#allocation12 + $0x468] sm:$0xff]
    %v1251 = vld [vmem:[#allocation12 + $0x470] sm:$0xff]
    %v1252 = vld [vmem:[#allocation12 + $0x478] sm:$0xff]
    %v1253 = vld [vmem:[#allocation12 + $0x480] sm:$0xff]
    %v1254 = vld [vmem:[#allocation12 + $0x488] sm:$0xff]
    %v1255 = vld [vmem:[#allocation12 + $0x490] sm:$0xff]
    %v1256 = vld [vmem:[#allocation12 + $0x498] sm:$0xff]
    %v1257 = vld [vmem:[#allocation12 + $0x4a0] sm:$0xff]
    %v1258 = vld [vmem:[#allocation12 + $0x4a8] sm:$0xff]
    %v1259 = vld [vmem:[#allocation12 + $0x4b0] sm:$0xff]
    %v1260 = vld [vmem:[#allocation12 + $0x4b8] sm:$0xff]
    %v1261 = vld [vmem:[#allocation12 + $0x4c0] sm:$0xff]
    %v1262 = vld [vmem:[#allocation12 + $0x4c8] sm:$0xff]
    %v1263 = vld [vmem:[#allocation12 + $0x4d0] sm:$0xff]
    %v1264 = vld [vmem:[#allocation12 + $0x4d8] sm:$0xff]
    %v1265 = vld [vmem:[#allocation12 + $0x4e0] sm:$0xff]
    %v1266 = vld [vmem:[#allocation12 + $0x4e8] sm:$0xff]
    %v1267 = vld [vmem:[#allocation12 + $0x4f0] sm:$0xff]
    %v1268 = vld [vmem:[#allocation12 + $0x4f8] sm:$0xff]
    %v1269 = vld [vmem:[#allocation12 + $0x500] sm:$0xff]
    %v1270 = vld [vmem:[#allocation12 + $0x508] sm:$0xff]
    %v1271 = vld [vmem:[#allocation12 + $0x510] sm:$0xff]
    %v1272 = vld [vmem:[#allocation12 + $0x518] sm:$0xff]
    %v1273 = vld [vmem:[#allocation12 + $0x520] sm:$0xff]
    %v1274 = vld [vmem:[#allocation12 + $0x528] sm:$0xff]
    %v1275 = vld [vmem:[#allocation12 + $0x530] sm:$0xff]
    %v1276 = vld [vmem:[#allocation12 + $0x538] sm:$0xff]
    %v1277 = vld [vmem:[#allocation12 + $0x540] sm:$0xff]
    %v1278 = vld [vmem:[#allocation12 + $0x548] sm:$0xff]
    %v1279 = vld [vmem:[#allocation12 + $0x550] sm:$0xff]
    %v1280 = vld [vmem:[#allocation12 + $0x558] sm:$0xff]
    %v1281 = vld [vmem:[#allocation12 + $0x560] sm:$0xff]
    %v1282 = vld [vmem:[#allocation12 + $0x568] sm:$0xff]
    %v1283 = vld [vmem:[#allocation12 + $0x570] sm:$0xff]
    %v1284 = vld [vmem:[#allocation12 + $0x578] sm:$0xff]
    %v1285 = vld [vmem:[#allocation12 + $0x580] sm:$0xff]
    %v1286 = vld [vmem:[#allocation12 + $0x588] sm:$0xff]
    %v1287 = vld [vmem:[#allocation12 + $0x590] sm:$0xff]
    %v1288 = vld [vmem:[#allocation12 + $0x598] sm:$0xff]
    %v1289 = vld [vmem:[#allocation12 + $0x5a0] sm:$0xff]
    %v1290 = vld [vmem:[#allocation12 + $0x5a8] sm:$0xff]
    %v1291 = vld [vmem:[#allocation12 + $0x5b0] sm:$0xff]
    %v1292 = vld [vmem:[#allocation12 + $0x5b8] sm:$0xff]
    %v1293 = vld [vmem:[#allocation12 + $0x5c0] sm:$0xff]
    %v1294 = vld [vmem:[#allocation12 + $0x5c8] sm:$0xff]
    %v1295 = vld [vmem:[#allocation12 + $0x5d0] sm:$0xff]
    %v1296 = vld [vmem:[#allocation12 + $0x5d8] sm:$0xff]
    %v1297 = vld [vmem:[#allocation12 + $0x5e0] sm:$0xff]
    %v1298 = vld [vmem:[#allocation12 + $0x5e8] sm:$0xff]
    %v1299 = vld [vmem:[#allocation12 + $0x5f0] sm:$0xff]
    %v1300 = vld [vmem:[#allocation12 + $0x5f8] sm:$0xff]
    %v1301 = vld [vmem:[#allocation12 + $0x600] sm:$0xff]
    %v1302 = vld [vmem:[#allocation12 + $0x608] sm:$0xff]
    %v1303 = vld [vmem:[#allocation12 + $0x610] sm:$0xff]
    %v1304 = vld [vmem:[#allocation12 + $0x618] sm:$0xff]
    %v1305 = vld [vmem:[#allocation12 + $0x620] sm:$0xff]
    %v1306 = vld [vmem:[#allocation12 + $0x628] sm:$0xff]
    %v1307 = vld [vmem:[#allocation12 + $0x630] sm:$0xff]
    %v1308 = vld [vmem:[#allocation12 + $0x638] sm:$0xff]
    %v1309 = vld [vmem:[#allocation12 + $0x640] sm:$0xff]
    %v1310 = vld [vmem:[#allocation12 + $0x648] sm:$0xff]
    %v1311 = vld [vmem:[#allocation12 + $0x650] sm:$0xff]
    %v1312 = vld [vmem:[#allocation12 + $0x658] sm:$0xff]
    %v1313 = vld [vmem:[#allocation12 + $0x660] sm:$0xff]
    %v1314 = vld [vmem:[#allocation12 + $0x668] sm:$0xff]
    %v1315 = vld [vmem:[#allocation12 + $0x670] sm:$0xff]
    %v1316 = vld [vmem:[#allocation12 + $0x678] sm:$0xff]
    %v1317 = vld [vmem:[#allocation12 + $0x680] sm:$0xff]
    %v1318 = vld [vmem:[#allocation12 + $0x688] sm:$0xff]
    %v1319 = vld [vmem:[#allocation12 + $0x690] sm:$0xff]
    %v1320 = vld [vmem:[#allocation12 + $0x698] sm:$0xff]
    %v1321 = vld [vmem:[#allocation12 + $0x6a0] sm:$0xff]
    %v1322 = vld [vmem:[#allocation12 + $0x6a8] sm:$0xff]
    %v1323 = vld [vmem:[#allocation12 + $0x6b0] sm:$0xff]
    %v1324 = vld [vmem:[#allocation12 + $0x6b8] sm:$0xff]
    %v1325 = vld [vmem:[#allocation12 + $0x6c0] sm:$0xff]
    %v1326 = vld [vmem:[#allocation12 + $0x6c8] sm:$0xff]
    %v1327 = vld [vmem:[#allocation12 + $0x6d0] sm:$0xff]
    %v1328 = vld [vmem:[#allocation12 + $0x6d8] sm:$0xff]
    %v1329 = vld [vmem:[#allocation12 + $0x6e0] sm:$0xff]
    %v1330 = vld [vmem:[#allocation12 + $0x6e8] sm:$0xff]
    %v1331 = vld [vmem:[#allocation12 + $0x6f0] sm:$0xff]
    %v1332 = vld [vmem:[#allocation12 + $0x6f8] sm:$0xff]
    %v1333 = vld [vmem:[#allocation12 + $0x700] sm:$0xff]
    %v1334 = vld [vmem:[#allocation12 + $0x708] sm:$0xff]
    %v1335 = vld [vmem:[#allocation12 + $0x710] sm:$0xff]
    %v1336 = vld [vmem:[#allocation12 + $0x718] sm:$0xff]
    %v1337 = vld [vmem:[#allocation12 + $0x720] sm:$0xff]
    %v1338 = vld [vmem:[#allocation12 + $0x728] sm:$0xff]
    %v1339 = vld [vmem:[#allocation12 + $0x730] sm:$0xff]
    %v1340 = vld [vmem:[#allocation12 + $0x738] sm:$0xff]
    %v1341 = vld [vmem:[#allocation12 + $0x740] sm:$0xff]
    %v1342 = vld [vmem:[#allocation12 + $0x748] sm:$0xff]
    %v1343 = vld [vmem:[#allocation12 + $0x750] sm:$0xff]
    %v1344 = vld [vmem:[#allocation12 + $0x758] sm:$0xff]
    %v1345 = vld [vmem:[#allocation12 + $0x760] sm:$0xff]
    %v1346 = vld [vmem:[#allocation12 + $0x768] sm:$0xff]
    %v1347 = vld [vmem:[#allocation12 + $0x770] sm:$0xff]
    %v1348 = vld [vmem:[#allocation12 + $0x778] sm:$0xff]
    %v1349 = vld [vmem:[#allocation12 + $0x780] sm:$0xff]
    %v1350 = vld [vmem:[#allocation12 + $0x788] sm:$0xff]
    %v1351 = vld [vmem:[#allocation12 + $0x790] sm:$0xff]
    %v1352 = vld [vmem:[#allocation12 + $0x798] sm:$0xff]
    %v1353 = vld [vmem:[#allocation12 + $0x7a0] sm:$0xff]
    %v1354 = vld [vmem:[#allocation12 + $0x7a8] sm:$0xff]
    %v1355 = vld [vmem:[#allocation12 + $0x7b0] sm:$0xff]
    %v1356 = vld [vmem:[#allocation12 + $0x7b8] sm:$0xff]
    %v1357 = vld [vmem:[#allocation12 + $0x7c0] sm:$0xff]
    %v1358 = vld [vmem:[#allocation12 + $0x7c8] sm:$0xff]
    %v1359 = vld [vmem:[#allocation12 + $0x7d0] sm:$0xff]
    %v1360 = vld [vmem:[#allocation12 + $0x7d8] sm:$0xff]
    %v1361 = vld [vmem:[#allocation12 + $0x7e0] sm:$0xff]
    %v1362 = vld [vmem:[#allocation12 + $0x7e8] sm:$0xff]
    %v1363 = vld [vmem:[#allocation12 + $0x7f0] sm:$0xff]
    %v1364 = vld [vmem:[#allocation12 + $0x7f8] sm:$0xff]
    %v1365 = vld [vmem:[#allocation13] sm:$0xff]
    %v1367 = vperm.slane %v1365, 0
    %v1368 = vperm.slane %v1365, 1
    %v1369 = vperm.slane %v1365, 2
    %v1370 = vperm.slane %v1365, 3
    %v1371 = vperm.slane %v1365, 4
    %v1372 = vperm.slane %v1365, 5
    %v1373 = vperm.slane %v1365, 6
    %v1374 = vperm.slane %v1365, 7
    %v1639 = vunpack.c.l.b16 %v1109
    %v1640 = vunpack.c.h.b16 %v1109
    %v1641 = vunpack.c.l.b16 %v1110
    %v1642 = vunpack.c.h.b16 %v1110
    %v1643 = vunpack.c.l.b16 %v1111
    %v1644 = vunpack.c.h.b16 %v1111
    %v1645 = vunpack.c.l.b16 %v1112
    %v1646 = vunpack.c.h.b16 %v1112
    %v1647 = vunpack.c.l.b16 %v1113
    %v1648 = vunpack.c.h.b16 %v1113
    %v1649 = vunpack.c.l.b16 %v1114
    %v1650 = vunpack.c.h.b16 %v1114
    %v1651 = vunpack.c.l.b16 %v1115
    %v1652 = vunpack.c.h.b16 %v1115
    %v1653 = vunpack.c.l.b16 %v1116
    %v1654 = vunpack.c.h.b16 %v1116
    %v1655 = vunpack.c.l.b16 %v1117
    %v1656 = vunpack.c.h.b16 %v1117
    %v1657 = vunpack.c.l.b16 %v1118
    %v1658 = vunpack.c.h.b16 %v1118
    %v1659 = vunpack.c.l.b16 %v1119
    %v1660 = vunpack.c.h.b16 %v1119
    %v1661 = vunpack.c.l.b16 %v1120
    %v1662 = vunpack.c.h.b16 %v1120
    %v1663 = vunpack.c.l.b16 %v1121
    %v1664 = vunpack.c.h.b16 %v1121
    %v1665 = vunpack.c.l.b16 %v1122
    %v1666 = vunpack.c.h.b16 %v1122
    %v1667 = vunpack.c.l.b16 %v1123
    %v1668 = vunpack.c.h.b16 %v1123
    %v1669 = vunpack.c.l.b16 %v1124
    %v1670 = vunpack.c.h.b16 %v1124
    %v1671 = vunpack.c.l.b16 %v1125
    %v1672 = vunpack.c.h.b16 %v1125
    %v1673 = vunpack.c.l.b16 %v1126
    %v1674 = vunpack.c.h.b16 %v1126
    %v1675 = vunpack.c.l.b16 %v1127
    %v1676 = vunpack.c.h.b16 %v1127
    %v1677 = vunpack.c.l.b16 %v1128
    %v1678 = vunpack.c.h.b16 %v1128
    %v1679 = vunpack.c.l.b16 %v1129
    %v1680 = vunpack.c.h.b16 %v1129
    %v1681 = vunpack.c.l.b16 %v1130
    %v1682 = vunpack.c.h.b16 %v1130
    %v1683 = vunpack.c.l.b16 %v1131
    %v1684 = vunpack.c.h.b16 %v1131
    %v1685 = vunpack.c.l.b16 %v1132
    %v1686 = vunpack.c.h.b16 %v1132
    %v1687 = vunpack.c.l.b16 %v1133
    %v1688 = vunpack.c.h.b16 %v1133
    %v1689 = vunpack.c.l.b16 %v1134
    %v1690 = vunpack.c.h.b16 %v1134
    %v1691 = vunpack.c.l.b16 %v1135
    %v1692 = vunpack.c.h.b16 %v1135
    %v1693 = vunpack.c.l.b16 %v1136
    %v1694 = vunpack.c.h.b16 %v1136
    %v1695 = vunpack.c.l.b16 %v1137
    %v1696 = vunpack.c.h.b16 %v1137
    %v1697 = vunpack.c.l.b16 %v1138
    %v1698 = vunpack.c.h.b16 %v1138
    %v1699 = vunpack.c.l.b16 %v1139
    %v1700 = vunpack.c.h.b16 %v1139
    %v1701 = vunpack.c.l.b16 %v1140
    %v1702 = vunpack.c.h.b16 %v1140
    %v1703 = vunpack.c.l.b16 %v1141
    %v1704 = vunpack.c.h.b16 %v1141
    %v1705 = vunpack.c.l.b16 %v1142
    %v1706 = vunpack.c.h.b16 %v1142
    %v1707 = vunpack.c.l.b16 %v1143
    %v1708 = vunpack.c.h.b16 %v1143
    %v1709 = vunpack.c.l.b16 %v1144
    %v1710 = vunpack.c.h.b16 %v1144
    %v1711 = vunpack.c.l.b16 %v1145
    %v1712 = vunpack.c.h.b16 %v1145
    %v1713 = vunpack.c.l.b16 %v1146
    %v1714 = vunpack.c.h.b16 %v1146
    %v1715 = vunpack.c.l.b16 %v1147
    %v1716 = vunpack.c.h.b16 %v1147
    %v1717 = vunpack.c.l.b16 %v1148
    %v1718 = vunpack.c.h.b16 %v1148
    %v1719 = vunpack.c.l.b16 %v1149
    %v1720 = vunpack.c.h.b16 %v1149
    %v1721 = vunpack.c.l.b16 %v1150
    %v1722 = vunpack.c.h.b16 %v1150
    %v1723 = vunpack.c.l.b16 %v1151
    %v1724 = vunpack.c.h.b16 %v1151
    %v1725 = vunpack.c.l.b16 %v1152
    %v1726 = vunpack.c.h.b16 %v1152
    %v1727 = vunpack.c.l.b16 %v1153
    %v1728 = vunpack.c.h.b16 %v1153
    %v1729 = vunpack.c.l.b16 %v1154
    %v1730 = vunpack.c.h.b16 %v1154
    %v1731 = vunpack.c.l.b16 %v1155
    %v1732 = vunpack.c.h.b16 %v1155
    %v1733 = vunpack.c.l.b16 %v1156
    %v1734 = vunpack.c.h.b16 %v1156
    %v1735 = vunpack.c.l.b16 %v1157
    %v1736 = vunpack.c.h.b16 %v1157
    %v1737 = vunpack.c.l.b16 %v1158
    %v1738 = vunpack.c.h.b16 %v1158
    %v1739 = vunpack.c.l.b16 %v1159
    %v1740 = vunpack.c.h.b16 %v1159
    %v1741 = vunpack.c.l.b16 %v1160
    %v1742 = vunpack.c.h.b16 %v1160
    %v1743 = vunpack.c.l.b16 %v1161
    %v1744 = vunpack.c.h.b16 %v1161
    %v1745 = vunpack.c.l.b16 %v1162
    %v1746 = vunpack.c.h.b16 %v1162
    %v1747 = vunpack.c.l.b16 %v1163
    %v1748 = vunpack.c.h.b16 %v1163
    %v1749 = vunpack.c.l.b16 %v1164
    %v1750 = vunpack.c.h.b16 %v1164
    %v1751 = vunpack.c.l.b16 %v1165
    %v1752 = vunpack.c.h.b16 %v1165
    %v1753 = vunpack.c.l.b16 %v1166
    %v1754 = vunpack.c.h.b16 %v1166
    %v1755 = vunpack.c.l.b16 %v1167
    %v1756 = vunpack.c.h.b16 %v1167
    %v1757 = vunpack.c.l.b16 %v1168
    %v1758 = vunpack.c.h.b16 %v1168
    %v1759 = vunpack.c.l.b16 %v1169
    %v1760 = vunpack.c.h.b16 %v1169
    %v1761 = vunpack.c.l.b16 %v1170
    %v1762 = vunpack.c.h.b16 %v1170
    %v1763 = vunpack.c.l.b16 %v1171
    %v1764 = vunpack.c.h.b16 %v1171
    %v1765 = vunpack.c.l.b16 %v1172
    %v1766 = vunpack.c.h.b16 %v1172
    %v1767 = vunpack.c.l.b16 %v1173
    %v1768 = vunpack.c.h.b16 %v1173
    %v1769 = vunpack.c.l.b16 %v1174
    %v1770 = vunpack.c.h.b16 %v1174
    %v1771 = vunpack.c.l.b16 %v1175
    %v1772 = vunpack.c.h.b16 %v1175
    %v1773 = vunpack.c.l.b16 %v1176
    %v1774 = vunpack.c.h.b16 %v1176
    %v1775 = vunpack.c.l.b16 %v1177
    %v1776 = vunpack.c.h.b16 %v1177
    %v1777 = vunpack.c.l.b16 %v1178
    %v1778 = vunpack.c.h.b16 %v1178
    %v1779 = vunpack.c.l.b16 %v1179
    %v1780 = vunpack.c.h.b16 %v1179
    %v1781 = vunpack.c.l.b16 %v1180
    %v1782 = vunpack.c.h.b16 %v1180
    %v1783 = vunpack.c.l.b16 %v1181
    %v1784 = vunpack.c.h.b16 %v1181
    %v1785 = vunpack.c.l.b16 %v1182
    %v1786 = vunpack.c.h.b16 %v1182
    %v1787 = vunpack.c.l.b16 %v1183
    %v1788 = vunpack.c.h.b16 %v1183
    %v1789 = vunpack.c.l.b16 %v1184
    %v1790 = vunpack.c.h.b16 %v1184
    %v1791 = vunpack.c.l.b16 %v1185
    %v1792 = vunpack.c.h.b16 %v1185
    %v1793 = vunpack.c.l.b16 %v1186
    %v1794 = vunpack.c.h.b16 %v1186
    %v1795 = vunpack.c.l.b16 %v1187
    %v1796 = vunpack.c.h.b16 %v1187
    %v1797 = vunpack.c.l.b16 %v1188
    %v1798 = vunpack.c.h.b16 %v1188
    %v1799 = vunpack.c.l.b16 %v1189
    %v1800 = vunpack.c.h.b16 %v1189
    %v1801 = vunpack.c.l.b16 %v1190
    %v1802 = vunpack.c.h.b16 %v1190
    %v1803 = vunpack.c.l.b16 %v1191
    %v1804 = vunpack.c.h.b16 %v1191
    %v1805 = vunpack.c.l.b16 %v1192
    %v1806 = vunpack.c.h.b16 %v1192
    %v1807 = vunpack.c.l.b16 %v1193
    %v1808 = vunpack.c.h.b16 %v1193
    %v1809 = vunpack.c.l.b16 %v1194
    %v1810 = vunpack.c.h.b16 %v1194
    %v1811 = vunpack.c.l.b16 %v1195
    %v1812 = vunpack.c.h.b16 %v1195
    %v1813 = vunpack.c.l.b16 %v1196
    %v1814 = vunpack.c.h.b16 %v1196
    %v1815 = vunpack.c.l.b16 %v1197
    %v1816 = vunpack.c.h.b16 %v1197
    %v1817 = vunpack.c.l.b16 %v1198
    %v1818 = vunpack.c.h.b16 %v1198
    %v1819 = vunpack.c.l.b16 %v1199
    %v1820 = vunpack.c.h.b16 %v1199
    %v1821 = vunpack.c.l.b16 %v1200
    %v1822 = vunpack.c.h.b16 %v1200
    %v1823 = vunpack.c.l.b16 %v1201
    %v1824 = vunpack.c.h.b16 %v1201
    %v1825 = vunpack.c.l.b16 %v1202
    %v1826 = vunpack.c.h.b16 %v1202
    %v1827 = vunpack.c.l.b16 %v1203
    %v1828 = vunpack.c.h.b16 %v1203
    %v1829 = vunpack.c.l.b16 %v1204
    %v1830 = vunpack.c.h.b16 %v1204
    %v1831 = vunpack.c.l.b16 %v1205
    %v1832 = vunpack.c.h.b16 %v1205
    %v1833 = vunpack.c.l.b16 %v1206
    %v1834 = vunpack.c.h.b16 %v1206
    %v1835 = vunpack.c.l.b16 %v1207
    %v1836 = vunpack.c.h.b16 %v1207
    %v1837 = vunpack.c.l.b16 %v1208
    %v1838 = vunpack.c.h.b16 %v1208
    %v1839 = vunpack.c.l.b16 %v1209
    %v1840 = vunpack.c.h.b16 %v1209
    %v1841 = vunpack.c.l.b16 %v1210
    %v1842 = vunpack.c.h.b16 %v1210
    %v1843 = vunpack.c.l.b16 %v1211
    %v1844 = vunpack.c.h.b16 %v1211
    %v1845 = vunpack.c.l.b16 %v1212
    %v1846 = vunpack.c.h.b16 %v1212
    %v1847 = vunpack.c.l.b16 %v1213
    %v1848 = vunpack.c.h.b16 %v1213
    %v1849 = vunpack.c.l.b16 %v1214
    %v1850 = vunpack.c.h.b16 %v1214
    %v1851 = vunpack.c.l.b16 %v1215
    %v1852 = vunpack.c.h.b16 %v1215
    %v1853 = vunpack.c.l.b16 %v1216
    %v1854 = vunpack.c.h.b16 %v1216
    %v1855 = vunpack.c.l.b16 %v1217
    %v1856 = vunpack.c.h.b16 %v1217
    %v1857 = vunpack.c.l.b16 %v1218
    %v1858 = vunpack.c.h.b16 %v1218
    %v1859 = vunpack.c.l.b16 %v1219
    %v1860 = vunpack.c.h.b16 %v1219
    %v1861 = vunpack.c.l.b16 %v1220
    %v1862 = vunpack.c.h.b16 %v1220
    %v1863 = vunpack.c.l.b16 %v1221
    %v1864 = vunpack.c.h.b16 %v1221
    %v1865 = vunpack.c.l.b16 %v1222
    %v1866 = vunpack.c.h.b16 %v1222
    %v1867 = vunpack.c.l.b16 %v1223
    %v1868 = vunpack.c.h.b16 %v1223
    %v1869 = vunpack.c.l.b16 %v1224
    %v1870 = vunpack.c.h.b16 %v1224
    %v1871 = vunpack.c.l.b16 %v1225
    %v1872 = vunpack.c.h.b16 %v1225
    %v1873 = vunpack.c.l.b16 %v1226
    %v1874 = vunpack.c.h.b16 %v1226
    %v1875 = vunpack.c.l.b16 %v1227
    %v1876 = vunpack.c.h.b16 %v1227
    %v1877 = vunpack.c.l.b16 %v1228
    %v1878 = vunpack.c.h.b16 %v1228
    %v1879 = vunpack.c.l.b16 %v1229
    %v1880 = vunpack.c.h.b16 %v1229
    %v1881 = vunpack.c.l.b16 %v1230
    %v1882 = vunpack.c.h.b16 %v1230
    %v1883 = vunpack.c.l.b16 %v1231
    %v1884 = vunpack.c.h.b16 %v1231
    %v1885 = vunpack.c.l.b16 %v1232
    %v1886 = vunpack.c.h.b16 %v1232
    %v1887 = vunpack.c.l.b16 %v1233
    %v1888 = vunpack.c.h.b16 %v1233
    %v1889 = vunpack.c.l.b16 %v1234
    %v1890 = vunpack.c.h.b16 %v1234
    %v1891 = vunpack.c.l.b16 %v1235
    %v1892 = vunpack.c.h.b16 %v1235
    %v1893 = vunpack.c.l.b16 %v1236
    %v1894 = vunpack.c.h.b16 %v1236
    %v1895 = vunpack.c.l.b16 %v1237
    %v1896 = vunpack.c.h.b16 %v1237
    %v1897 = vunpack.c.l.b16 %v1238
    %v1898 = vunpack.c.h.b16 %v1238
    %v1899 = vunpack.c.l.b16 %v1239
    %v1900 = vunpack.c.h.b16 %v1239
    %v1901 = vunpack.c.l.b16 %v1240
    %v1902 = vunpack.c.h.b16 %v1240
    %v1903 = vunpack.c.l.b16 %v1241
    %v1904 = vunpack.c.h.b16 %v1241
    %v1905 = vunpack.c.l.b16 %v1242
    %v1906 = vunpack.c.h.b16 %v1242
    %v1907 = vunpack.c.l.b16 %v1243
    %v1908 = vunpack.c.h.b16 %v1243
    %v1909 = vunpack.c.l.b16 %v1244
    %v1910 = vunpack.c.h.b16 %v1244
    %v1911 = vunpack.c.l.b16 %v1245
    %v1912 = vunpack.c.h.b16 %v1245
    %v1913 = vunpack.c.l.b16 %v1246
    %v1914 = vunpack.c.h.b16 %v1246
    %v1915 = vunpack.c.l.b16 %v1247
    %v1916 = vunpack.c.h.b16 %v1247
    %v1917 = vunpack.c.l.b16 %v1248
    %v1918 = vunpack.c.h.b16 %v1248
    %v1919 = vunpack.c.l.b16 %v1249
    %v1920 = vunpack.c.h.b16 %v1249
    %v1921 = vunpack.c.l.b16 %v1250
    %v1922 = vunpack.c.h.b16 %v1250
    %v1923 = vunpack.c.l.b16 %v1251
    %v1924 = vunpack.c.h.b16 %v1251
    %v1925 = vunpack.c.l.b16 %v1252
    %v1926 = vunpack.c.h.b16 %v1252
    %v1927 = vunpack.c.l.b16 %v1253
    %v1928 = vunpack.c.h.b16 %v1253
    %v1929 = vunpack.c.l.b16 %v1254
    %v1930 = vunpack.c.h.b16 %v1254
    %v1931 = vunpack.c.l.b16 %v1255
    %v1932 = vunpack.c.h.b16 %v1255
    %v1933 = vunpack.c.l.b16 %v1256
    %v1934 = vunpack.c.h.b16 %v1256
    %v1935 = vunpack.c.l.b16 %v1257
    %v1936 = vunpack.c.h.b16 %v1257
    %v1937 = vunpack.c.l.b16 %v1258
    %v1938 = vunpack.c.h.b16 %v1258
    %v1939 = vunpack.c.l.b16 %v1259
    %v1940 = vunpack.c.h.b16 %v1259
    %v1941 = vunpack.c.l.b16 %v1260
    %v1942 = vunpack.c.h.b16 %v1260
    %v1943 = vunpack.c.l.b16 %v1261
    %v1944 = vunpack.c.h.b16 %v1261
    %v1945 = vunpack.c.l.b16 %v1262
    %v1946 = vunpack.c.h.b16 %v1262
    %v1947 = vunpack.c.l.b16 %v1263
    %v1948 = vunpack.c.h.b16 %v1263
    %v1949 = vunpack.c.l.b16 %v1264
    %v1950 = vunpack.c.h.b16 %v1264
    %v1951 = vunpack.c.l.b16 %v1265
    %v1952 = vunpack.c.h.b16 %v1265
    %v1953 = vunpack.c.l.b16 %v1266
    %v1954 = vunpack.c.h.b16 %v1266
    %v1955 = vunpack.c.l.b16 %v1267
    %v1956 = vunpack.c.h.b16 %v1267
    %v1957 = vunpack.c.l.b16 %v1268
    %v1958 = vunpack.c.h.b16 %v1268
    %v1959 = vunpack.c.l.b16 %v1269
    %v1960 = vunpack.c.h.b16 %v1269
    %v1961 = vunpack.c.l.b16 %v1270
    %v1962 = vunpack.c.h.b16 %v1270
    %v1963 = vunpack.c.l.b16 %v1271
    %v1964 = vunpack.c.h.b16 %v1271
    %v1965 = vunpack.c.l.b16 %v1272
    %v1966 = vunpack.c.h.b16 %v1272
    %v1967 = vunpack.c.l.b16 %v1273
    %v1968 = vunpack.c.h.b16 %v1273
    %v1969 = vunpack.c.l.b16 %v1274
    %v1970 = vunpack.c.h.b16 %v1274
    %v1971 = vunpack.c.l.b16 %v1275
    %v1972 = vunpack.c.h.b16 %v1275
    %v1973 = vunpack.c.l.b16 %v1276
    %v1974 = vunpack.c.h.b16 %v1276
    %v1975 = vunpack.c.l.b16 %v1277
    %v1976 = vunpack.c.h.b16 %v1277
    %v1977 = vunpack.c.l.b16 %v1278
    %v1978 = vunpack.c.h.b16 %v1278
    %v1979 = vunpack.c.l.b16 %v1279
    %v1980 = vunpack.c.h.b16 %v1279
    %v1981 = vunpack.c.l.b16 %v1280
    %v1982 = vunpack.c.h.b16 %v1280
    %v1983 = vunpack.c.l.b16 %v1281
    %v1984 = vunpack.c.h.b16 %v1281
    %v1985 = vunpack.c.l.b16 %v1282
    %v1986 = vunpack.c.h.b16 %v1282
    %v1987 = vunpack.c.l.b16 %v1283
    %v1988 = vunpack.c.h.b16 %v1283
    %v1989 = vunpack.c.l.b16 %v1284
    %v1990 = vunpack.c.h.b16 %v1284
    %v1991 = vunpack.c.l.b16 %v1285
    %v1992 = vunpack.c.h.b16 %v1285
    %v1993 = vunpack.c.l.b16 %v1286
    %v1994 = vunpack.c.h.b16 %v1286
    %v1995 = vunpack.c.l.b16 %v1287
    %v1996 = vunpack.c.h.b16 %v1287
    %v1997 = vunpack.c.l.b16 %v1288
    %v1998 = vunpack.c.h.b16 %v1288
    %v1999 = vunpack.c.l.b16 %v1289
    %v2000 = vunpack.c.h.b16 %v1289
    %v2001 = vunpack.c.l.b16 %v1290
    %v2002 = vunpack.c.h.b16 %v1290
    %v2003 = vunpack.c.l.b16 %v1291
    %v2004 = vunpack.c.h.b16 %v1291
    %v2005 = vunpack.c.l.b16 %v1292
    %v2006 = vunpack.c.h.b16 %v1292
    %v2007 = vunpack.c.l.b16 %v1293
    %v2008 = vunpack.c.h.b16 %v1293
    %v2009 = vunpack.c.l.b16 %v1294
    %v2010 = vunpack.c.h.b16 %v1294
    %v2011 = vunpack.c.l.b16 %v1295
    %v2012 = vunpack.c.h.b16 %v1295
    %v2013 = vunpack.c.l.b16 %v1296
    %v2014 = vunpack.c.h.b16 %v1296
    %v2015 = vunpack.c.l.b16 %v1297
    %v2016 = vunpack.c.h.b16 %v1297
    %v2017 = vunpack.c.l.b16 %v1298
    %v2018 = vunpack.c.h.b16 %v1298
    %v2019 = vunpack.c.l.b16 %v1299
    %v2020 = vunpack.c.h.b16 %v1299
    %v2021 = vunpack.c.l.b16 %v1300
    %v2022 = vunpack.c.h.b16 %v1300
    %v2023 = vunpack.c.l.b16 %v1301
    %v2024 = vunpack.c.h.b16 %v1301
    %v2025 = vunpack.c.l.b16 %v1302
    %v2026 = vunpack.c.h.b16 %v1302
    %v2027 = vunpack.c.l.b16 %v1303
    %v2028 = vunpack.c.h.b16 %v1303
    %v2029 = vunpack.c.l.b16 %v1304
    %v2030 = vunpack.c.h.b16 %v1304
    %v2031 = vunpack.c.l.b16 %v1305
    %v2032 = vunpack.c.h.b16 %v1305
    %v2033 = vunpack.c.l.b16 %v1306
    %v2034 = vunpack.c.h.b16 %v1306
    %v2035 = vunpack.c.l.b16 %v1307
    %v2036 = vunpack.c.h.b16 %v1307
    %v2037 = vunpack.c.l.b16 %v1308
    %v2038 = vunpack.c.h.b16 %v1308
    %v2039 = vunpack.c.l.b16 %v1309
    %v2040 = vunpack.c.h.b16 %v1309
    %v2041 = vunpack.c.l.b16 %v1310
    %v2042 = vunpack.c.h.b16 %v1310
    %v2043 = vunpack.c.l.b16 %v1311
    %v2044 = vunpack.c.h.b16 %v1311
    %v2045 = vunpack.c.l.b16 %v1312
    %v2046 = vunpack.c.h.b16 %v1312
    %v2047 = vunpack.c.l.b16 %v1313
    %v2048 = vunpack.c.h.b16 %v1313
    %v2049 = vunpack.c.l.b16 %v1314
    %v2050 = vunpack.c.h.b16 %v1314
    %v2051 = vunpack.c.l.b16 %v1315
    %v2052 = vunpack.c.h.b16 %v1315
    %v2053 = vunpack.c.l.b16 %v1316
    %v2054 = vunpack.c.h.b16 %v1316
    %v2055 = vunpack.c.l.b16 %v1317
    %v2056 = vunpack.c.h.b16 %v1317
    %v2057 = vunpack.c.l.b16 %v1318
    %v2058 = vunpack.c.h.b16 %v1318
    %v2059 = vunpack.c.l.b16 %v1319
    %v2060 = vunpack.c.h.b16 %v1319
    %v2061 = vunpack.c.l.b16 %v1320
    %v2062 = vunpack.c.h.b16 %v1320
    %v2063 = vunpack.c.l.b16 %v1321
    %v2064 = vunpack.c.h.b16 %v1321
    %v2065 = vunpack.c.l.b16 %v1322
    %v2066 = vunpack.c.h.b16 %v1322
    %v2067 = vunpack.c.l.b16 %v1323
    %v2068 = vunpack.c.h.b16 %v1323
    %v2069 = vunpack.c.l.b16 %v1324
    %v2070 = vunpack.c.h.b16 %v1324
    %v2071 = vunpack.c.l.b16 %v1325
    %v2072 = vunpack.c.h.b16 %v1325
    %v2073 = vunpack.c.l.b16 %v1326
    %v2074 = vunpack.c.h.b16 %v1326
    %v2075 = vunpack.c.l.b16 %v1327
    %v2076 = vunpack.c.h.b16 %v1327
    %v2077 = vunpack.c.l.b16 %v1328
    %v2078 = vunpack.c.h.b16 %v1328
    %v2079 = vunpack.c.l.b16 %v1329
    %v2080 = vunpack.c.h.b16 %v1329
    %v2081 = vunpack.c.l.b16 %v1330
    %v2082 = vunpack.c.h.b16 %v1330
    %v2083 = vunpack.c.l.b16 %v1331
    %v2084 = vunpack.c.h.b16 %v1331
    %v2085 = vunpack.c.l.b16 %v1332
    %v2086 = vunpack.c.h.b16 %v1332
    %v2087 = vunpack.c.l.b16 %v1333
    %v2088 = vunpack.c.h.b16 %v1333
    %v2089 = vunpack.c.l.b16 %v1334
    %v2090 = vunpack.c.h.b16 %v1334
    %v2091 = vunpack.c.l.b16 %v1335
    %v2092 = vunpack.c.h.b16 %v1335
    %v2093 = vunpack.c.l.b16 %v1336
    %v2094 = vunpack.c.h.b16 %v1336
    %v2095 = vunpack.c.l.b16 %v1337
    %v2096 = vunpack.c.h.b16 %v1337
    %v2097 = vunpack.c.l.b16 %v1338
    %v2098 = vunpack.c.h.b16 %v1338
    %v2099 = vunpack.c.l.b16 %v1339
    %v2100 = vunpack.c.h.b16 %v1339
    %v2101 = vunpack.c.l.b16 %v1340
    %v2102 = vunpack.c.h.b16 %v1340
    %v2103 = vunpack.c.l.b16 %v1341
    %v2104 = vunpack.c.h.b16 %v1341
    %v2105 = vunpack.c.l.b16 %v1342
    %v2106 = vunpack.c.h.b16 %v1342
    %v2107 = vunpack.c.l.b16 %v1343
    %v2108 = vunpack.c.h.b16 %v1343
    %v2109 = vunpack.c.l.b16 %v1344
    %v2110 = vunpack.c.h.b16 %v1344
    %v2111 = vunpack.c.l.b16 %v1345
    %v2112 = vunpack.c.h.b16 %v1345
    %v2113 = vunpack.c.l.b16 %v1346
    %v2114 = vunpack.c.h.b16 %v1346
    %v2115 = vunpack.c.l.b16 %v1347
    %v2116 = vunpack.c.h.b16 %v1347
    %v2117 = vunpack.c.l.b16 %v1348
    %v2118 = vunpack.c.h.b16 %v1348
    %v2119 = vunpack.c.l.b16 %v1349
    %v2120 = vunpack.c.h.b16 %v1349
    %v2121 = vunpack.c.l.b16 %v1350
    %v2122 = vunpack.c.h.b16 %v1350
    %v2123 = vunpack.c.l.b16 %v1351
    %v2124 = vunpack.c.h.b16 %v1351
    %v2125 = vunpack.c.l.b16 %v1352
    %v2126 = vunpack.c.h.b16 %v1352
    %v2127 = vunpack.c.l.b16 %v1353
    %v2128 = vunpack.c.h.b16 %v1353
    %v2129 = vunpack.c.l.b16 %v1354
    %v2130 = vunpack.c.h.b16 %v1354
    %v2131 = vunpack.c.l.b16 %v1355
    %v2132 = vunpack.c.h.b16 %v1355
    %v2133 = vunpack.c.l.b16 %v1356
    %v2134 = vunpack.c.h.b16 %v1356
    %v2135 = vunpack.c.l.b16 %v1357
    %v2136 = vunpack.c.h.b16 %v1357
    %v2137 = vunpack.c.l.b16 %v1358
    %v2138 = vunpack.c.h.b16 %v1358
    %v2139 = vunpack.c.l.b16 %v1359
    %v2140 = vunpack.c.h.b16 %v1359
    %v2141 = vunpack.c.l.b16 %v1360
    %v2142 = vunpack.c.h.b16 %v1360
    %v2143 = vunpack.c.l.b16 %v1361
    %v2144 = vunpack.c.h.b16 %v1361
    %v2145 = vunpack.c.l.b16 %v1362
    %v2146 = vunpack.c.h.b16 %v1362
    %v2147 = vunpack.c.l.b16 %v1363
    %v2148 = vunpack.c.h.b16 %v1363
    %v2149 = vunpack.c.l.b16 %v1364
    %v2150 = vunpack.c.h.b16 %v1364
    %v2151 = vpack.c.b16 %v1647, %v1639
    %v2152 = vpack.c.b16 %v1648, %v1640
    %v2153 = vpack.c.b16 %v1649, %v1641
    %v2154 = vpack.c.b16 %v1650, %v1642
    %v2155 = vpack.c.b16 %v1651, %v1643
    %v2156 = vpack.c.b16 %v1652, %v1644
    %v2157 = vpack.c.b16 %v1653, %v1645
    %v2158 = vpack.c.b16 %v1654, %v1646
    %v2159 = vpack.c.b16 %v1663, %v1655
    %v2160 = vpack.c.b16 %v1664, %v1656
    %v2161 = vpack.c.b16 %v1665, %v1657
    %v2162 = vpack.c.b16 %v1666, %v1658
    %v2163 = vpack.c.b16 %v1667, %v1659
    %v2164 = vpack.c.b16 %v1668, %v1660
    %v2165 = vpack.c.b16 %v1669, %v1661
    %v2166 = vpack.c.b16 %v1670, %v1662
    %v2167 = vpack.c.b16 %v1679, %v1671
    %v2168 = vpack.c.b16 %v1680, %v1672
    %v2169 = vpack.c.b16 %v1681, %v1673
    %v2170 = vpack.c.b16 %v1682, %v1674
    %v2171 = vpack.c.b16 %v1683, %v1675
    %v2172 = vpack.c.b16 %v1684, %v1676
    %v2173 = vpack.c.b16 %v1685, %v1677
    %v2174 = vpack.c.b16 %v1686, %v1678
    %v2175 = vpack.c.b16 %v1695, %v1687
    %v2176 = vpack.c.b16 %v1696, %v1688
    %v2177 = vpack.c.b16 %v1697, %v1689
    %v2178 = vpack.c.b16 %v1698, %v1690
    %v2179 = vpack.c.b16 %v1699, %v1691
    %v2180 = vpack.c.b16 %v1700, %v1692
    %v2181 = vpack.c.b16 %v1701, %v1693
    %v2182 = vpack.c.b16 %v1702, %v1694
    %v2183 = vpack.c.b16 %v1711, %v1703
    %v2184 = vpack.c.b16 %v1712, %v1704
    %v2185 = vpack.c.b16 %v1713, %v1705
    %v2186 = vpack.c.b16 %v1714, %v1706
    %v2187 = vpack.c.b16 %v1715, %v1707
    %v2188 = vpack.c.b16 %v1716, %v1708
    %v2189 = vpack.c.b16 %v1717, %v1709
    %v2190 = vpack.c.b16 %v1718, %v1710
    %v2191 = vpack.c.b16 %v1727, %v1719
    %v2192 = vpack.c.b16 %v1728, %v1720
    %v2193 = vpack.c.b16 %v1729, %v1721
    %v2194 = vpack.c.b16 %v1730, %v1722
    %v2195 = vpack.c.b16 %v1731, %v1723
    %v2196 = vpack.c.b16 %v1732, %v1724
    %v2197 = vpack.c.b16 %v1733, %v1725
    %v2198 = vpack.c.b16 %v1734, %v1726
    %v2199 = vpack.c.b16 %v1743, %v1735
    %v2200 = vpack.c.b16 %v1744, %v1736
    %v2201 = vpack.c.b16 %v1745, %v1737
    %v2202 = vpack.c.b16 %v1746, %v1738
    %v2203 = vpack.c.b16 %v1747, %v1739
    %v2204 = vpack.c.b16 %v1748, %v1740
    %v2205 = vpack.c.b16 %v1749, %v1741
    %v2206 = vpack.c.b16 %v1750, %v1742
    %v2207 = vpack.c.b16 %v1759, %v1751
    %v2208 = vpack.c.b16 %v1760, %v1752
    %v2209 = vpack.c.b16 %v1761, %v1753
    %v2210 = vpack.c.b16 %v1762, %v1754
    %v2211 = vpack.c.b16 %v1763, %v1755
    %v2212 = vpack.c.b16 %v1764, %v1756
    %v2213 = vpack.c.b16 %v1765, %v1757
    %v2214 = vpack.c.b16 %v1766, %v1758
    %v2215 = vpack.c.b16 %v1775, %v1767
    %v2216 = vpack.c.b16 %v1776, %v1768
    %v2217 = vpack.c.b16 %v1777, %v1769
    %v2218 = vpack.c.b16 %v1778, %v1770
    %v2219 = vpack.c.b16 %v1779, %v1771
    %v2220 = vpack.c.b16 %v1780, %v1772
    %v2221 = vpack.c.b16 %v1781, %v1773
    %v2222 = vpack.c.b16 %v1782, %v1774
    %v2223 = vpack.c.b16 %v1791, %v1783
    %v2224 = vpack.c.b16 %v1792, %v1784
    %v2225 = vpack.c.b16 %v1793, %v1785
    %v2226 = vpack.c.b16 %v1794, %v1786
    %v2227 = vpack.c.b16 %v1795, %v1787
    %v2228 = vpack.c.b16 %v1796, %v1788
    %v2229 = vpack.c.b16 %v1797, %v1789
    %v2230 = vpack.c.b16 %v1798, %v1790
    %v2231 = vpack.c.b16 %v1807, %v1799
    %v2232 = vpack.c.b16 %v1808, %v1800
    %v2233 = vpack.c.b16 %v1809, %v1801
    %v2234 = vpack.c.b16 %v1810, %v1802
    %v2235 = vpack.c.b16 %v1811, %v1803
    %v2236 = vpack.c.b16 %v1812, %v1804
    %v2237 = vpack.c.b16 %v1813, %v1805
    %v2238 = vpack.c.b16 %v1814, %v1806
    %v2239 = vpack.c.b16 %v1823, %v1815
    %v2240 = vpack.c.b16 %v1824, %v1816
    %v2241 = vpack.c.b16 %v1825, %v1817
    %v2242 = vpack.c.b16 %v1826, %v1818
    %v2243 = vpack.c.b16 %v1827, %v1819
    %v2244 = vpack.c.b16 %v1828, %v1820
    %v2245 = vpack.c.b16 %v1829, %v1821
    %v2246 = vpack.c.b16 %v1830, %v1822
    %v2247 = vpack.c.b16 %v1839, %v1831
    %v2248 = vpack.c.b16 %v1840, %v1832
    %v2249 = vpack.c.b16 %v1841, %v1833
    %v2250 = vpack.c.b16 %v1842, %v1834
    %v2251 = vpack.c.b16 %v1843, %v1835
    %v2252 = vpack.c.b16 %v1844, %v1836
    %v2253 = vpack.c.b16 %v1845, %v1837
    %v2254 = vpack.c.b16 %v1846, %v1838
    %v2255 = vpack.c.b16 %v1855, %v1847
    %v2256 = vpack.c.b16 %v1856, %v1848
    %v2257 = vpack.c.b16 %v1857, %v1849
    %v2258 = vpack.c.b16 %v1858, %v1850
    %v2259 = vpack.c.b16 %v1859, %v1851
    %v2260 = vpack.c.b16 %v1860, %v1852
    %v2261 = vpack.c.b16 %v1861, %v1853
    %v2262 = vpack.c.b16 %v1862, %v1854
    %v2263 = vpack.c.b16 %v1871, %v1863
    %v2264 = vpack.c.b16 %v1872, %v1864
    %v2265 = vpack.c.b16 %v1873, %v1865
    %v2266 = vpack.c.b16 %v1874, %v1866
    %v2267 = vpack.c.b16 %v1875, %v1867
    %v2268 = vpack.c.b16 %v1876, %v1868
    %v2269 = vpack.c.b16 %v1877, %v1869
    %v2270 = vpack.c.b16 %v1878, %v1870
    %v2271 = vpack.c.b16 %v1887, %v1879
    %v2272 = vpack.c.b16 %v1888, %v1880
    %v2273 = vpack.c.b16 %v1889, %v1881
    %v2274 = vpack.c.b16 %v1890, %v1882
    %v2275 = vpack.c.b16 %v1891, %v1883
    %v2276 = vpack.c.b16 %v1892, %v1884
    %v2277 = vpack.c.b16 %v1893, %v1885
    %v2278 = vpack.c.b16 %v1894, %v1886
    %v2279 = vpack.c.b16 %v1903, %v1895
    %v2280 = vpack.c.b16 %v1904, %v1896
    %v2281 = vpack.c.b16 %v1905, %v1897
    %v2282 = vpack.c.b16 %v1906, %v1898
    %v2283 = vpack.c.b16 %v1907, %v1899
    %v2284 = vpack.c.b16 %v1908, %v1900
    %v2285 = vpack.c.b16 %v1909, %v1901
    %v2286 = vpack.c.b16 %v1910, %v1902
    %v2287 = vpack.c.b16 %v1919, %v1911
    %v2288 = vpack.c.b16 %v1920, %v1912
    %v2289 = vpack.c.b16 %v1921, %v1913
    %v2290 = vpack.c.b16 %v1922, %v1914
    %v2291 = vpack.c.b16 %v1923, %v1915
    %v2292 = vpack.c.b16 %v1924, %v1916
    %v2293 = vpack.c.b16 %v1925, %v1917
    %v2294 = vpack.c.b16 %v1926, %v1918
    %v2295 = vpack.c.b16 %v1935, %v1927
    %v2296 = vpack.c.b16 %v1936, %v1928
    %v2297 = vpack.c.b16 %v1937, %v1929
    %v2298 = vpack.c.b16 %v1938, %v1930
    %v2299 = vpack.c.b16 %v1939, %v1931
    %v2300 = vpack.c.b16 %v1940, %v1932
    %v2301 = vpack.c.b16 %v1941, %v1933
    %v2302 = vpack.c.b16 %v1942, %v1934
    %v2303 = vpack.c.b16 %v1951, %v1943
    %v2304 = vpack.c.b16 %v1952, %v1944
    %v2305 = vpack.c.b16 %v1953, %v1945
    %v2306 = vpack.c.b16 %v1954, %v1946
    %v2307 = vpack.c.b16 %v1955, %v1947
    %v2308 = vpack.c.b16 %v1956, %v1948
    %v2309 = vpack.c.b16 %v1957, %v1949
    %v2310 = vpack.c.b16 %v1958, %v1950
    %v2311 = vpack.c.b16 %v1967, %v1959
    %v2312 = vpack.c.b16 %v1968, %v1960
    %v2313 = vpack.c.b16 %v1969, %v1961
    %v2314 = vpack.c.b16 %v1970, %v1962
    %v2315 = vpack.c.b16 %v1971, %v1963
    %v2316 = vpack.c.b16 %v1972, %v1964
    %v2317 = vpack.c.b16 %v1973, %v1965
    %v2318 = vpack.c.b16 %v1974, %v1966
    %v2319 = vpack.c.b16 %v1983, %v1975
    %v2320 = vpack.c.b16 %v1984, %v1976
    %v2321 = vpack.c.b16 %v1985, %v1977
    %v2322 = vpack.c.b16 %v1986, %v1978
    %v2323 = vpack.c.b16 %v1987, %v1979
    %v2324 = vpack.c.b16 %v1988, %v1980
    %v2325 = vpack.c.b16 %v1989, %v1981
    %v2326 = vpack.c.b16 %v1990, %v1982
    %v2327 = vpack.c.b16 %v1999, %v1991
    %v2328 = vpack.c.b16 %v2000, %v1992
    %v2329 = vpack.c.b16 %v2001, %v1993
    %v2330 = vpack.c.b16 %v2002, %v1994
    %v2331 = vpack.c.b16 %v2003, %v1995
    %v2332 = vpack.c.b16 %v2004, %v1996
    %v2333 = vpack.c.b16 %v2005, %v1997
    %v2334 = vpack.c.b16 %v2006, %v1998
    %v2335 = vpack.c.b16 %v2015, %v2007
    %v2336 = vpack.c.b16 %v2016, %v2008
    %v2337 = vpack.c.b16 %v2017, %v2009
    %v2338 = vpack.c.b16 %v2018, %v2010
    %v2339 = vpack.c.b16 %v2019, %v2011
    %v2340 = vpack.c.b16 %v2020, %v2012
    %v2341 = vpack.c.b16 %v2021, %v2013
    %v2342 = vpack.c.b16 %v2022, %v2014
    %v2343 = vpack.c.b16 %v2031, %v2023
    %v2344 = vpack.c.b16 %v2032, %v2024
    %v2345 = vpack.c.b16 %v2033, %v2025
    %v2346 = vpack.c.b16 %v2034, %v2026
    %v2347 = vpack.c.b16 %v2035, %v2027
    %v2348 = vpack.c.b16 %v2036, %v2028
    %v2349 = vpack.c.b16 %v2037, %v2029
    %v2350 = vpack.c.b16 %v2038, %v2030
    %v2351 = vpack.c.b16 %v2047, %v2039
    %v2352 = vpack.c.b16 %v2048, %v2040
    %v2353 = vpack.c.b16 %v2049, %v2041
    %v2354 = vpack.c.b16 %v2050, %v2042
    %v2355 = vpack.c.b16 %v2051, %v2043
    %v2356 = vpack.c.b16 %v2052, %v2044
    %v2357 = vpack.c.b16 %v2053, %v2045
    %v2358 = vpack.c.b16 %v2054, %v2046
    %v2359 = vpack.c.b16 %v2063, %v2055
    %v2360 = vpack.c.b16 %v2064, %v2056
    %v2361 = vpack.c.b16 %v2065, %v2057
    %v2362 = vpack.c.b16 %v2066, %v2058
    %v2363 = vpack.c.b16 %v2067, %v2059
    %v2364 = vpack.c.b16 %v2068, %v2060
    %v2365 = vpack.c.b16 %v2069, %v2061
    %v2366 = vpack.c.b16 %v2070, %v2062
    %v2367 = vpack.c.b16 %v2079, %v2071
    %v2368 = vpack.c.b16 %v2080, %v2072
    %v2369 = vpack.c.b16 %v2081, %v2073
    %v2370 = vpack.c.b16 %v2082, %v2074
    %v2371 = vpack.c.b16 %v2083, %v2075
    %v2372 = vpack.c.b16 %v2084, %v2076
    %v2373 = vpack.c.b16 %v2085, %v2077
    %v2374 = vpack.c.b16 %v2086, %v2078
    %v2375 = vpack.c.b16 %v2095, %v2087
    %v2376 = vpack.c.b16 %v2096, %v2088
    %v2377 = vpack.c.b16 %v2097, %v2089
    %v2378 = vpack.c.b16 %v2098, %v2090
    %v2379 = vpack.c.b16 %v2099, %v2091
    %v2380 = vpack.c.b16 %v2100, %v2092
    %v2381 = vpack.c.b16 %v2101, %v2093
    %v2382 = vpack.c.b16 %v2102, %v2094
    %v2383 = vpack.c.b16 %v2111, %v2103
    %v2384 = vpack.c.b16 %v2112, %v2104
    %v2385 = vpack.c.b16 %v2113, %v2105
    %v2386 = vpack.c.b16 %v2114, %v2106
    %v2387 = vpack.c.b16 %v2115, %v2107
    %v2388 = vpack.c.b16 %v2116, %v2108
    %v2389 = vpack.c.b16 %v2117, %v2109
    %v2390 = vpack.c.b16 %v2118, %v2110
    %v2391 = vpack.c.b16 %v2127, %v2119
    %v2392 = vpack.c.b16 %v2128, %v2120
    %v2393 = vpack.c.b16 %v2129, %v2121
    %v2394 = vpack.c.b16 %v2130, %v2122
    %v2395 = vpack.c.b16 %v2131, %v2123
    %v2396 = vpack.c.b16 %v2132, %v2124
    %v2397 = vpack.c.b16 %v2133, %v2125
    %v2398 = vpack.c.b16 %v2134, %v2126
    %v2399 = vpack.c.b16 %v2143, %v2135
    %v2400 = vpack.c.b16 %v2144, %v2136
    %v2401 = vpack.c.b16 %v2145, %v2137
    %v2402 = vpack.c.b16 %v2146, %v2138
    %v2403 = vpack.c.b16 %v2147, %v2139
    %v2404 = vpack.c.b16 %v2148, %v2140
    %v2405 = vpack.c.b16 %v2149, %v2141
    %v2406 = vpack.c.b16 %v2150, %v2142
    %2663 = vmatpush.bf16.msra.mxu0 %v2207
    %2664 = vmatpush.bf16.msra.mxu0 %v2199
    %2665 = vmatpush.bf16.msra.mxu0 %v2191
    %2666 = vmatpush.bf16.msra.mxu0 %v2183
    %2667 = vmatpush.bf16.msra.mxu0 %v2175
    %2668 = vmatpush.bf16.msra.mxu0 %v2167
    %2669 = vmatpush.bf16.msra.mxu0 %v2159
    %2670 = vmatpush.bf16.msra.mxu0 %v2151
    %2671 = vmatmul.bf16.gmra.mxu0 %v1105
    %v2672 = vpop.f32.mrf.mxu0
    %v2673 = vadd.f32 %v1367, %v2672
    %v2674 = vpop.f32.mrf.mxu0
    %2675 = vdwg.mxu0
    %2676 = vmatpush.bf16.msra.mxu0 %v2271
    %2677 = vmatpush.bf16.msra.mxu0 %v2263
    %2678 = vmatpush.bf16.msra.mxu0 %v2255
    %2679 = vmatpush.bf16.msra.mxu0 %v2247
    %2680 = vmatpush.bf16.msra.mxu0 %v2239
    %2681 = vmatpush.bf16.msra.mxu0 %v2231
    %2682 = vmatpush.bf16.msra.mxu0 %v2223
    %2683 = vmatpush.bf16.msra.mxu0 %v2215
    %2684 = vmatmul.bf16.gmra.mxu0 %v1106
    %v2685 = vpop.f32.mrf.mxu0
    %v2686 = vadd.f32 %v2673, %v2685
    %v2687 = vpop.f32.mrf.mxu0
    %2688 = vdwg.mxu0
    %2689 = vmatpush.bf16.msra.mxu0 %v2335
    %2690 = vmatpush.bf16.msra.mxu0 %v2327
    %2691 = vmatpush.bf16.msra.mxu0 %v2319
    %2692 = vmatpush.bf16.msra.mxu0 %v2311
    %2693 = vmatpush.bf16.msra.mxu0 %v2303
    %2694 = vmatpush.bf16.msra.mxu0 %v2295
    %2695 = vmatpush.bf16.msra.mxu0 %v2287
    %2696 = vmatpush.bf16.msra.mxu0 %v2279
    %2697 = vmatmul.bf16.gmra.mxu0 %v1107
    %v2698 = vpop.f32.mrf.mxu0
    %v2699 = vadd.f32 %v2686, %v2698
    %v2700 = vpop.f32.mrf.mxu0
    %2701 = vdwg.mxu0
    %2702 = vmatpush.bf16.msra.mxu0 %v2399
    %2703 = vmatpush.bf16.msra.mxu0 %v2391
    %2704 = vmatpush.bf16.msra.mxu0 %v2383
    %2705 = vmatpush.bf16.msra.mxu0 %v2375
    %2706 = vmatpush.bf16.msra.mxu0 %v2367
    %2707 = vmatpush.bf16.msra.mxu0 %v2359
    %2708 = vmatpush.bf16.msra.mxu0 %v2351
    %2709 = vmatpush.bf16.msra.mxu0 %v2343
    %2710 = vmatmul.bf16.gmra.mxu0 %v1108
    %v2711 = vpop.f32.mrf.mxu0
    %v2712 = vadd.f32 %v2699, %v2711
    %v2713 = vpop.f32.mrf.mxu0
    %2714 = vdwg.mxu0
    %2715 = vmatpush.bf16.msra.mxu0 %v2208
    %2716 = vmatpush.bf16.msra.mxu0 %v2200
    %2717 = vmatpush.bf16.msra.mxu0 %v2192
    %2718 = vmatpush.bf16.msra.mxu0 %v2184
    %2719 = vmatpush.bf16.msra.mxu0 %v2176
    %2720 = vmatpush.bf16.msra.mxu0 %v2168
    %2721 = vmatpush.bf16.msra.mxu0 %v2160
    %2722 = vmatpush.bf16.msra.mxu0 %v2152
    %2723 = vmatmul.bf16.gmra.mxu0 %v1105
    %v2724 = vpop.f32.mrf.mxu0
    %v2725 = vadd.f32 %v1368, %v2724
    %v2726 = vpop.f32.mrf.mxu0
    %2727 = vdwg.mxu0
    %2728 = vmatpush.bf16.msra.mxu0 %v2272
    %2729 = vmatpush.bf16.msra.mxu0 %v2264
    %2730 = vmatpush.bf16.msra.mxu0 %v2256
    %2731 = vmatpush.bf16.msra.mxu0 %v2248
    %2732 = vmatpush.bf16.msra.mxu0 %v2240
    %2733 = vmatpush.bf16.msra.mxu0 %v2232
    %2734 = vmatpush.bf16.msra.mxu0 %v2224
    %2735 = vmatpush.bf16.msra.mxu0 %v2216
    %2736 = vmatmul.bf16.gmra.mxu0 %v1106
    %v2737 = vpop.f32.mrf.mxu0
    %v2738 = vadd.f32 %v2725, %v2737
    %v2739 = vpop.f32.mrf.mxu0
    %2740 = vdwg.mxu0
    %2741 = vmatpush.bf16.msra.mxu0 %v2336
    %2742 = vmatpush.bf16.msra.mxu0 %v2328
    %2743 = vmatpush.bf16.msra.mxu0 %v2320
    %2744 = vmatpush.bf16.msra.mxu0 %v2312
    %2745 = vmatpush.bf16.msra.mxu0 %v2304
    %2746 = vmatpush.bf16.msra.mxu0 %v2296
    %2747 = vmatpush.bf16.msra.mxu0 %v2288
    %2748 = vmatpush.bf16.msra.mxu0 %v2280
    %2749 = vmatmul.bf16.gmra.mxu0 %v1107
    %v2750 = vpop.f32.mrf.mxu0
    %v2751 = vadd.f32 %v2738, %v2750
    %v2752 = vpop.f32.mrf.mxu0
    %2753 = vdwg.mxu0
    %2754 = vmatpush.bf16.msra.mxu0 %v2400
    %2755 = vmatpush.bf16.msra.mxu0 %v2392
    %2756 = vmatpush.bf16.msra.mxu0 %v2384
    %2757 = vmatpush.bf16.msra.mxu0 %v2376
    %2758 = vmatpush.bf16.msra.mxu0 %v2368
    %2759 = vmatpush.bf16.msra.mxu0 %v2360
    %2760 = vmatpush.bf16.msra.mxu0 %v2352
    %2761 = vmatpush.bf16.msra.mxu0 %v2344
    %2762 = vmatmul.bf16.gmra.mxu0 %v1108
    %v2763 = vpop.f32.mrf.mxu0
    %v2764 = vadd.f32 %v2751, %v2763
    %v2765 = vpop.f32.mrf.mxu0
    %2766 = vdwg.mxu0
    %2767 = vmatpush.bf16.msra.mxu0 %v2209
    %2768 = vmatpush.bf16.msra.mxu0 %v2201
    %2769 = vmatpush.bf16.msra.mxu0 %v2193
    %2770 = vmatpush.bf16.msra.mxu0 %v2185
    %2771 = vmatpush.bf16.msra.mxu0 %v2177
    %2772 = vmatpush.bf16.msra.mxu0 %v2169
    %2773 = vmatpush.bf16.msra.mxu0 %v2161
    %2774 = vmatpush.bf16.msra.mxu0 %v2153
    %2775 = vmatmul.bf16.gmra.mxu0 %v1105
    %v2776 = vpop.f32.mrf.mxu0
    %v2777 = vadd.f32 %v1369, %v2776
    %v2778 = vpop.f32.mrf.mxu0
    %2779 = vdwg.mxu0
    %2780 = vmatpush.bf16.msra.mxu0 %v2273
    %2781 = vmatpush.bf16.msra.mxu0 %v2265
    %2782 = vmatpush.bf16.msra.mxu0 %v2257
    %2783 = vmatpush.bf16.msra.mxu0 %v2249
    %2784 = vmatpush.bf16.msra.mxu0 %v2241
    %2785 = vmatpush.bf16.msra.mxu0 %v2233
    %2786 = vmatpush.bf16.msra.mxu0 %v2225
    %2787 = vmatpush.bf16.msra.mxu0 %v2217
    %2788 = vmatmul.bf16.gmra.mxu0 %v1106
    %v2789 = vpop.f32.mrf.mxu0
    %v2790 = vadd.f32 %v2777, %v2789
    %v2791 = vpop.f32.mrf.mxu0
    %2792 = vdwg.mxu0
    %2793 = vmatpush.bf16.msra.mxu0 %v2337
    %2794 = vmatpush.bf16.msra.mxu0 %v2329
    %2795 = vmatpush.bf16.msra.mxu0 %v2321
    %2796 = vmatpush.bf16.msra.mxu0 %v2313
    %2797 = vmatpush.bf16.msra.mxu0 %v2305
    %2798 = vmatpush.bf16.msra.mxu0 %v2297
    %2799 = vmatpush.bf16.msra.mxu0 %v2289
    %2800 = vmatpush.bf16.msra.mxu0 %v2281
    %2801 = vmatmul.bf16.gmra.mxu0 %v1107
    %v2802 = vpop.f32.mrf.mxu0
    %v2803 = vadd.f32 %v2790, %v2802
    %v2804 = vpop.f32.mrf.mxu0
    %2805 = vdwg.mxu0
    %2806 = vmatpush.bf16.msra.mxu0 %v2401
    %2807 = vmatpush.bf16.msra.mxu0 %v2393
    %2808 = vmatpush.bf16.msra.mxu0 %v2385
    %2809 = vmatpush.bf16.msra.mxu0 %v2377
    %2810 = vmatpush.bf16.msra.mxu0 %v2369
    %2811 = vmatpush.bf16.msra.mxu0 %v2361
    %2812 = vmatpush.bf16.msra.mxu0 %v2353
    %2813 = vmatpush.bf16.msra.mxu0 %v2345
    %2814 = vmatmul.bf16.gmra.mxu0 %v1108
    %v2815 = vpop.f32.mrf.mxu0
    %v2816 = vadd.f32 %v2803, %v2815
    %v2817 = vpop.f32.mrf.mxu0
    %2818 = vdwg.mxu0
    %2819 = vmatpush.bf16.msra.mxu0 %v2210
    %2820 = vmatpush.bf16.msra.mxu0 %v2202
    %2821 = vmatpush.bf16.msra.mxu0 %v2194
    %2822 = vmatpush.bf16.msra.mxu0 %v2186
    %2823 = vmatpush.bf16.msra.mxu0 %v2178
    %2824 = vmatpush.bf16.msra.mxu0 %v2170
    %2825 = vmatpush.bf16.msra.mxu0 %v2162
    %2826 = vmatpush.bf16.msra.mxu0 %v2154
    %2827 = vmatmul.bf16.gmra.mxu0 %v1105
    %v2828 = vpop.f32.mrf.mxu0
    %v2829 = vadd.f32 %v1370, %v2828
    %v2830 = vpop.f32.mrf.mxu0
    %2831 = vdwg.mxu0
    %2832 = vmatpush.bf16.msra.mxu0 %v2274
    %2833 = vmatpush.bf16.msra.mxu0 %v2266
    %2834 = vmatpush.bf16.msra.mxu0 %v2258
    %2835 = vmatpush.bf16.msra.mxu0 %v2250
    %2836 = vmatpush.bf16.msra.mxu0 %v2242
    %2837 = vmatpush.bf16.msra.mxu0 %v2234
    %2838 = vmatpush.bf16.msra.mxu0 %v2226
    %2839 = vmatpush.bf16.msra.mxu0 %v2218
    %2840 = vmatmul.bf16.gmra.mxu0 %v1106
    %v2841 = vpop.f32.mrf.mxu0
    %v2842 = vadd.f32 %v2829, %v2841
    %v2843 = vpop.f32.mrf.mxu0
    %2844 = vdwg.mxu0
    %2845 = vmatpush.bf16.msra.mxu0 %v2338
    %2846 = vmatpush.bf16.msra.mxu0 %v2330
    %2847 = vmatpush.bf16.msra.mxu0 %v2322
    %2848 = vmatpush.bf16.msra.mxu0 %v2314
    %2849 = vmatpush.bf16.msra.mxu0 %v2306
    %2850 = vmatpush.bf16.msra.mxu0 %v2298
    %2851 = vmatpush.bf16.msra.mxu0 %v2290
    %2852 = vmatpush.bf16.msra.mxu0 %v2282
    %2853 = vmatmul.bf16.gmra.mxu0 %v1107
    %v2854 = vpop.f32.mrf.mxu0
    %v2855 = vadd.f32 %v2842, %v2854
    %v2856 = vpop.f32.mrf.mxu0
    %2857 = vdwg.mxu0
    %2858 = vmatpush.bf16.msra.mxu0 %v2402
    %2859 = vmatpush.bf16.msra.mxu0 %v2394
    %2860 = vmatpush.bf16.msra.mxu0 %v2386
    %2861 = vmatpush.bf16.msra.mxu0 %v2378
    %2862 = vmatpush.bf16.msra.mxu0 %v2370
    %2863 = vmatpush.bf16.msra.mxu0 %v2362
    %2864 = vmatpush.bf16.msra.mxu0 %v2354
    %2865 = vmatpush.bf16.msra.mxu0 %v2346
    %2866 = vmatmul.bf16.gmra.mxu0 %v1108
    %v2867 = vpop.f32.mrf.mxu0
    %v2868 = vadd.f32 %v2855, %v2867
    %v2869 = vpop.f32.mrf.mxu0
    %2870 = vdwg.mxu0
    %2871 = vmatpush.bf16.msra.mxu0 %v2211
    %2872 = vmatpush.bf16.msra.mxu0 %v2203
    %2873 = vmatpush.bf16.msra.mxu0 %v2195
    %2874 = vmatpush.bf16.msra.mxu0 %v2187
    %2875 = vmatpush.bf16.msra.mxu0 %v2179
    %2876 = vmatpush.bf16.msra.mxu0 %v2171
    %2877 = vmatpush.bf16.msra.mxu0 %v2163
    %2878 = vmatpush.bf16.msra.mxu0 %v2155
    %2879 = vmatmul.bf16.gmra.mxu0 %v1105
    %v2880 = vpop.f32.mrf.mxu0
    %v2881 = vadd.f32 %v1371, %v2880
    %v2882 = vpop.f32.mrf.mxu0
    %2883 = vdwg.mxu0
    %2884 = vmatpush.bf16.msra.mxu0 %v2275
    %2885 = vmatpush.bf16.msra.mxu0 %v2267
    %2886 = vmatpush.bf16.msra.mxu0 %v2259
    %2887 = vmatpush.bf16.msra.mxu0 %v2251
    %2888 = vmatpush.bf16.msra.mxu0 %v2243
    %2889 = vmatpush.bf16.msra.mxu0 %v2235
    %2890 = vmatpush.bf16.msra.mxu0 %v2227
    %2891 = vmatpush.bf16.msra.mxu0 %v2219
    %2892 = vmatmul.bf16.gmra.mxu0 %v1106
    %v2893 = vpop.f32.mrf.mxu0
    %v2894 = vadd.f32 %v2881, %v2893
    %v2895 = vpop.f32.mrf.mxu0
    %2896 = vdwg.mxu0
    %2897 = vmatpush.bf16.msra.mxu0 %v2339
    %2898 = vmatpush.bf16.msra.mxu0 %v2331
    %2899 = vmatpush.bf16.msra.mxu0 %v2323
    %2900 = vmatpush.bf16.msra.mxu0 %v2315
    %2901 = vmatpush.bf16.msra.mxu0 %v2307
    %2902 = vmatpush.bf16.msra.mxu0 %v2299
    %2903 = vmatpush.bf16.msra.mxu0 %v2291
    %2904 = vmatpush.bf16.msra.mxu0 %v2283
    %2905 = vmatmul.bf16.gmra.mxu0 %v1107
    %v2906 = vpop.f32.mrf.mxu0
    %v2907 = vadd.f32 %v2894, %v2906
    %v2908 = vpop.f32.mrf.mxu0
    %2909 = vdwg.mxu0
    %2910 = vmatpush.bf16.msra.mxu0 %v2403
    %2911 = vmatpush.bf16.msra.mxu0 %v2395
    %2912 = vmatpush.bf16.msra.mxu0 %v2387
    %2913 = vmatpush.bf16.msra.mxu0 %v2379
    %2914 = vmatpush.bf16.msra.mxu0 %v2371
    %2915 = vmatpush.bf16.msra.mxu0 %v2363
    %2916 = vmatpush.bf16.msra.mxu0 %v2355
    %2917 = vmatpush.bf16.msra.mxu0 %v2347
    %2918 = vmatmul.bf16.gmra.mxu0 %v1108
    %v2919 = vpop.f32.mrf.mxu0
    %v2920 = vadd.f32 %v2907, %v2919
    %v2921 = vpop.f32.mrf.mxu0
    %2922 = vdwg.mxu0
    %2923 = vmatpush.bf16.msra.mxu0 %v2212
    %2924 = vmatpush.bf16.msra.mxu0 %v2204
    %2925 = vmatpush.bf16.msra.mxu0 %v2196
    %2926 = vmatpush.bf16.msra.mxu0 %v2188
    %2927 = vmatpush.bf16.msra.mxu0 %v2180
    %2928 = vmatpush.bf16.msra.mxu0 %v2172
    %2929 = vmatpush.bf16.msra.mxu0 %v2164
    %2930 = vmatpush.bf16.msra.mxu0 %v2156
    %2931 = vmatmul.bf16.gmra.mxu0 %v1105
    %v2932 = vpop.f32.mrf.mxu0
    %v2933 = vadd.f32 %v1372, %v2932
    %v2934 = vpop.f32.mrf.mxu0
    %2935 = vdwg.mxu0
    %2936 = vmatpush.bf16.msra.mxu0 %v2276
    %2937 = vmatpush.bf16.msra.mxu0 %v2268
    %2938 = vmatpush.bf16.msra.mxu0 %v2260
    %2939 = vmatpush.bf16.msra.mxu0 %v2252
    %2940 = vmatpush.bf16.msra.mxu0 %v2244
    %2941 = vmatpush.bf16.msra.mxu0 %v2236
    %2942 = vmatpush.bf16.msra.mxu0 %v2228
    %2943 = vmatpush.bf16.msra.mxu0 %v2220
    %2944 = vmatmul.bf16.gmra.mxu0 %v1106
    %v2945 = vpop.f32.mrf.mxu0
    %v2946 = vadd.f32 %v2933, %v2945
    %v2947 = vpop.f32.mrf.mxu0
    %2948 = vdwg.mxu0
    %2949 = vmatpush.bf16.msra.mxu0 %v2340
    %2950 = vmatpush.bf16.msra.mxu0 %v2332
    %2951 = vmatpush.bf16.msra.mxu0 %v2324
    %2952 = vmatpush.bf16.msra.mxu0 %v2316
    %2953 = vmatpush.bf16.msra.mxu0 %v2308
    %2954 = vmatpush.bf16.msra.mxu0 %v2300
    %2955 = vmatpush.bf16.msra.mxu0 %v2292
    %2956 = vmatpush.bf16.msra.mxu0 %v2284
    %2957 = vmatmul.bf16.gmra.mxu0 %v1107
    %v2958 = vpop.f32.mrf.mxu0
    %v2959 = vadd.f32 %v2946, %v2958
    %v2960 = vpop.f32.mrf.mxu0
    %2961 = vdwg.mxu0
    %2962 = vmatpush.bf16.msra.mxu0 %v2404
    %2963 = vmatpush.bf16.msra.mxu0 %v2396
    %2964 = vmatpush.bf16.msra.mxu0 %v2388
    %2965 = vmatpush.bf16.msra.mxu0 %v2380
    %2966 = vmatpush.bf16.msra.mxu0 %v2372
    %2967 = vmatpush.bf16.msra.mxu0 %v2364
    %2968 = vmatpush.bf16.msra.mxu0 %v2356
    %2969 = vmatpush.bf16.msra.mxu0 %v2348
    %2970 = vmatmul.bf16.gmra.mxu0 %v1108
    %v2971 = vpop.f32.mrf.mxu0
    %v2972 = vadd.f32 %v2959, %v2971
    %v2973 = vpop.f32.mrf.mxu0
    %2974 = vdwg.mxu0
    %2975 = vmatpush.bf16.msra.mxu0 %v2213
    %2976 = vmatpush.bf16.msra.mxu0 %v2205
    %2977 = vmatpush.bf16.msra.mxu0 %v2197
    %2978 = vmatpush.bf16.msra.mxu0 %v2189
    %2979 = vmatpush.bf16.msra.mxu0 %v2181
    %2980 = vmatpush.bf16.msra.mxu0 %v2173
    %2981 = vmatpush.bf16.msra.mxu0 %v2165
    %2982 = vmatpush.bf16.msra.mxu0 %v2157
    %2983 = vmatmul.bf16.gmra.mxu0 %v1105
    %v2984 = vpop.f32.mrf.mxu0
    %v2985 = vadd.f32 %v1373, %v2984
    %v2986 = vpop.f32.mrf.mxu0
    %2987 = vdwg.mxu0
    %2988 = vmatpush.bf16.msra.mxu0 %v2277
    %2989 = vmatpush.bf16.msra.mxu0 %v2269
    %2990 = vmatpush.bf16.msra.mxu0 %v2261
    %2991 = vmatpush.bf16.msra.mxu0 %v2253
    %2992 = vmatpush.bf16.msra.mxu0 %v2245
    %2993 = vmatpush.bf16.msra.mxu0 %v2237
    %2994 = vmatpush.bf16.msra.mxu0 %v2229
    %2995 = vmatpush.bf16.msra.mxu0 %v2221
    %2996 = vmatmul.bf16.gmra.mxu0 %v1106
    %v2997 = vpop.f32.mrf.mxu0
    %v2998 = vadd.f32 %v2985, %v2997
    %v2999 = vpop.f32.mrf.mxu0
    %3000 = vdwg.mxu0
    %3001 = vmatpush.bf16.msra.mxu0 %v2341
    %3002 = vmatpush.bf16.msra.mxu0 %v2333
    %3003 = vmatpush.bf16.msra.mxu0 %v2325
    %3004 = vmatpush.bf16.msra.mxu0 %v2317
    %3005 = vmatpush.bf16.msra.mxu0 %v2309
    %3006 = vmatpush.bf16.msra.mxu0 %v2301
    %3007 = vmatpush.bf16.msra.mxu0 %v2293
    %3008 = vmatpush.bf16.msra.mxu0 %v2285
    %3009 = vmatmul.bf16.gmra.mxu0 %v1107
    %v3010 = vpop.f32.mrf.mxu0
    %v3011 = vadd.f32 %v2998, %v3010
    %v3012 = vpop.f32.mrf.mxu0
    %3013 = vdwg.mxu0
    %3014 = vmatpush.bf16.msra.mxu0 %v2405
    %3015 = vmatpush.bf16.msra.mxu0 %v2397
    %3016 = vmatpush.bf16.msra.mxu0 %v2389
    %3017 = vmatpush.bf16.msra.mxu0 %v2381
    %3018 = vmatpush.bf16.msra.mxu0 %v2373
    %3019 = vmatpush.bf16.msra.mxu0 %v2365
    %3020 = vmatpush.bf16.msra.mxu0 %v2357
    %3021 = vmatpush.bf16.msra.mxu0 %v2349
    %3022 = vmatmul.bf16.gmra.mxu0 %v1108
    %v3023 = vpop.f32.mrf.mxu0
    %v3024 = vadd.f32 %v3011, %v3023
    %v3025 = vpop.f32.mrf.mxu0
    %3026 = vdwg.mxu0
    %3027 = vmatpush.bf16.msra.mxu0 %v2214
    %3028 = vmatpush.bf16.msra.mxu0 %v2206
    %3029 = vmatpush.bf16.msra.mxu0 %v2198
    %3030 = vmatpush.bf16.msra.mxu0 %v2190
    %3031 = vmatpush.bf16.msra.mxu0 %v2182
    %3032 = vmatpush.bf16.msra.mxu0 %v2174
    %3033 = vmatpush.bf16.msra.mxu0 %v2166
    %3034 = vmatpush.bf16.msra.mxu0 %v2158
    %3035 = vmatmul.bf16.gmra.mxu0 %v1105
    %v3036 = vpop.f32.mrf.mxu0
    %v3037 = vadd.f32 %v1374, %v3036
    %v3038 = vpop.f32.mrf.mxu0
    %3039 = vdwg.mxu0
    %3040 = vmatpush.bf16.msra.mxu0 %v2278
    %3041 = vmatpush.bf16.msra.mxu0 %v2270
    %3042 = vmatpush.bf16.msra.mxu0 %v2262
    %3043 = vmatpush.bf16.msra.mxu0 %v2254
    %3044 = vmatpush.bf16.msra.mxu0 %v2246
    %3045 = vmatpush.bf16.msra.mxu0 %v2238
    %3046 = vmatpush.bf16.msra.mxu0 %v2230
    %3047 = vmatpush.bf16.msra.mxu0 %v2222
    %3048 = vmatmul.bf16.gmra.mxu0 %v1106
    %v3049 = vpop.f32.mrf.mxu0
    %v3050 = vadd.f32 %v3037, %v3049
    %v3051 = vpop.f32.mrf.mxu0
    %3052 = vdwg.mxu0
    %3053 = vmatpush.bf16.msra.mxu0 %v2342
    %3054 = vmatpush.bf16.msra.mxu0 %v2334
    %3055 = vmatpush.bf16.msra.mxu0 %v2326
    %3056 = vmatpush.bf16.msra.mxu0 %v2318
    %3057 = vmatpush.bf16.msra.mxu0 %v2310
    %3058 = vmatpush.bf16.msra.mxu0 %v2302
    %3059 = vmatpush.bf16.msra.mxu0 %v2294
    %3060 = vmatpush.bf16.msra.mxu0 %v2286
    %3061 = vmatmul.bf16.gmra.mxu0 %v1107
    %v3062 = vpop.f32.mrf.mxu0
    %v3063 = vadd.f32 %v3050, %v3062
    %v3064 = vpop.f32.mrf.mxu0
    %3065 = vdwg.mxu0
    %3066 = vmatpush.bf16.msra.mxu0 %v2406
    %3067 = vmatpush.bf16.msra.mxu0 %v2398
    %3068 = vmatpush.bf16.msra.mxu0 %v2390
    %3069 = vmatpush.bf16.msra.mxu0 %v2382
    %3070 = vmatpush.bf16.msra.mxu0 %v2374
    %3071 = vmatpush.bf16.msra.mxu0 %v2366
    %3072 = vmatpush.bf16.msra.mxu0 %v2358
    %3073 = vmatpush.bf16.msra.mxu0 %v2350
    %3074 = vmatmul.bf16.gmra.mxu0 %v1108
    %v3075 = vpop.f32.mrf.mxu0
    %v3076 = vadd.f32 %v3063, %v3075
    %v3077 = vpop.f32.mrf.mxu0
    %3078 = vdwg.mxu0
    %v3079 = vsel %vm399, %v2712, 0.0
    %v3080 = vrot.slane %v3079, 4
    %v3081 = vadd.f32 %v3079, %v3080
    %v3082 = vrot.slane %v3081, 2
    %v3083 = vadd.f32 %v3081, %v3082
    %v3084 = vrot.slane %v3083, 1
    %v3085 = vadd.f32 %v3083, %v3084
    %v3086 = vsel %vm399, %v2764, 0.0
    %v3087 = vrot.slane %v3086, 4
    %v3088 = vadd.f32 %v3086, %v3087
    %v3089 = vrot.slane %v3088, 2
    %v3090 = vadd.f32 %v3088, %v3089
    %v3091 = vrot.slane %v3090, 1
    %v3092 = vadd.f32 %v3090, %v3091
    %v3093 = vsel %vm399, %v2816, 0.0
    %v3094 = vrot.slane %v3093, 4
    %v3095 = vadd.f32 %v3093, %v3094
    %v3096 = vrot.slane %v3095, 2
    %v3097 = vadd.f32 %v3095, %v3096
    %v3098 = vrot.slane %v3097, 1
    %v3099 = vadd.f32 %v3097, %v3098
    %v3100 = vsel %vm399, %v2868, 0.0
    %v3101 = vrot.slane %v3100, 4
    %v3102 = vadd.f32 %v3100, %v3101
    %v3103 = vrot.slane %v3102, 2
    %v3104 = vadd.f32 %v3102, %v3103
    %v3105 = vrot.slane %v3104, 1
    %v3106 = vadd.f32 %v3104, %v3105
    %v3107 = vsel %vm399, %v2920, 0.0
    %v3108 = vrot.slane %v3107, 4
    %v3109 = vadd.f32 %v3107, %v3108
    %v3110 = vrot.slane %v3109, 2
    %v3111 = vadd.f32 %v3109, %v3110
    %v3112 = vrot.slane %v3111, 1
    %v3113 = vadd.f32 %v3111, %v3112
    %v3114 = vsel %vm399, %v2972, 0.0
    %v3115 = vrot.slane %v3114, 4
    %v3116 = vadd.f32 %v3114, %v3115
    %v3117 = vrot.slane %v3116, 2
    %v3118 = vadd.f32 %v3116, %v3117
    %v3119 = vrot.slane %v3118, 1
    %v3120 = vadd.f32 %v3118, %v3119
    %v3121 = vsel %vm399, %v3024, 0.0
    %v3122 = vrot.slane %v3121, 4
    %v3123 = vadd.f32 %v3121, %v3122
    %v3124 = vrot.slane %v3123, 2
    %v3125 = vadd.f32 %v3123, %v3124
    %v3126 = vrot.slane %v3125, 1
    %v3127 = vadd.f32 %v3125, %v3126
    %v3128 = vsel %vm399, %v3076, 0.0
    %v3129 = vrot.slane %v3128, 4
    %v3130 = vadd.f32 %v3128, %v3129
    %v3131 = vrot.slane %v3130, 2
    %v3132 = vadd.f32 %v3130, %v3131
    %v3133 = vrot.slane %v3132, 1
    %v3134 = vadd.f32 %v3132, %v3133
    %v3135 = vmul.f32 %v3085, %v420
    %v3136 = vmul.f32 %v3092, %v420
    %v3137 = vmul.f32 %v3099, %v420
    %v3138 = vmul.f32 %v3106, %v420
    %v3139 = vmul.f32 %v3113, %v420
    %v3140 = vmul.f32 %v3120, %v420
    %v3141 = vmul.f32 %v3127, %v420
    %v3142 = vmul.f32 %v3134, %v420
    %v3143 = vsub.f32 %v2712, %v3135
    %v3144 = vsub.f32 %v2764, %v3136
    %v3145 = vsub.f32 %v2816, %v3137
    %v3146 = vsub.f32 %v2868, %v3138
    %v3147 = vsub.f32 %v2920, %v3139
    %v3148 = vsub.f32 %v2972, %v3140
    %v3149 = vsub.f32 %v3024, %v3141
    %v3150 = vsub.f32 %v3076, %v3142
    %v3151 = vmul.f32 %v3143, %v3143
    %v3152 = vmul.f32 %v3144, %v3144
    %v3153 = vmul.f32 %v3145, %v3145
    %v3154 = vmul.f32 %v3146, %v3146
    %v3155 = vmul.f32 %v3147, %v3147
    %v3156 = vmul.f32 %v3148, %v3148
    %v3157 = vmul.f32 %v3149, %v3149
    %v3158 = vmul.f32 %v3150, %v3150
    %v3159 = vsel %vm399, %v3151, 0.0
    %v3160 = vrot.slane %v3159, 4
    %v3161 = vadd.f32 %v3159, %v3160
    %v3162 = vrot.slane %v3161, 2
    %v3163 = vadd.f32 %v3161, %v3162
    %v3164 = vrot.slane %v3163, 1
    %v3165 = vadd.f32 %v3163, %v3164
    %v3166 = vsel %vm399, %v3152, 0.0
    %v3167 = vrot.slane %v3166, 4
    %v3168 = vadd.f32 %v3166, %v3167
    %v3169 = vrot.slane %v3168, 2
    %v3170 = vadd.f32 %v3168, %v3169
    %v3171 = vrot.slane %v3170, 1
    %v3172 = vadd.f32 %v3170, %v3171
    %v3173 = vsel %vm399, %v3153, 0.0
    %v3174 = vrot.slane %v3173, 4
    %v3175 = vadd.f32 %v3173, %v3174
    %v3176 = vrot.slane %v3175, 2
    %v3177 = vadd.f32 %v3175, %v3176
    %v3178 = vrot.slane %v3177, 1
    %v3179 = vadd.f32 %v3177, %v3178
    %v3180 = vsel %vm399, %v3154, 0.0
    %v3181 = vrot.slane %v3180, 4
    %v3182 = vadd.f32 %v3180, %v3181
    %v3183 = vrot.slane %v3182, 2
    %v3184 = vadd.f32 %v3182, %v3183
    %v3185 = vrot.slane %v3184, 1
    %v3186 = vadd.f32 %v3184, %v3185
    %v3187 = vsel %vm399, %v3155, 0.0
    %v3188 = vrot.slane %v3187, 4
    %v3189 = vadd.f32 %v3187, %v3188
    %v3190 = vrot.slane %v3189, 2
    %v3191 = vadd.f32 %v3189, %v3190
    %v3192 = vrot.slane %v3191, 1
    %v3193 = vadd.f32 %v3191, %v3192
    %v3194 = vsel %vm399, %v3156, 0.0
    %v3195 = vrot.slane %v3194, 4
    %v3196 = vadd.f32 %v3194, %v3195
    %v3197 = vrot.slane %v3196, 2
    %v3198 = vadd.f32 %v3196, %v3197
    %v3199 = vrot.slane %v3198, 1
    %v3200 = vadd.f32 %v3198, %v3199
    %v3201 = vsel %vm399, %v3157, 0.0
    %v3202 = vrot.slane %v3201, 4
    %v3203 = vadd.f32 %v3201, %v3202
    %v3204 = vrot.slane %v3203, 2
    %v3205 = vadd.f32 %v3203, %v3204
    %v3206 = vrot.slane %v3205, 1
    %v3207 = vadd.f32 %v3205, %v3206
    %v3208 = vsel %vm399, %v3158, 0.0
    %v3209 = vrot.slane %v3208, 4
    %v3210 = vadd.f32 %v3208, %v3209
    %v3211 = vrot.slane %v3210, 2
    %v3212 = vadd.f32 %v3210, %v3211
    %v3213 = vrot.slane %v3212, 1
    %v3214 = vadd.f32 %v3212, %v3213
    %v3215 = vmul.f32 %v3165, %v420
    %v3216 = vmul.f32 %v3172, %v420
    %v3217 = vmul.f32 %v3179, %v420
    %v3218 = vmul.f32 %v3186, %v420
    %v3219 = vmul.f32 %v3193, %v420
    %v3220 = vmul.f32 %v3200, %v420
    %v3221 = vmul.f32 %v3207, %v420
    %v3222 = vmul.f32 %v3214, %v420
    %v3223 = vadd.f32 %v3215, 1e-05
    %v3224 = vadd.f32 %v3216, 1e-05
    %v3225 = vadd.f32 %v3217, 1e-05
    %v3226 = vadd.f32 %v3218, 1e-05
    %v3227 = vadd.f32 %v3219, 1e-05
    %v3228 = vadd.f32 %v3220, 1e-05
    %v3229 = vadd.f32 %v3221, 1e-05
    %v3230 = vadd.f32 %v3222, 1e-05
    %v3231 = vrsqrt.pop %v3223
    %v3232 = vmul.f32 %v3231, %v3223
    %v3233 = vmul.f32 %v3232, %v3231
    %v3234 = vmul.f32 0.5, %v3233
    %v3235 = vsub.f32 1.5, %v3234
    %v3236 = vmul.f32 %v3231, %v3235
    %vm3237 = vweird.f32 %v3223
    %vm3238 = vweird.f32 %v3231
    %vm3239 = vmor %vm3237, %vm3238
    %v3240 = vsel %vm3239, %v3231, %v3236
    %v3241 = vrsqrt.pop %v3224
    %v3242 = vmul.f32 %v3241, %v3224
    %v3243 = vmul.f32 %v3242, %v3241
    %v3244 = vmul.f32 0.5, %v3243
    %v3245 = vsub.f32 1.5, %v3244
    %v3246 = vmul.f32 %v3241, %v3245
    %vm3247 = vweird.f32 %v3224
    %vm3248 = vweird.f32 %v3241
    %vm3249 = vmor %vm3247, %vm3248
    %v3250 = vsel %vm3249, %v3241, %v3246
    %v3251 = vrsqrt.pop %v3225
    %v3252 = vmul.f32 %v3251, %v3225
    %v3253 = vmul.f32 %v3252, %v3251
    %v3254 = vmul.f32 0.5, %v3253
    %v3255 = vsub.f32 1.5, %v3254
    %v3256 = vmul.f32 %v3251, %v3255
    %vm3257 = vweird.f32 %v3225
    %vm3258 = vweird.f32 %v3251
    %vm3259 = vmor %vm3257, %vm3258
    %v3260 = vsel %vm3259, %v3251, %v3256
    %v3261 = vrsqrt.pop %v3226
    %v3262 = vmul.f32 %v3261, %v3226
    %v3263 = vmul.f32 %v3262, %v3261
    %v3264 = vmul.f32 0.5, %v3263
    %v3265 = vsub.f32 1.5, %v3264
    %v3266 = vmul.f32 %v3261, %v3265
    %vm3267 = vweird.f32 %v3226
    %vm3268 = vweird.f32 %v3261
    %vm3269 = vmor %vm3267, %vm3268
    %v3270 = vsel %vm3269, %v3261, %v3266
    %v3271 = vrsqrt.pop %v3227
    %v3272 = vmul.f32 %v3271, %v3227
    %v3273 = vmul.f32 %v3272, %v3271
    %v3274 = vmul.f32 0.5, %v3273
    %v3275 = vsub.f32 1.5, %v3274
    %v3276 = vmul.f32 %v3271, %v3275
    %vm3277 = vweird.f32 %v3227
    %vm3278 = vweird.f32 %v3271
    %vm3279 = vmor %vm3277, %vm3278
    %v3280 = vsel %vm3279, %v3271, %v3276
    %v3281 = vrsqrt.pop %v3228
    %v3282 = vmul.f32 %v3281, %v3228
    %v3283 = vmul.f32 %v3282, %v3281
    %v3284 = vmul.f32 0.5, %v3283
    %v3285 = vsub.f32 1.5, %v3284
    %v3286 = vmul.f32 %v3281, %v3285
    %vm3287 = vweird.f32 %v3228
    %vm3288 = vweird.f32 %v3281
    %vm3289 = vmor %vm3287, %vm3288
    %v3290 = vsel %vm3289, %v3281, %v3286
    %v3291 = vrsqrt.pop %v3229
    %v3292 = vmul.f32 %v3291, %v3229
    %v3293 = vmul.f32 %v3292, %v3291
    %v3294 = vmul.f32 0.5, %v3293
    %v3295 = vsub.f32 1.5, %v3294
    %v3296 = vmul.f32 %v3291, %v3295
    %vm3297 = vweird.f32 %v3229
    %vm3298 = vweird.f32 %v3291
    %vm3299 = vmor %vm3297, %vm3298
    %v3300 = vsel %vm3299, %v3291, %v3296
    %v3301 = vrsqrt.pop %v3230
    %v3302 = vmul.f32 %v3301, %v3230
    %v3303 = vmul.f32 %v3302, %v3301
    %v3304 = vmul.f32 0.5, %v3303
    %v3305 = vsub.f32 1.5, %v3304
    %v3306 = vmul.f32 %v3301, %v3305
    %vm3307 = vweird.f32 %v3230
    %vm3308 = vweird.f32 %v3301
    %vm3309 = vmor %vm3307, %vm3308
    %v3310 = vsel %vm3309, %v3301, %v3306
    %v3311 = vmul.f32 %v3143, %v3240
    %v3312 = vmul.f32 %v3144, %v3250
    %v3313 = vmul.f32 %v3145, %v3260
    %v3314 = vmul.f32 %v3146, %v3270
    %v3315 = vmul.f32 %v3147, %v3280
    %v3316 = vmul.f32 %v3148, %v3290
    %v3317 = vmul.f32 %v3149, %v3300
    %v3318 = vmul.f32 %v3150, %v3310
    %vm3319 = vcmp.gt.f32.partialorder %v3311, 0.0
    %vm3320 = vcmp.gt.f32.partialorder %v3312, 0.0
    %vm3321 = vcmp.gt.f32.partialorder %v3313, 0.0
    %vm3322 = vcmp.gt.f32.partialorder %v3314, 0.0
    %vm3323 = vcmp.gt.f32.partialorder %v3315, 0.0
    %vm3324 = vcmp.gt.f32.partialorder %v3316, 0.0
    %vm3325 = vcmp.gt.f32.partialorder %v3317, 0.0
    %vm3326 = vcmp.gt.f32.partialorder %v3318, 0.0
    %v3327 = vmul.f32 %v3311, 0.2
    %v3328 = vmul.f32 %v3312, 0.2
    %v3329 = vmul.f32 %v3313, 0.2
    %v3330 = vmul.f32 %v3314, 0.2
    %v3331 = vmul.f32 %v3315, 0.2
    %v3332 = vmul.f32 %v3316, 0.2
    %v3333 = vmul.f32 %v3317, 0.2
    %v3334 = vmul.f32 %v3318, 0.2
    %v3335 = vsel %vm3319, %v3311, %v3327
    %v3336 = vsel %vm3320, %v3312, %v3328
    %v3337 = vsel %vm3321, %v3313, %v3329
    %v3338 = vsel %vm3322, %v3314, %v3330
    %v3339 = vsel %vm3323, %v3315, %v3331
    %v3340 = vsel %vm3324, %v3316, %v3332
    %v3341 = vsel %vm3325, %v3317, %v3333
    %v3342 = vsel %vm3326, %v3318, %v3334
    %v3343 = vpack.c.bf16 %v3335, %v3335
    %v3344 = vpack.c.bf16 %v3336, %v3336
    %v3345 = vpack.c.bf16 %v3337, %v3337
    %v3346 = vpack.c.bf16 %v3338, %v3338
    %v3347 = vpack.c.bf16 %v3339, %v3339
    %v3348 = vpack.c.bf16 %v3340, %v3340
    %v3349 = vpack.c.bf16 %v3341, %v3341
    %v3350 = vpack.c.bf16 %v3342, %v3342
    %v3351 = vld [vmem:[#allocation15] sm:$0xff]
    %v3352 = vld [vmem:[#allocation15 + $0x8] sm:$0xff]
    %v3353 = vld [vmem:[#allocation15 + $0x10] sm:$0xff]
    %v3354 = vld [vmem:[#allocation15 + $0x18] sm:$0xf]
    %v3355 = vld [vmem:[#allocation15 + $0x1c] sm:$0xff]
    %v3356 = vld [vmem:[#allocation15 + $0x24] sm:$0xff]
    %v3357 = vld [vmem:[#allocation15 + $0x2c] sm:$0xff]
    %v3358 = vld [vmem:[#allocation15 + $0x34] sm:$0xf]
    %v3359 = vld [vmem:[#allocation15 + $0x38] sm:$0xff]
    %v3360 = vld [vmem:[#allocation15 + $0x40] sm:$0xff]
    %v3361 = vld [vmem:[#allocation15 + $0x48] sm:$0xff]
    %v3362 = vld [vmem:[#allocation15 + $0x50] sm:$0xf]
    %v3363 = vld [vmem:[#allocation15 + $0x54] sm:$0xff]
    %v3364 = vld [vmem:[#allocation15 + $0x5c] sm:$0xff]
    %v3365 = vld [vmem:[#allocation15 + $0x64] sm:$0xff]
    %v3366 = vld [vmem:[#allocation15 + $0x6c] sm:$0xf]
    %v3367 = vld [vmem:[#allocation15 + $0x70] sm:$0xff]
    %v3368 = vld [vmem:[#allocation15 + $0x78] sm:$0xff]
    %v3369 = vld [vmem:[#allocation15 + $0x80] sm:$0xff]
    %v3370 = vld [vmem:[#allocation15 + $0x88] sm:$0xf]
    %v3371 = vld [vmem:[#allocation15 + $0x8c] sm:$0xff]
    %v3372 = vld [vmem:[#allocation15 + $0x94] sm:$0xff]
    %v3373 = vld [vmem:[#allocation15 + $0x9c] sm:$0xff]
    %v3374 = vld [vmem:[#allocation15 + $0xa4] sm:$0xf]
    %v3375 = vld [vmem:[#allocation15 + $0xa8] sm:$0xff]
    %v3376 = vld [vmem:[#allocation15 + $0xb0] sm:$0xff]
    %v3377 = vld [vmem:[#allocation15 + $0xb8] sm:$0xff]
    %v3378 = vld [vmem:[#allocation15 + $0xc0] sm:$0xf]
    %v3379 = vld [vmem:[#allocation15 + $0xc4] sm:$0xff]
    %v3380 = vld [vmem:[#allocation15 + $0xcc] sm:$0xff]
    %v3381 = vld [vmem:[#allocation15 + $0xd4] sm:$0xff]
    %v3382 = vld [vmem:[#allocation15 + $0xdc] sm:$0xf]
    %v3383 = vld [vmem:[#allocation15 + $0xe0] sm:$0xff]
    %v3384 = vld [vmem:[#allocation15 + $0xe8] sm:$0xff]
    %v3385 = vld [vmem:[#allocation15 + $0xf0] sm:$0xff]
    %v3386 = vld [vmem:[#allocation15 + $0xf8] sm:$0xf]
    %v3387 = vld [vmem:[#allocation15 + $0xfc] sm:$0xff]
    %v3388 = vld [vmem:[#allocation15 + $0x104] sm:$0xff]
    %v3389 = vld [vmem:[#allocation15 + $0x10c] sm:$0xff]
    %v3390 = vld [vmem:[#allocation15 + $0x114] sm:$0xf]
    %v3391 = vld [vmem:[#allocation15 + $0x118] sm:$0xff]
    %v3392 = vld [vmem:[#allocation15 + $0x120] sm:$0xff]
    %v3393 = vld [vmem:[#allocation15 + $0x128] sm:$0xff]
    %v3394 = vld [vmem:[#allocation15 + $0x130] sm:$0xf]
    %v3395 = vld [vmem:[#allocation15 + $0x134] sm:$0xff]
    %v3396 = vld [vmem:[#allocation15 + $0x13c] sm:$0xff]
    %v3397 = vld [vmem:[#allocation15 + $0x144] sm:$0xff]
    %v3398 = vld [vmem:[#allocation15 + $0x14c] sm:$0xf]
    %v3399 = vld [vmem:[#allocation15 + $0x150] sm:$0xff]
    %v3400 = vld [vmem:[#allocation15 + $0x158] sm:$0xff]
    %v3401 = vld [vmem:[#allocation15 + $0x160] sm:$0xff]
    %v3402 = vld [vmem:[#allocation15 + $0x168] sm:$0xf]
    %v3403 = vld [vmem:[#allocation15 + $0x16c] sm:$0xff]
    %v3404 = vld [vmem:[#allocation15 + $0x174] sm:$0xff]
    %v3405 = vld [vmem:[#allocation15 + $0x17c] sm:$0xff]
    %v3406 = vld [vmem:[#allocation15 + $0x184] sm:$0xf]
    %v3407 = vld [vmem:[#allocation15 + $0x188] sm:$0xff]
    %v3408 = vld [vmem:[#allocation15 + $0x190] sm:$0xff]
    %v3409 = vld [vmem:[#allocation15 + $0x198] sm:$0xff]
    %v3410 = vld [vmem:[#allocation15 + $0x1a0] sm:$0xf]
    %v3411 = vld [vmem:[#allocation15 + $0x1a4] sm:$0xff]
    %v3412 = vld [vmem:[#allocation15 + $0x1ac] sm:$0xff]
    %v3413 = vld [vmem:[#allocation15 + $0x1b4] sm:$0xff]
    %v3414 = vld [vmem:[#allocation15 + $0x1bc] sm:$0xf]
    %v3415 = vld [vmem:[#allocation15 + $0x1c0] sm:$0xff]
    %v3416 = vld [vmem:[#allocation15 + $0x1c8] sm:$0xff]
    %v3417 = vld [vmem:[#allocation15 + $0x1d0] sm:$0xff]
    %v3418 = vld [vmem:[#allocation15 + $0x1d8] sm:$0xf]
    %v3419 = vld [vmem:[#allocation15 + $0x1dc] sm:$0xff]
    %v3420 = vld [vmem:[#allocation15 + $0x1e4] sm:$0xff]
    %v3421 = vld [vmem:[#allocation15 + $0x1ec] sm:$0xff]
    %v3422 = vld [vmem:[#allocation15 + $0x1f4] sm:$0xf]
    %v3423 = vld [vmem:[#allocation15 + $0x1f8] sm:$0xff]
    %v3424 = vld [vmem:[#allocation15 + $0x200] sm:$0xff]
    %v3425 = vld [vmem:[#allocation15 + $0x208] sm:$0xff]
    %v3426 = vld [vmem:[#allocation15 + $0x210] sm:$0xf]
    %v3427 = vld [vmem:[#allocation15 + $0x214] sm:$0xff]
    %v3428 = vld [vmem:[#allocation15 + $0x21c] sm:$0xff]
    %v3429 = vld [vmem:[#allocation15 + $0x224] sm:$0xff]
    %v3430 = vld [vmem:[#allocation15 + $0x22c] sm:$0xf]
    %v3431 = vld [vmem:[#allocation15 + $0x230] sm:$0xff]
    %v3432 = vld [vmem:[#allocation15 + $0x238] sm:$0xff]
    %v3433 = vld [vmem:[#allocation15 + $0x240] sm:$0xff]
    %v3434 = vld [vmem:[#allocation15 + $0x248] sm:$0xf]
    %v3435 = vld [vmem:[#allocation15 + $0x24c] sm:$0xff]
    %v3436 = vld [vmem:[#allocation15 + $0x254] sm:$0xff]
    %v3437 = vld [vmem:[#allocation15 + $0x25c] sm:$0xff]
    %v3438 = vld [vmem:[#allocation15 + $0x264] sm:$0xf]
    %v3439 = vld [vmem:[#allocation15 + $0x268] sm:$0xff]
    %v3440 = vld [vmem:[#allocation15 + $0x270] sm:$0xff]
    %v3441 = vld [vmem:[#allocation15 + $0x278] sm:$0xff]
    %v3442 = vld [vmem:[#allocation15 + $0x280] sm:$0xf]
    %v3443 = vld [vmem:[#allocation15 + $0x284] sm:$0xff]
    %v3444 = vld [vmem:[#allocation15 + $0x28c] sm:$0xff]
    %v3445 = vld [vmem:[#allocation15 + $0x294] sm:$0xff]
    %v3446 = vld [vmem:[#allocation15 + $0x29c] sm:$0xf]
    %v3447 = vld [vmem:[#allocation15 + $0x2a0] sm:$0xff]
    %v3448 = vld [vmem:[#allocation15 + $0x2a8] sm:$0xff]
    %v3449 = vld [vmem:[#allocation15 + $0x2b0] sm:$0xff]
    %v3450 = vld [vmem:[#allocation15 + $0x2b8] sm:$0xf]
    %v3451 = vld [vmem:[#allocation15 + $0x2bc] sm:$0xff]
    %v3452 = vld [vmem:[#allocation15 + $0x2c4] sm:$0xff]
    %v3453 = vld [vmem:[#allocation15 + $0x2cc] sm:$0xff]
    %v3454 = vld [vmem:[#allocation15 + $0x2d4] sm:$0xf]
    %v3455 = vld [vmem:[#allocation15 + $0x2d8] sm:$0xff]
    %v3456 = vld [vmem:[#allocation15 + $0x2e0] sm:$0xff]
    %v3457 = vld [vmem:[#allocation15 + $0x2e8] sm:$0xff]
    %v3458 = vld [vmem:[#allocation15 + $0x2f0] sm:$0xf]
    %v3459 = vld [vmem:[#allocation15 + $0x2f4] sm:$0xff]
    %v3460 = vld [vmem:[#allocation15 + $0x2fc] sm:$0xff]
    %v3461 = vld [vmem:[#allocation15 + $0x304] sm:$0xff]
    %v3462 = vld [vmem:[#allocation15 + $0x30c] sm:$0xf]
    %v3463 = vld [vmem:[#allocation15 + $0x310] sm:$0xff]
    %v3464 = vld [vmem:[#allocation15 + $0x318] sm:$0xff]
    %v3465 = vld [vmem:[#allocation15 + $0x320] sm:$0xff]
    %v3466 = vld [vmem:[#allocation15 + $0x328] sm:$0xf]
    %v3467 = vld [vmem:[#allocation15 + $0x32c] sm:$0xff]
    %v3468 = vld [vmem:[#allocation15 + $0x334] sm:$0xff]
    %v3469 = vld [vmem:[#allocation15 + $0x33c] sm:$0xff]
    %v3470 = vld [vmem:[#allocation15 + $0x344] sm:$0xf]
    %v3471 = vld [vmem:[#allocation15 + $0x348] sm:$0xff]
    %v3472 = vld [vmem:[#allocation15 + $0x350] sm:$0xff]
    %v3473 = vld [vmem:[#allocation15 + $0x358] sm:$0xff]
    %v3474 = vld [vmem:[#allocation15 + $0x360] sm:$0xf]
    %v3475 = vld [vmem:[#allocation15 + $0x364] sm:$0xff]
    %v3476 = vld [vmem:[#allocation15 + $0x36c] sm:$0xff]
    %v3477 = vld [vmem:[#allocation15 + $0x374] sm:$0xff]
    %v3478 = vld [vmem:[#allocation15 + $0x37c] sm:$0xf]
    %v3479 = vld [vmem:[#allocation15 + $0x380] sm:$0xff]
    %v3480 = vld [vmem:[#allocation15 + $0x388] sm:$0xff]
    %v3481 = vld [vmem:[#allocation15 + $0x390] sm:$0xff]
    %v3482 = vld [vmem:[#allocation15 + $0x398] sm:$0xf]
    %v3483 = vld [vmem:[#allocation15 + $0x39c] sm:$0xff]
    %v3484 = vld [vmem:[#allocation15 + $0x3a4] sm:$0xff]
    %v3485 = vld [vmem:[#allocation15 + $0x3ac] sm:$0xff]
    %v3486 = vld [vmem:[#allocation15 + $0x3b4] sm:$0xf]
    %v3487 = vld [vmem:[#allocation15 + $0x3b8] sm:$0xff]
    %v3488 = vld [vmem:[#allocation15 + $0x3c0] sm:$0xff]
    %v3489 = vld [vmem:[#allocation15 + $0x3c8] sm:$0xff]
    %v3490 = vld [vmem:[#allocation15 + $0x3d0] sm:$0xf]
    %v3491 = vld [vmem:[#allocation15 + $0x3d4] sm:$0xff]
    %v3492 = vld [vmem:[#allocation15 + $0x3dc] sm:$0xff]
    %v3493 = vld [vmem:[#allocation15 + $0x3e4] sm:$0xff]
    %v3494 = vld [vmem:[#allocation15 + $0x3ec] sm:$0xf]
    %v3495 = vld [vmem:[#allocation15 + $0x3f0] sm:$0xff]
    %v3496 = vld [vmem:[#allocation15 + $0x3f8] sm:$0xff]
    %v3497 = vld [vmem:[#allocation15 + $0x400] sm:$0xff]
    %v3498 = vld [vmem:[#allocation15 + $0x408] sm:$0xf]
    %v3499 = vld [vmem:[#allocation15 + $0x40c] sm:$0xff]
    %v3500 = vld [vmem:[#allocation15 + $0x414] sm:$0xff]
    %v3501 = vld [vmem:[#allocation15 + $0x41c] sm:$0xff]
    %v3502 = vld [vmem:[#allocation15 + $0x424] sm:$0xf]
    %v3503 = vld [vmem:[#allocation15 + $0x428] sm:$0xff]
    %v3504 = vld [vmem:[#allocation15 + $0x430] sm:$0xff]
    %v3505 = vld [vmem:[#allocation15 + $0x438] sm:$0xff]
    %v3506 = vld [vmem:[#allocation15 + $0x440] sm:$0xf]
    %v3507 = vld [vmem:[#allocation15 + $0x444] sm:$0xff]
    %v3508 = vld [vmem:[#allocation15 + $0x44c] sm:$0xff]
    %v3509 = vld [vmem:[#allocation15 + $0x454] sm:$0xff]
    %v3510 = vld [vmem:[#allocation15 + $0x45c] sm:$0xf]
    %v3511 = vld [vmem:[#allocation15 + $0x460] sm:$0xff]
    %v3512 = vld [vmem:[#allocation15 + $0x468] sm:$0xff]
    %v3513 = vld [vmem:[#allocation15 + $0x470] sm:$0xff]
    %v3514 = vld [vmem:[#allocation15 + $0x478] sm:$0xf]
    %v3515 = vld [vmem:[#allocation15 + $0x47c] sm:$0xff]
    %v3516 = vld [vmem:[#allocation15 + $0x484] sm:$0xff]
    %v3517 = vld [vmem:[#allocation15 + $0x48c] sm:$0xff]
    %v3518 = vld [vmem:[#allocation15 + $0x494] sm:$0xf]
    %v3519 = vld [vmem:[#allocation15 + $0x498] sm:$0xff]
    %v3520 = vld [vmem:[#allocation15 + $0x4a0] sm:$0xff]
    %v3521 = vld [vmem:[#allocation15 + $0x4a8] sm:$0xff]
    %v3522 = vld [vmem:[#allocation15 + $0x4b0] sm:$0xf]
    %v3523 = vld [vmem:[#allocation15 + $0x4b4] sm:$0xff]
    %v3524 = vld [vmem:[#allocation15 + $0x4bc] sm:$0xff]
    %v3525 = vld [vmem:[#allocation15 + $0x4c4] sm:$0xff]
    %v3526 = vld [vmem:[#allocation15 + $0x4cc] sm:$0xf]
    %v3527 = vld [vmem:[#allocation15 + $0x4d0] sm:$0xff]
    %v3528 = vld [vmem:[#allocation15 + $0x4d8] sm:$0xff]
    %v3529 = vld [vmem:[#allocation15 + $0x4e0] sm:$0xff]
    %v3530 = vld [vmem:[#allocation15 + $0x4e8] sm:$0xf]
    %v3531 = vld [vmem:[#allocation15 + $0x4ec] sm:$0xff]
    %v3532 = vld [vmem:[#allocation15 + $0x4f4] sm:$0xff]
    %v3533 = vld [vmem:[#allocation15 + $0x4fc] sm:$0xff]
    %v3534 = vld [vmem:[#allocation15 + $0x504] sm:$0xf]
    %v3535 = vld [vmem:[#allocation15 + $0x508] sm:$0xff]
    %v3536 = vld [vmem:[#allocation15 + $0x510] sm:$0xff]
    %v3537 = vld [vmem:[#allocation15 + $0x518] sm:$0xff]
    %v3538 = vld [vmem:[#allocation15 + $0x520] sm:$0xf]
    %v3539 = vld [vmem:[#allocation15 + $0x524] sm:$0xff]
    %v3540 = vld [vmem:[#allocation15 + $0x52c] sm:$0xff]
    %v3541 = vld [vmem:[#allocation15 + $0x534] sm:$0xff]
    %v3542 = vld [vmem:[#allocation15 + $0x53c] sm:$0xf]
    %v3543 = vld [vmem:[#allocation15 + $0x540] sm:$0xff]
    %v3544 = vld [vmem:[#allocation15 + $0x548] sm:$0xff]
    %v3545 = vld [vmem:[#allocation15 + $0x550] sm:$0xff]
    %v3546 = vld [vmem:[#allocation15 + $0x558] sm:$0xf]
    %v3547 = vld [vmem:[#allocation15 + $0x55c] sm:$0xff]
    %v3548 = vld [vmem:[#allocation15 + $0x564] sm:$0xff]
    %v3549 = vld [vmem:[#allocation15 + $0x56c] sm:$0xff]
    %v3550 = vld [vmem:[#allocation15 + $0x574] sm:$0xf]
    %v3551 = vld [vmem:[#allocation15 + $0x578] sm:$0xff]
    %v3552 = vld [vmem:[#allocation15 + $0x580] sm:$0xff]
    %v3553 = vld [vmem:[#allocation15 + $0x588] sm:$0xff]
    %v3554 = vld [vmem:[#allocation15 + $0x590] sm:$0xf]
    %v3555 = vld [vmem:[#allocation15 + $0x594] sm:$0xff]
    %v3556 = vld [vmem:[#allocation15 + $0x59c] sm:$0xff]
    %v3557 = vld [vmem:[#allocation15 + $0x5a4] sm:$0xff]
    %v3558 = vld [vmem:[#allocation15 + $0x5ac] sm:$0xf]
    %v3559 = vld [vmem:[#allocation15 + $0x5b0] sm:$0xff]
    %v3560 = vld [vmem:[#allocation15 + $0x5b8] sm:$0xff]
    %v3561 = vld [vmem:[#allocation15 + $0x5c0] sm:$0xff]
    %v3562 = vld [vmem:[#allocation15 + $0x5c8] sm:$0xf]
    %v3563 = vld [vmem:[#allocation15 + $0x5cc] sm:$0xff]
    %v3564 = vld [vmem:[#allocation15 + $0x5d4] sm:$0xff]
    %v3565 = vld [vmem:[#allocation15 + $0x5dc] sm:$0xff]
    %v3566 = vld [vmem:[#allocation15 + $0x5e4] sm:$0xf]
    %v3567 = vld [vmem:[#allocation15 + $0x5e8] sm:$0xff]
    %v3568 = vld [vmem:[#allocation15 + $0x5f0] sm:$0xff]
    %v3569 = vld [vmem:[#allocation15 + $0x5f8] sm:$0xff]
    %v3570 = vld [vmem:[#allocation15 + $0x600] sm:$0xf]
    %v3571 = vld [vmem:[#allocation15 + $0x604] sm:$0xff]
    %v3572 = vld [vmem:[#allocation15 + $0x60c] sm:$0xff]
    %v3573 = vld [vmem:[#allocation15 + $0x614] sm:$0xff]
    %v3574 = vld [vmem:[#allocation15 + $0x61c] sm:$0xf]
    %v3575 = vld [vmem:[#allocation15 + $0x620] sm:$0xff]
    %v3576 = vld [vmem:[#allocation15 + $0x628] sm:$0xff]
    %v3577 = vld [vmem:[#allocation15 + $0x630] sm:$0xff]
    %v3578 = vld [vmem:[#allocation15 + $0x638] sm:$0xf]
    %v3579 = vld [vmem:[#allocation15 + $0x63c] sm:$0xff]
    %v3580 = vld [vmem:[#allocation15 + $0x644] sm:$0xff]
    %v3581 = vld [vmem:[#allocation15 + $0x64c] sm:$0xff]
    %v3582 = vld [vmem:[#allocation15 + $0x654] sm:$0xf]
    %v3583 = vld [vmem:[#allocation15 + $0x658] sm:$0xff]
    %v3584 = vld [vmem:[#allocation15 + $0x660] sm:$0xff]
    %v3585 = vld [vmem:[#allocation15 + $0x668] sm:$0xff]
    %v3586 = vld [vmem:[#allocation15 + $0x670] sm:$0xf]
    %v3587 = vld [vmem:[#allocation15 + $0x674] sm:$0xff]
    %v3588 = vld [vmem:[#allocation15 + $0x67c] sm:$0xff]
    %v3589 = vld [vmem:[#allocation15 + $0x684] sm:$0xff]
    %v3590 = vld [vmem:[#allocation15 + $0x68c] sm:$0xf]
    %v3591 = vld [vmem:[#allocation15 + $0x690] sm:$0xff]
    %v3592 = vld [vmem:[#allocation15 + $0x698] sm:$0xff]
    %v3593 = vld [vmem:[#allocation15 + $0x6a0] sm:$0xff]
    %v3594 = vld [vmem:[#allocation15 + $0x6a8] sm:$0xf]
    %v3595 = vld [vmem:[#allocation15 + $0x6ac] sm:$0xff]
    %v3596 = vld [vmem:[#allocation15 + $0x6b4] sm:$0xff]
    %v3597 = vld [vmem:[#allocation15 + $0x6bc] sm:$0xff]
    %v3598 = vld [vmem:[#allocation15 + $0x6c4] sm:$0xf]
    %v3599 = vld [vmem:[#allocation15 + $0x6c8] sm:$0xff]
    %v3600 = vld [vmem:[#allocation15 + $0x6d0] sm:$0xff]
    %v3601 = vld [vmem:[#allocation15 + $0x6d8] sm:$0xff]
    %v3602 = vld [vmem:[#allocation15 + $0x6e0] sm:$0xf]
    %v3603 = vld [vmem:[#allocation15 + $0x6e4] sm:$0xff]
    %v3604 = vld [vmem:[#allocation15 + $0x6ec] sm:$0xff]
    %v3605 = vld [vmem:[#allocation15 + $0x6f4] sm:$0xff]
    %v3606 = vld [vmem:[#allocation15 + $0x6fc] sm:$0xf]
    %v3607 = vld [vmem:[#allocation15 + $0x700] sm:$0xff]
    %v3608 = vld [vmem:[#allocation15 + $0x708] sm:$0xff]
    %v3609 = vld [vmem:[#allocation15 + $0x710] sm:$0xff]
    %v3610 = vld [vmem:[#allocation15 + $0x718] sm:$0xf]
    %v3611 = vld [vmem:[#allocation15 + $0x71c] sm:$0xff]
    %v3612 = vld [vmem:[#allocation15 + $0x724] sm:$0xff]
    %v3613 = vld [vmem:[#allocation15 + $0x72c] sm:$0xff]
    %v3614 = vld [vmem:[#allocation15 + $0x734] sm:$0xf]
    %v3615 = vld [vmem:[#allocation15 + $0x738] sm:$0xff]
    %v3616 = vld [vmem:[#allocation15 + $0x740] sm:$0xff]
    %v3617 = vld [vmem:[#allocation15 + $0x748] sm:$0xff]
    %v3618 = vld [vmem:[#allocation15 + $0x750] sm:$0xf]
    %v3619 = vld [vmem:[#allocation15 + $0x754] sm:$0xff]
    %v3620 = vld [vmem:[#allocation15 + $0x75c] sm:$0xff]
    %v3621 = vld [vmem:[#allocation15 + $0x764] sm:$0xff]
    %v3622 = vld [vmem:[#allocation15 + $0x76c] sm:$0xf]
    %v3623 = vld [vmem:[#allocation15 + $0x770] sm:$0xff]
    %v3624 = vld [vmem:[#allocation15 + $0x778] sm:$0xff]
    %v3625 = vld [vmem:[#allocation15 + $0x780] sm:$0xff]
    %v3626 = vld [vmem:[#allocation15 + $0x788] sm:$0xf]
    %v3627 = vld [vmem:[#allocation15 + $0x78c] sm:$0xff]
    %v3628 = vld [vmem:[#allocation15 + $0x794] sm:$0xff]
    %v3629 = vld [vmem:[#allocation15 + $0x79c] sm:$0xff]
    %v3630 = vld [vmem:[#allocation15 + $0x7a4] sm:$0xf]
    %v3631 = vld [vmem:[#allocation15 + $0x7a8] sm:$0xff]
    %v3632 = vld [vmem:[#allocation15 + $0x7b0] sm:$0xff]
    %v3633 = vld [vmem:[#allocation15 + $0x7b8] sm:$0xff]
    %v3634 = vld [vmem:[#allocation15 + $0x7c0] sm:$0xf]
    %v3635 = vld [vmem:[#allocation15 + $0x7c4] sm:$0xff]
    %v3636 = vld [vmem:[#allocation15 + $0x7cc] sm:$0xff]
    %v3637 = vld [vmem:[#allocation15 + $0x7d4] sm:$0xff]
    %v3638 = vld [vmem:[#allocation15 + $0x7dc] sm:$0xf]
    %v3639 = vld [vmem:[#allocation15 + $0x7e0] sm:$0xff]
    %v3640 = vld [vmem:[#allocation15 + $0x7e8] sm:$0xff]
    %v3641 = vld [vmem:[#allocation15 + $0x7f0] sm:$0xff]
    %v3642 = vld [vmem:[#allocation15 + $0x7f8] sm:$0xf]
    %v3643 = vld [vmem:[#allocation15 + $0x7fc] sm:$0xff]
    %v3644 = vld [vmem:[#allocation15 + $0x804] sm:$0xff]
    %v3645 = vld [vmem:[#allocation15 + $0x80c] sm:$0xff]
    %v3646 = vld [vmem:[#allocation15 + $0x814] sm:$0xf]
    %v3647 = vld [vmem:[#allocation15 + $0x818] sm:$0xff]
    %v3648 = vld [vmem:[#allocation15 + $0x820] sm:$0xff]
    %v3649 = vld [vmem:[#allocation15 + $0x828] sm:$0xff]
    %v3650 = vld [vmem:[#allocation15 + $0x830] sm:$0xf]
    %v3651 = vld [vmem:[#allocation15 + $0x834] sm:$0xff]
    %v3652 = vld [vmem:[#allocation15 + $0x83c] sm:$0xff]
    %v3653 = vld [vmem:[#allocation15 + $0x844] sm:$0xff]
    %v3654 = vld [vmem:[#allocation15 + $0x84c] sm:$0xf]
    %v3655 = vld [vmem:[#allocation15 + $0x850] sm:$0xff]
    %v3656 = vld [vmem:[#allocation15 + $0x858] sm:$0xff]
    %v3657 = vld [vmem:[#allocation15 + $0x860] sm:$0xff]
    %v3658 = vld [vmem:[#allocation15 + $0x868] sm:$0xf]
    %v3659 = vld [vmem:[#allocation15 + $0x86c] sm:$0xff]
    %v3660 = vld [vmem:[#allocation15 + $0x874] sm:$0xff]
    %v3661 = vld [vmem:[#allocation15 + $0x87c] sm:$0xff]
    %v3662 = vld [vmem:[#allocation15 + $0x884] sm:$0xf]
    %v3663 = vld [vmem:[#allocation15 + $0x888] sm:$0xff]
    %v3664 = vld [vmem:[#allocation15 + $0x890] sm:$0xff]
    %v3665 = vld [vmem:[#allocation15 + $0x898] sm:$0xff]
    %v3666 = vld [vmem:[#allocation15 + $0x8a0] sm:$0xf]
    %v3667 = vld [vmem:[#allocation15 + $0x8a4] sm:$0xff]
    %v3668 = vld [vmem:[#allocation15 + $0x8ac] sm:$0xff]
    %v3669 = vld [vmem:[#allocation15 + $0x8b4] sm:$0xff]
    %v3670 = vld [vmem:[#allocation15 + $0x8bc] sm:$0xf]
    %v3671 = vld [vmem:[#allocation15 + $0x8c0] sm:$0xff]
    %v3672 = vld [vmem:[#allocation15 + $0x8c8] sm:$0xff]
    %v3673 = vld [vmem:[#allocation15 + $0x8d0] sm:$0xff]
    %v3674 = vld [vmem:[#allocation15 + $0x8d8] sm:$0xf]
    %v3675 = vld [vmem:[#allocation15 + $0x8dc] sm:$0xff]
    %v3676 = vld [vmem:[#allocation15 + $0x8e4] sm:$0xff]
    %v3677 = vld [vmem:[#allocation15 + $0x8ec] sm:$0xff]
    %v3678 = vld [vmem:[#allocation15 + $0x8f4] sm:$0xf]
    %v3679 = vld [vmem:[#allocation15 + $0x8f8] sm:$0xff]
    %v3680 = vld [vmem:[#allocation15 + $0x900] sm:$0xff]
    %v3681 = vld [vmem:[#allocation15 + $0x908] sm:$0xff]
    %v3682 = vld [vmem:[#allocation15 + $0x910] sm:$0xf]
    %v3683 = vld [vmem:[#allocation15 + $0x914] sm:$0xff]
    %v3684 = vld [vmem:[#allocation15 + $0x91c] sm:$0xff]
    %v3685 = vld [vmem:[#allocation15 + $0x924] sm:$0xff]
    %v3686 = vld [vmem:[#allocation15 + $0x92c] sm:$0xf]
    %v3687 = vld [vmem:[#allocation15 + $0x930] sm:$0xff]
    %v3688 = vld [vmem:[#allocation15 + $0x938] sm:$0xff]
    %v3689 = vld [vmem:[#allocation15 + $0x940] sm:$0xff]
    %v3690 = vld [vmem:[#allocation15 + $0x948] sm:$0xf]
    %v3691 = vld [vmem:[#allocation15 + $0x94c] sm:$0xff]
    %v3692 = vld [vmem:[#allocation15 + $0x954] sm:$0xff]
    %v3693 = vld [vmem:[#allocation15 + $0x95c] sm:$0xff]
    %v3694 = vld [vmem:[#allocation15 + $0x964] sm:$0xf]
    %v3695 = vld [vmem:[#allocation15 + $0x968] sm:$0xff]
    %v3696 = vld [vmem:[#allocation15 + $0x970] sm:$0xff]
    %v3697 = vld [vmem:[#allocation15 + $0x978] sm:$0xff]
    %v3698 = vld [vmem:[#allocation15 + $0x980] sm:$0xf]
    %v3699 = vld [vmem:[#allocation15 + $0x984] sm:$0xff]
    %v3700 = vld [vmem:[#allocation15 + $0x98c] sm:$0xff]
    %v3701 = vld [vmem:[#allocation15 + $0x994] sm:$0xff]
    %v3702 = vld [vmem:[#allocation15 + $0x99c] sm:$0xf]
    %v3703 = vld [vmem:[#allocation15 + $0x9a0] sm:$0xff]
    %v3704 = vld [vmem:[#allocation15 + $0x9a8] sm:$0xff]
    %v3705 = vld [vmem:[#allocation15 + $0x9b0] sm:$0xff]
    %v3706 = vld [vmem:[#allocation15 + $0x9b8] sm:$0xf]
    %v3707 = vld [vmem:[#allocation15 + $0x9bc] sm:$0xff]
    %v3708 = vld [vmem:[#allocation15 + $0x9c4] sm:$0xff]
    %v3709 = vld [vmem:[#allocation15 + $0x9cc] sm:$0xff]
    %v3710 = vld [vmem:[#allocation15 + $0x9d4] sm:$0xf]
    %v3711 = vld [vmem:[#allocation15 + $0x9d8] sm:$0xff]
    %v3712 = vld [vmem:[#allocation15 + $0x9e0] sm:$0xff]
    %v3713 = vld [vmem:[#allocation15 + $0x9e8] sm:$0xff]
    %v3714 = vld [vmem:[#allocation15 + $0x9f0] sm:$0xf]
    %v3715 = vld [vmem:[#allocation15 + $0x9f4] sm:$0xff]
    %v3716 = vld [vmem:[#allocation15 + $0x9fc] sm:$0xff]
    %v3717 = vld [vmem:[#allocation15 + $0xa04] sm:$0xff]
    %v3718 = vld [vmem:[#allocation15 + $0xa0c] sm:$0xf]
    %v3719 = vld [vmem:[#allocation15 + $0xa10] sm:$0xff]
    %v3720 = vld [vmem:[#allocation15 + $0xa18] sm:$0xff]
    %v3721 = vld [vmem:[#allocation15 + $0xa20] sm:$0xff]
    %v3722 = vld [vmem:[#allocation15 + $0xa28] sm:$0xf]
    %v3723 = vld [vmem:[#allocation15 + $0xa2c] sm:$0xff]
    %v3724 = vld [vmem:[#allocation15 + $0xa34] sm:$0xff]
    %v3725 = vld [vmem:[#allocation15 + $0xa3c] sm:$0xff]
    %v3726 = vld [vmem:[#allocation15 + $0xa44] sm:$0xf]
    %v3727 = vld [vmem:[#allocation15 + $0xa48] sm:$0xff]
    %v3728 = vld [vmem:[#allocation15 + $0xa50] sm:$0xff]
    %v3729 = vld [vmem:[#allocation15 + $0xa58] sm:$0xff]
    %v3730 = vld [vmem:[#allocation15 + $0xa60] sm:$0xf]
    %v3731 = vld [vmem:[#allocation15 + $0xa64] sm:$0xff]
    %v3732 = vld [vmem:[#allocation15 + $0xa6c] sm:$0xff]
    %v3733 = vld [vmem:[#allocation15 + $0xa74] sm:$0xff]
    %v3734 = vld [vmem:[#allocation15 + $0xa7c] sm:$0xf]
    %v3735 = vld [vmem:[#allocation15 + $0xa80] sm:$0xff]
    %v3736 = vld [vmem:[#allocation15 + $0xa88] sm:$0xff]
    %v3737 = vld [vmem:[#allocation15 + $0xa90] sm:$0xff]
    %v3738 = vld [vmem:[#allocation15 + $0xa98] sm:$0xf]
    %v3739 = vld [vmem:[#allocation15 + $0xa9c] sm:$0xff]
    %v3740 = vld [vmem:[#allocation15 + $0xaa4] sm:$0xff]
    %v3741 = vld [vmem:[#allocation15 + $0xaac] sm:$0xff]
    %v3742 = vld [vmem:[#allocation15 + $0xab4] sm:$0xf]
    %v3743 = vld [vmem:[#allocation15 + $0xab8] sm:$0xff]
    %v3744 = vld [vmem:[#allocation15 + $0xac0] sm:$0xff]
    %v3745 = vld [vmem:[#allocation15 + $0xac8] sm:$0xff]
    %v3746 = vld [vmem:[#allocation15 + $0xad0] sm:$0xf]
    %v3747 = vld [vmem:[#allocation15 + $0xad4] sm:$0xff]
    %v3748 = vld [vmem:[#allocation15 + $0xadc] sm:$0xff]
    %v3749 = vld [vmem:[#allocation15 + $0xae4] sm:$0xff]
    %v3750 = vld [vmem:[#allocation15 + $0xaec] sm:$0xf]
    %v3751 = vld [vmem:[#allocation15 + $0xaf0] sm:$0xff]
    %v3752 = vld [vmem:[#allocation15 + $0xaf8] sm:$0xff]
    %v3753 = vld [vmem:[#allocation15 + $0xb00] sm:$0xff]
    %v3754 = vld [vmem:[#allocation15 + $0xb08] sm:$0xf]
    %v3755 = vld [vmem:[#allocation15 + $0xb0c] sm:$0xff]
    %v3756 = vld [vmem:[#allocation15 + $0xb14] sm:$0xff]
    %v3757 = vld [vmem:[#allocation15 + $0xb1c] sm:$0xff]
    %v3758 = vld [vmem:[#allocation15 + $0xb24] sm:$0xf]
    %v3759 = vld [vmem:[#allocation15 + $0xb28] sm:$0xff]
    %v3760 = vld [vmem:[#allocation15 + $0xb30] sm:$0xff]
    %v3761 = vld [vmem:[#allocation15 + $0xb38] sm:$0xff]
    %v3762 = vld [vmem:[#allocation15 + $0xb40] sm:$0xf]
    %v3763 = vld [vmem:[#allocation15 + $0xb44] sm:$0xff]
    %v3764 = vld [vmem:[#allocation15 + $0xb4c] sm:$0xff]
    %v3765 = vld [vmem:[#allocation15 + $0xb54] sm:$0xff]
    %v3766 = vld [vmem:[#allocation15 + $0xb5c] sm:$0xf]
    %v3767 = vld [vmem:[#allocation15 + $0xb60] sm:$0xff]
    %v3768 = vld [vmem:[#allocation15 + $0xb68] sm:$0xff]
    %v3769 = vld [vmem:[#allocation15 + $0xb70] sm:$0xff]
    %v3770 = vld [vmem:[#allocation15 + $0xb78] sm:$0xf]
    %v3771 = vld [vmem:[#allocation15 + $0xb7c] sm:$0xff]
    %v3772 = vld [vmem:[#allocation15 + $0xb84] sm:$0xff]
    %v3773 = vld [vmem:[#allocation15 + $0xb8c] sm:$0xff]
    %v3774 = vld [vmem:[#allocation15 + $0xb94] sm:$0xf]
    %v3775 = vld [vmem:[#allocation15 + $0xb98] sm:$0xff]
    %v3776 = vld [vmem:[#allocation15 + $0xba0] sm:$0xff]
    %v3777 = vld [vmem:[#allocation15 + $0xba8] sm:$0xff]
    %v3778 = vld [vmem:[#allocation15 + $0xbb0] sm:$0xf]
    %v3779 = vld [vmem:[#allocation15 + $0xbb4] sm:$0xff]
    %v3780 = vld [vmem:[#allocation15 + $0xbbc] sm:$0xff]
    %v3781 = vld [vmem:[#allocation15 + $0xbc4] sm:$0xff]
    %v3782 = vld [vmem:[#allocation15 + $0xbcc] sm:$0xf]
    %v3783 = vld [vmem:[#allocation15 + $0xbd0] sm:$0xff]
    %v3784 = vld [vmem:[#allocation15 + $0xbd8] sm:$0xff]
    %v3785 = vld [vmem:[#allocation15 + $0xbe0] sm:$0xff]
    %v3786 = vld [vmem:[#allocation15 + $0xbe8] sm:$0xf]
    %v3787 = vld [vmem:[#allocation15 + $0xbec] sm:$0xff]
    %v3788 = vld [vmem:[#allocation15 + $0xbf4] sm:$0xff]
    %v3789 = vld [vmem:[#allocation15 + $0xbfc] sm:$0xff]
    %v3790 = vld [vmem:[#allocation15 + $0xc04] sm:$0xf]
    %v3791 = vld [vmem:[#allocation15 + $0xc08] sm:$0xff]
    %v3792 = vld [vmem:[#allocation15 + $0xc10] sm:$0xff]
    %v3793 = vld [vmem:[#allocation15 + $0xc18] sm:$0xff]
    %v3794 = vld [vmem:[#allocation15 + $0xc20] sm:$0xf]
    %v3795 = vld [vmem:[#allocation15 + $0xc24] sm:$0xff]
    %v3796 = vld [vmem:[#allocation15 + $0xc2c] sm:$0xff]
    %v3797 = vld [vmem:[#allocation15 + $0xc34] sm:$0xff]
    %v3798 = vld [vmem:[#allocation15 + $0xc3c] sm:$0xf]
    %v3799 = vld [vmem:[#allocation15 + $0xc40] sm:$0xff]
    %v3800 = vld [vmem:[#allocation15 + $0xc48] sm:$0xff]
    %v3801 = vld [vmem:[#allocation15 + $0xc50] sm:$0xff]
    %v3802 = vld [vmem:[#allocation15 + $0xc58] sm:$0xf]
    %v3803 = vld [vmem:[#allocation15 + $0xc5c] sm:$0xff]
    %v3804 = vld [vmem:[#allocation15 + $0xc64] sm:$0xff]
    %v3805 = vld [vmem:[#allocation15 + $0xc6c] sm:$0xff]
    %v3806 = vld [vmem:[#allocation15 + $0xc74] sm:$0xf]
    %v3807 = vld [vmem:[#allocation15 + $0xc78] sm:$0xff]
    %v3808 = vld [vmem:[#allocation15 + $0xc80] sm:$0xff]
    %v3809 = vld [vmem:[#allocation15 + $0xc88] sm:$0xff]
    %v3810 = vld [vmem:[#allocation15 + $0xc90] sm:$0xf]
    %v3811 = vld [vmem:[#allocation15 + $0xc94] sm:$0xff]
    %v3812 = vld [vmem:[#allocation15 + $0xc9c] sm:$0xff]
    %v3813 = vld [vmem:[#allocation15 + $0xca4] sm:$0xff]
    %v3814 = vld [vmem:[#allocation15 + $0xcac] sm:$0xf]
    %v3815 = vld [vmem:[#allocation15 + $0xcb0] sm:$0xff]
    %v3816 = vld [vmem:[#allocation15 + $0xcb8] sm:$0xff]
    %v3817 = vld [vmem:[#allocation15 + $0xcc0] sm:$0xff]
    %v3818 = vld [vmem:[#allocation15 + $0xcc8] sm:$0xf]
    %v3819 = vld [vmem:[#allocation15 + $0xccc] sm:$0xff]
    %v3820 = vld [vmem:[#allocation15 + $0xcd4] sm:$0xff]
    %v3821 = vld [vmem:[#allocation15 + $0xcdc] sm:$0xff]
    %v3822 = vld [vmem:[#allocation15 + $0xce4] sm:$0xf]
    %v3823 = vld [vmem:[#allocation15 + $0xce8] sm:$0xff]
    %v3824 = vld [vmem:[#allocation15 + $0xcf0] sm:$0xff]
    %v3825 = vld [vmem:[#allocation15 + $0xcf8] sm:$0xff]
    %v3826 = vld [vmem:[#allocation15 + $0xd00] sm:$0xf]
    %v3827 = vld [vmem:[#allocation15 + $0xd04] sm:$0xff]
    %v3828 = vld [vmem:[#allocation15 + $0xd0c] sm:$0xff]
    %v3829 = vld [vmem:[#allocation15 + $0xd14] sm:$0xff]
    %v3830 = vld [vmem:[#allocation15 + $0xd1c] sm:$0xf]
    %v3831 = vld [vmem:[#allocation15 + $0xd20] sm:$0xff]
    %v3832 = vld [vmem:[#allocation15 + $0xd28] sm:$0xff]
    %v3833 = vld [vmem:[#allocation15 + $0xd30] sm:$0xff]
    %v3834 = vld [vmem:[#allocation15 + $0xd38] sm:$0xf]
    %v3835 = vld [vmem:[#allocation15 + $0xd3c] sm:$0xff]
    %v3836 = vld [vmem:[#allocation15 + $0xd44] sm:$0xff]
    %v3837 = vld [vmem:[#allocation15 + $0xd4c] sm:$0xff]
    %v3838 = vld [vmem:[#allocation15 + $0xd54] sm:$0xf]
    %v3839 = vld [vmem:[#allocation15 + $0xd58] sm:$0xff]
    %v3840 = vld [vmem:[#allocation15 + $0xd60] sm:$0xff]
    %v3841 = vld [vmem:[#allocation15 + $0xd68] sm:$0xff]
    %v3842 = vld [vmem:[#allocation15 + $0xd70] sm:$0xf]
    %v3843 = vld [vmem:[#allocation15 + $0xd74] sm:$0xff]
    %v3844 = vld [vmem:[#allocation15 + $0xd7c] sm:$0xff]
    %v3845 = vld [vmem:[#allocation15 + $0xd84] sm:$0xff]
    %v3846 = vld [vmem:[#allocation15 + $0xd8c] sm:$0xf]
    %v3847 = vld [vmem:[#allocation15 + $0xd90] sm:$0xff]
    %v3848 = vld [vmem:[#allocation15 + $0xd98] sm:$0xff]
    %v3849 = vld [vmem:[#allocation15 + $0xda0] sm:$0xff]
    %v3850 = vld [vmem:[#allocation15 + $0xda8] sm:$0xf]
    %v3851 = vld [vmem:[#allocation15 + $0xdac] sm:$0xff]
    %v3852 = vld [vmem:[#allocation15 + $0xdb4] sm:$0xff]
    %v3853 = vld [vmem:[#allocation15 + $0xdbc] sm:$0xff]
    %v3854 = vld [vmem:[#allocation15 + $0xdc4] sm:$0xf]
    %v3855 = vld [vmem:[#allocation15 + $0xdc8] sm:$0xff]
    %v3856 = vld [vmem:[#allocation15 + $0xdd0] sm:$0xff]
    %v3857 = vld [vmem:[#allocation15 + $0xdd8] sm:$0xff]
    %v3858 = vld [vmem:[#allocation15 + $0xde0] sm:$0xf]
    %v3859 = vld [vmem:[#allocation15 + $0xde4] sm:$0xff]
    %v3860 = vld [vmem:[#allocation15 + $0xdec] sm:$0xff]
    %v3861 = vld [vmem:[#allocation15 + $0xdf4] sm:$0xff]
    %v3862 = vld [vmem:[#allocation15 + $0xdfc] sm:$0xf]
    %v3863 = vld [vmem:[#allocation16] sm:$0xff]
    %v3865 = vperm.slane %v3863, 0
    %v3866 = vperm.slane %v3863, 1
    %v3867 = vperm.slane %v3863, 2
    %v3868 = vperm.slane %v3863, 3
    %v3869 = vperm.slane %v3863, 4
    %v3870 = vperm.slane %v3863, 5
    %v3871 = vperm.slane %v3863, 6
    %v4391 = vunpack.c.l.b16 %v3351
    %v4392 = vunpack.c.h.b16 %v3351
    %v4393 = vunpack.c.l.b16 %v3352
    %v4394 = vunpack.c.h.b16 %v3352
    %v4395 = vunpack.c.l.b16 %v3353
    %v4396 = vunpack.c.h.b16 %v3353
    %v4397 = vunpack.c.l.b16 %v3354
    %v4398 = vunpack.c.l.b16 %v3355
    %v4399 = vunpack.c.h.b16 %v3355
    %v4400 = vunpack.c.l.b16 %v3356
    %v4401 = vunpack.c.h.b16 %v3356
    %v4402 = vunpack.c.l.b16 %v3357
    %v4403 = vunpack.c.h.b16 %v3357
    %v4404 = vunpack.c.l.b16 %v3358
    %v4405 = vunpack.c.l.b16 %v3359
    %v4406 = vunpack.c.h.b16 %v3359
    %v4407 = vunpack.c.l.b16 %v3360
    %v4408 = vunpack.c.h.b16 %v3360
    %v4409 = vunpack.c.l.b16 %v3361
    %v4410 = vunpack.c.h.b16 %v3361
    %v4411 = vunpack.c.l.b16 %v3362
    %v4412 = vunpack.c.l.b16 %v3363
    %v4413 = vunpack.c.h.b16 %v3363
    %v4414 = vunpack.c.l.b16 %v3364
    %v4415 = vunpack.c.h.b16 %v3364
    %v4416 = vunpack.c.l.b16 %v3365
    %v4417 = vunpack.c.h.b16 %v3365
    %v4418 = vunpack.c.l.b16 %v3366
    %v4419 = vunpack.c.l.b16 %v3367
    %v4420 = vunpack.c.h.b16 %v3367
    %v4421 = vunpack.c.l.b16 %v3368
    %v4422 = vunpack.c.h.b16 %v3368
    %v4423 = vunpack.c.l.b16 %v3369
    %v4424 = vunpack.c.h.b16 %v3369
    %v4425 = vunpack.c.l.b16 %v3370
    %v4426 = vunpack.c.l.b16 %v3371
    %v4427 = vunpack.c.h.b16 %v3371
    %v4428 = vunpack.c.l.b16 %v3372
    %v4429 = vunpack.c.h.b16 %v3372
    %v4430 = vunpack.c.l.b16 %v3373
    %v4431 = vunpack.c.h.b16 %v3373
    %v4432 = vunpack.c.l.b16 %v3374
    %v4433 = vunpack.c.l.b16 %v3375
    %v4434 = vunpack.c.h.b16 %v3375
    %v4435 = vunpack.c.l.b16 %v3376
    %v4436 = vunpack.c.h.b16 %v3376
    %v4437 = vunpack.c.l.b16 %v3377
    %v4438 = vunpack.c.h.b16 %v3377
    %v4439 = vunpack.c.l.b16 %v3378
    %v4440 = vunpack.c.l.b16 %v3379
    %v4441 = vunpack.c.h.b16 %v3379
    %v4442 = vunpack.c.l.b16 %v3380
    %v4443 = vunpack.c.h.b16 %v3380
    %v4444 = vunpack.c.l.b16 %v3381
    %v4445 = vunpack.c.h.b16 %v3381
    %v4446 = vunpack.c.l.b16 %v3382
    %v4447 = vunpack.c.l.b16 %v3383
    %v4448 = vunpack.c.h.b16 %v3383
    %v4449 = vunpack.c.l.b16 %v3384
    %v4450 = vunpack.c.h.b16 %v3384
    %v4451 = vunpack.c.l.b16 %v3385
    %v4452 = vunpack.c.h.b16 %v3385
    %v4453 = vunpack.c.l.b16 %v3386
    %v4454 = vunpack.c.l.b16 %v3387
    %v4455 = vunpack.c.h.b16 %v3387
    %v4456 = vunpack.c.l.b16 %v3388
    %v4457 = vunpack.c.h.b16 %v3388
    %v4458 = vunpack.c.l.b16 %v3389
    %v4459 = vunpack.c.h.b16 %v3389
    %v4460 = vunpack.c.l.b16 %v3390
    %v4461 = vunpack.c.l.b16 %v3391
    %v4462 = vunpack.c.h.b16 %v3391
    %v4463 = vunpack.c.l.b16 %v3392
    %v4464 = vunpack.c.h.b16 %v3392
    %v4465 = vunpack.c.l.b16 %v3393
    %v4466 = vunpack.c.h.b16 %v3393
    %v4467 = vunpack.c.l.b16 %v3394
    %v4468 = vunpack.c.l.b16 %v3395
    %v4469 = vunpack.c.h.b16 %v3395
    %v4470 = vunpack.c.l.b16 %v3396
    %v4471 = vunpack.c.h.b16 %v3396
    %v4472 = vunpack.c.l.b16 %v3397
    %v4473 = vunpack.c.h.b16 %v3397
    %v4474 = vunpack.c.l.b16 %v3398
    %v4475 = vunpack.c.l.b16 %v3399
    %v4476 = vunpack.c.h.b16 %v3399
    %v4477 = vunpack.c.l.b16 %v3400
    %v4478 = vunpack.c.h.b16 %v3400
    %v4479 = vunpack.c.l.b16 %v3401
    %v4480 = vunpack.c.h.b16 %v3401
    %v4481 = vunpack.c.l.b16 %v3402
    %v4482 = vunpack.c.l.b16 %v3403
    %v4483 = vunpack.c.h.b16 %v3403
    %v4484 = vunpack.c.l.b16 %v3404
    %v4485 = vunpack.c.h.b16 %v3404
    %v4486 = vunpack.c.l.b16 %v3405
    %v4487 = vunpack.c.h.b16 %v3405
    %v4488 = vunpack.c.l.b16 %v3406
    %v4489 = vunpack.c.l.b16 %v3407
    %v4490 = vunpack.c.h.b16 %v3407
    %v4491 = vunpack.c.l.b16 %v3408
    %v4492 = vunpack.c.h.b16 %v3408
    %v4493 = vunpack.c.l.b16 %v3409
    %v4494 = vunpack.c.h.b16 %v3409
    %v4495 = vunpack.c.l.b16 %v3410
    %v4496 = vunpack.c.l.b16 %v3411
    %v4497 = vunpack.c.h.b16 %v3411
    %v4498 = vunpack.c.l.b16 %v3412
    %v4499 = vunpack.c.h.b16 %v3412
    %v4500 = vunpack.c.l.b16 %v3413
    %v4501 = vunpack.c.h.b16 %v3413
    %v4502 = vunpack.c.l.b16 %v3414
    %v4503 = vunpack.c.l.b16 %v3415
    %v4504 = vunpack.c.h.b16 %v3415
    %v4505 = vunpack.c.l.b16 %v3416
    %v4506 = vunpack.c.h.b16 %v3416
    %v4507 = vunpack.c.l.b16 %v3417
    %v4508 = vunpack.c.h.b16 %v3417
    %v4509 = vunpack.c.l.b16 %v3418
    %v4510 = vunpack.c.l.b16 %v3419
    %v4511 = vunpack.c.h.b16 %v3419
    %v4512 = vunpack.c.l.b16 %v3420
    %v4513 = vunpack.c.h.b16 %v3420
    %v4514 = vunpack.c.l.b16 %v3421
    %v4515 = vunpack.c.h.b16 %v3421
    %v4516 = vunpack.c.l.b16 %v3422
    %v4517 = vunpack.c.l.b16 %v3423
    %v4518 = vunpack.c.h.b16 %v3423
    %v4519 = vunpack.c.l.b16 %v3424
    %v4520 = vunpack.c.h.b16 %v3424
    %v4521 = vunpack.c.l.b16 %v3425
    %v4522 = vunpack.c.h.b16 %v3425
    %v4523 = vunpack.c.l.b16 %v3426
    %v4524 = vunpack.c.l.b16 %v3427
    %v4525 = vunpack.c.h.b16 %v3427
    %v4526 = vunpack.c.l.b16 %v3428
    %v4527 = vunpack.c.h.b16 %v3428
    %v4528 = vunpack.c.l.b16 %v3429
    %v4529 = vunpack.c.h.b16 %v3429
    %v4530 = vunpack.c.l.b16 %v3430
    %v4531 = vunpack.c.l.b16 %v3431
    %v4532 = vunpack.c.h.b16 %v3431
    %v4533 = vunpack.c.l.b16 %v3432
    %v4534 = vunpack.c.h.b16 %v3432
    %v4535 = vunpack.c.l.b16 %v3433
    %v4536 = vunpack.c.h.b16 %v3433
    %v4537 = vunpack.c.l.b16 %v3434
    %v4538 = vunpack.c.l.b16 %v3435
    %v4539 = vunpack.c.h.b16 %v3435
    %v4540 = vunpack.c.l.b16 %v3436
    %v4541 = vunpack.c.h.b16 %v3436
    %v4542 = vunpack.c.l.b16 %v3437
    %v4543 = vunpack.c.h.b16 %v3437
    %v4544 = vunpack.c.l.b16 %v3438
    %v4545 = vunpack.c.l.b16 %v3439
    %v4546 = vunpack.c.h.b16 %v3439
    %v4547 = vunpack.c.l.b16 %v3440
    %v4548 = vunpack.c.h.b16 %v3440
    %v4549 = vunpack.c.l.b16 %v3441
    %v4550 = vunpack.c.h.b16 %v3441
    %v4551 = vunpack.c.l.b16 %v3442
    %v4552 = vunpack.c.l.b16 %v3443
    %v4553 = vunpack.c.h.b16 %v3443
    %v4554 = vunpack.c.l.b16 %v3444
    %v4555 = vunpack.c.h.b16 %v3444
    %v4556 = vunpack.c.l.b16 %v3445
    %v4557 = vunpack.c.h.b16 %v3445
    %v4558 = vunpack.c.l.b16 %v3446
    %v4559 = vunpack.c.l.b16 %v3447
    %v4560 = vunpack.c.h.b16 %v3447
    %v4561 = vunpack.c.l.b16 %v3448
    %v4562 = vunpack.c.h.b16 %v3448
    %v4563 = vunpack.c.l.b16 %v3449
    %v4564 = vunpack.c.h.b16 %v3449
    %v4565 = vunpack.c.l.b16 %v3450
    %v4566 = vunpack.c.l.b16 %v3451
    %v4567 = vunpack.c.h.b16 %v3451
    %v4568 = vunpack.c.l.b16 %v3452
    %v4569 = vunpack.c.h.b16 %v3452
    %v4570 = vunpack.c.l.b16 %v3453
    %v4571 = vunpack.c.h.b16 %v3453
    %v4572 = vunpack.c.l.b16 %v3454
    %v4573 = vunpack.c.l.b16 %v3455
    %v4574 = vunpack.c.h.b16 %v3455
    %v4575 = vunpack.c.l.b16 %v3456
    %v4576 = vunpack.c.h.b16 %v3456
    %v4577 = vunpack.c.l.b16 %v3457
    %v4578 = vunpack.c.h.b16 %v3457
    %v4579 = vunpack.c.l.b16 %v3458
    %v4580 = vunpack.c.l.b16 %v3459
    %v4581 = vunpack.c.h.b16 %v3459
    %v4582 = vunpack.c.l.b16 %v3460
    %v4583 = vunpack.c.h.b16 %v3460
    %v4584 = vunpack.c.l.b16 %v3461
    %v4585 = vunpack.c.h.b16 %v3461
    %v4586 = vunpack.c.l.b16 %v3462
    %v4587 = vunpack.c.l.b16 %v3463
    %v4588 = vunpack.c.h.b16 %v3463
    %v4589 = vunpack.c.l.b16 %v3464
    %v4590 = vunpack.c.h.b16 %v3464
    %v4591 = vunpack.c.l.b16 %v3465
    %v4592 = vunpack.c.h.b16 %v3465
    %v4593 = vunpack.c.l.b16 %v3466
    %v4594 = vunpack.c.l.b16 %v3467
    %v4595 = vunpack.c.h.b16 %v3467
    %v4596 = vunpack.c.l.b16 %v3468
    %v4597 = vunpack.c.h.b16 %v3468
    %v4598 = vunpack.c.l.b16 %v3469
    %v4599 = vunpack.c.h.b16 %v3469
    %v4600 = vunpack.c.l.b16 %v3470
    %v4601 = vunpack.c.l.b16 %v3471
    %v4602 = vunpack.c.h.b16 %v3471
    %v4603 = vunpack.c.l.b16 %v3472
    %v4604 = vunpack.c.h.b16 %v3472
    %v4605 = vunpack.c.l.b16 %v3473
    %v4606 = vunpack.c.h.b16 %v3473
    %v4607 = vunpack.c.l.b16 %v3474
    %v4608 = vunpack.c.l.b16 %v3475
    %v4609 = vunpack.c.h.b16 %v3475
    %v4610 = vunpack.c.l.b16 %v3476
    %v4611 = vunpack.c.h.b16 %v3476
    %v4612 = vunpack.c.l.b16 %v3477
    %v4613 = vunpack.c.h.b16 %v3477
    %v4614 = vunpack.c.l.b16 %v3478
    %v4615 = vunpack.c.l.b16 %v3479
    %v4616 = vunpack.c.h.b16 %v3479
    %v4617 = vunpack.c.l.b16 %v3480
    %v4618 = vunpack.c.h.b16 %v3480
    %v4619 = vunpack.c.l.b16 %v3481
    %v4620 = vunpack.c.h.b16 %v3481
    %v4621 = vunpack.c.l.b16 %v3482
    %v4622 = vunpack.c.l.b16 %v3483
    %v4623 = vunpack.c.h.b16 %v3483
    %v4624 = vunpack.c.l.b16 %v3484
    %v4625 = vunpack.c.h.b16 %v3484
    %v4626 = vunpack.c.l.b16 %v3485
    %v4627 = vunpack.c.h.b16 %v3485
    %v4628 = vunpack.c.l.b16 %v3486
    %v4629 = vunpack.c.l.b16 %v3487
    %v4630 = vunpack.c.h.b16 %v3487
    %v4631 = vunpack.c.l.b16 %v3488
    %v4632 = vunpack.c.h.b16 %v3488
    %v4633 = vunpack.c.l.b16 %v3489
    %v4634 = vunpack.c.h.b16 %v3489
    %v4635 = vunpack.c.l.b16 %v3490
    %v4636 = vunpack.c.l.b16 %v3491
    %v4637 = vunpack.c.h.b16 %v3491
    %v4638 = vunpack.c.l.b16 %v3492
    %v4639 = vunpack.c.h.b16 %v3492
    %v4640 = vunpack.c.l.b16 %v3493
    %v4641 = vunpack.c.h.b16 %v3493
    %v4642 = vunpack.c.l.b16 %v3494
    %v4643 = vunpack.c.l.b16 %v3495
    %v4644 = vunpack.c.h.b16 %v3495
    %v4645 = vunpack.c.l.b16 %v3496
    %v4646 = vunpack.c.h.b16 %v3496
    %v4647 = vunpack.c.l.b16 %v3497
    %v4648 = vunpack.c.h.b16 %v3497
    %v4649 = vunpack.c.l.b16 %v3498
    %v4650 = vunpack.c.l.b16 %v3499
    %v4651 = vunpack.c.h.b16 %v3499
    %v4652 = vunpack.c.l.b16 %v3500
    %v4653 = vunpack.c.h.b16 %v3500
    %v4654 = vunpack.c.l.b16 %v3501
    %v4655 = vunpack.c.h.b16 %v3501
    %v4656 = vunpack.c.l.b16 %v3502
    %v4657 = vunpack.c.l.b16 %v3503
    %v4658 = vunpack.c.h.b16 %v3503
    %v4659 = vunpack.c.l.b16 %v3504
    %v4660 = vunpack.c.h.b16 %v3504
    %v4661 = vunpack.c.l.b16 %v3505
    %v4662 = vunpack.c.h.b16 %v3505
    %v4663 = vunpack.c.l.b16 %v3506
    %v4664 = vunpack.c.l.b16 %v3507
    %v4665 = vunpack.c.h.b16 %v3507
    %v4666 = vunpack.c.l.b16 %v3508
    %v4667 = vunpack.c.h.b16 %v3508
    %v4668 = vunpack.c.l.b16 %v3509
    %v4669 = vunpack.c.h.b16 %v3509
    %v4670 = vunpack.c.l.b16 %v3510
    %v4671 = vunpack.c.l.b16 %v3511
    %v4672 = vunpack.c.h.b16 %v3511
    %v4673 = vunpack.c.l.b16 %v3512
    %v4674 = vunpack.c.h.b16 %v3512
    %v4675 = vunpack.c.l.b16 %v3513
    %v4676 = vunpack.c.h.b16 %v3513
    %v4677 = vunpack.c.l.b16 %v3514
    %v4678 = vunpack.c.l.b16 %v3515
    %v4679 = vunpack.c.h.b16 %v3515
    %v4680 = vunpack.c.l.b16 %v3516
    %v4681 = vunpack.c.h.b16 %v3516
    %v4682 = vunpack.c.l.b16 %v3517
    %v4683 = vunpack.c.h.b16 %v3517
    %v4684 = vunpack.c.l.b16 %v3518
    %v4685 = vunpack.c.l.b16 %v3519
    %v4686 = vunpack.c.h.b16 %v3519
    %v4687 = vunpack.c.l.b16 %v3520
    %v4688 = vunpack.c.h.b16 %v3520
    %v4689 = vunpack.c.l.b16 %v3521
    %v4690 = vunpack.c.h.b16 %v3521
    %v4691 = vunpack.c.l.b16 %v3522
    %v4692 = vunpack.c.l.b16 %v3523
    %v4693 = vunpack.c.h.b16 %v3523
    %v4694 = vunpack.c.l.b16 %v3524
    %v4695 = vunpack.c.h.b16 %v3524
    %v4696 = vunpack.c.l.b16 %v3525
    %v4697 = vunpack.c.h.b16 %v3525
    %v4698 = vunpack.c.l.b16 %v3526
    %v4699 = vunpack.c.l.b16 %v3527
    %v4700 = vunpack.c.h.b16 %v3527
    %v4701 = vunpack.c.l.b16 %v3528
    %v4702 = vunpack.c.h.b16 %v3528
    %v4703 = vunpack.c.l.b16 %v3529
    %v4704 = vunpack.c.h.b16 %v3529
    %v4705 = vunpack.c.l.b16 %v3530
    %v4706 = vunpack.c.l.b16 %v3531
    %v4707 = vunpack.c.h.b16 %v3531
    %v4708 = vunpack.c.l.b16 %v3532
    %v4709 = vunpack.c.h.b16 %v3532
    %v4710 = vunpack.c.l.b16 %v3533
    %v4711 = vunpack.c.h.b16 %v3533
    %v4712 = vunpack.c.l.b16 %v3534
    %v4713 = vunpack.c.l.b16 %v3535
    %v4714 = vunpack.c.h.b16 %v3535
    %v4715 = vunpack.c.l.b16 %v3536
    %v4716 = vunpack.c.h.b16 %v3536
    %v4717 = vunpack.c.l.b16 %v3537
    %v4718 = vunpack.c.h.b16 %v3537
    %v4719 = vunpack.c.l.b16 %v3538
    %v4720 = vunpack.c.l.b16 %v3539
    %v4721 = vunpack.c.h.b16 %v3539
    %v4722 = vunpack.c.l.b16 %v3540
    %v4723 = vunpack.c.h.b16 %v3540
    %v4724 = vunpack.c.l.b16 %v3541
    %v4725 = vunpack.c.h.b16 %v3541
    %v4726 = vunpack.c.l.b16 %v3542
    %v4727 = vunpack.c.l.b16 %v3543
    %v4728 = vunpack.c.h.b16 %v3543
    %v4729 = vunpack.c.l.b16 %v3544
    %v4730 = vunpack.c.h.b16 %v3544
    %v4731 = vunpack.c.l.b16 %v3545
    %v4732 = vunpack.c.h.b16 %v3545
    %v4733 = vunpack.c.l.b16 %v3546
    %v4734 = vunpack.c.l.b16 %v3547
    %v4735 = vunpack.c.h.b16 %v3547
    %v4736 = vunpack.c.l.b16 %v3548
    %v4737 = vunpack.c.h.b16 %v3548
    %v4738 = vunpack.c.l.b16 %v3549
    %v4739 = vunpack.c.h.b16 %v3549
    %v4740 = vunpack.c.l.b16 %v3550
    %v4741 = vunpack.c.l.b16 %v3551
    %v4742 = vunpack.c.h.b16 %v3551
    %v4743 = vunpack.c.l.b16 %v3552
    %v4744 = vunpack.c.h.b16 %v3552
    %v4745 = vunpack.c.l.b16 %v3553
    %v4746 = vunpack.c.h.b16 %v3553
    %v4747 = vunpack.c.l.b16 %v3554
    %v4748 = vunpack.c.l.b16 %v3555
    %v4749 = vunpack.c.h.b16 %v3555
    %v4750 = vunpack.c.l.b16 %v3556
    %v4751 = vunpack.c.h.b16 %v3556
    %v4752 = vunpack.c.l.b16 %v3557
    %v4753 = vunpack.c.h.b16 %v3557
    %v4754 = vunpack.c.l.b16 %v3558
    %v4755 = vunpack.c.l.b16 %v3559
    %v4756 = vunpack.c.h.b16 %v3559
    %v4757 = vunpack.c.l.b16 %v3560
    %v4758 = vunpack.c.h.b16 %v3560
    %v4759 = vunpack.c.l.b16 %v3561
    %v4760 = vunpack.c.h.b16 %v3561
    %v4761 = vunpack.c.l.b16 %v3562
    %v4762 = vunpack.c.l.b16 %v3563
    %v4763 = vunpack.c.h.b16 %v3563
    %v4764 = vunpack.c.l.b16 %v3564
    %v4765 = vunpack.c.h.b16 %v3564
    %v4766 = vunpack.c.l.b16 %v3565
    %v4767 = vunpack.c.h.b16 %v3565
    %v4768 = vunpack.c.l.b16 %v3566
    %v4769 = vunpack.c.l.b16 %v3567
    %v4770 = vunpack.c.h.b16 %v3567
    %v4771 = vunpack.c.l.b16 %v3568
    %v4772 = vunpack.c.h.b16 %v3568
    %v4773 = vunpack.c.l.b16 %v3569
    %v4774 = vunpack.c.h.b16 %v3569
    %v4775 = vunpack.c.l.b16 %v3570
    %v4776 = vunpack.c.l.b16 %v3571
    %v4777 = vunpack.c.h.b16 %v3571
    %v4778 = vunpack.c.l.b16 %v3572
    %v4779 = vunpack.c.h.b16 %v3572
    %v4780 = vunpack.c.l.b16 %v3573
    %v4781 = vunpack.c.h.b16 %v3573
    %v4782 = vunpack.c.l.b16 %v3574
    %v4783 = vunpack.c.l.b16 %v3575
    %v4784 = vunpack.c.h.b16 %v3575
    %v4785 = vunpack.c.l.b16 %v3576
    %v4786 = vunpack.c.h.b16 %v3576
    %v4787 = vunpack.c.l.b16 %v3577
    %v4788 = vunpack.c.h.b16 %v3577
    %v4789 = vunpack.c.l.b16 %v3578
    %v4790 = vunpack.c.l.b16 %v3579
    %v4791 = vunpack.c.h.b16 %v3579
    %v4792 = vunpack.c.l.b16 %v3580
    %v4793 = vunpack.c.h.b16 %v3580
    %v4794 = vunpack.c.l.b16 %v3581
    %v4795 = vunpack.c.h.b16 %v3581
    %v4796 = vunpack.c.l.b16 %v3582
    %v4797 = vunpack.c.l.b16 %v3583
    %v4798 = vunpack.c.h.b16 %v3583
    %v4799 = vunpack.c.l.b16 %v3584
    %v4800 = vunpack.c.h.b16 %v3584
    %v4801 = vunpack.c.l.b16 %v3585
    %v4802 = vunpack.c.h.b16 %v3585
    %v4803 = vunpack.c.l.b16 %v3586
    %v4804 = vunpack.c.l.b16 %v3587
    %v4805 = vunpack.c.h.b16 %v3587
    %v4806 = vunpack.c.l.b16 %v3588
    %v4807 = vunpack.c.h.b16 %v3588
    %v4808 = vunpack.c.l.b16 %v3589
    %v4809 = vunpack.c.h.b16 %v3589
    %v4810 = vunpack.c.l.b16 %v3590
    %v4811 = vunpack.c.l.b16 %v3591
    %v4812 = vunpack.c.h.b16 %v3591
    %v4813 = vunpack.c.l.b16 %v3592
    %v4814 = vunpack.c.h.b16 %v3592
    %v4815 = vunpack.c.l.b16 %v3593
    %v4816 = vunpack.c.h.b16 %v3593
    %v4817 = vunpack.c.l.b16 %v3594
    %v4818 = vunpack.c.l.b16 %v3595
    %v4819 = vunpack.c.h.b16 %v3595
    %v4820 = vunpack.c.l.b16 %v3596
    %v4821 = vunpack.c.h.b16 %v3596
    %v4822 = vunpack.c.l.b16 %v3597
    %v4823 = vunpack.c.h.b16 %v3597
    %v4824 = vunpack.c.l.b16 %v3598
    %v4825 = vunpack.c.l.b16 %v3599
    %v4826 = vunpack.c.h.b16 %v3599
    %v4827 = vunpack.c.l.b16 %v3600
    %v4828 = vunpack.c.h.b16 %v3600
    %v4829 = vunpack.c.l.b16 %v3601
    %v4830 = vunpack.c.h.b16 %v3601
    %v4831 = vunpack.c.l.b16 %v3602
    %v4832 = vunpack.c.l.b16 %v3603
    %v4833 = vunpack.c.h.b16 %v3603
    %v4834 = vunpack.c.l.b16 %v3604
    %v4835 = vunpack.c.h.b16 %v3604
    %v4836 = vunpack.c.l.b16 %v3605
    %v4837 = vunpack.c.h.b16 %v3605
    %v4838 = vunpack.c.l.b16 %v3606
    %v4839 = vunpack.c.l.b16 %v3607
    %v4840 = vunpack.c.h.b16 %v3607
    %v4841 = vunpack.c.l.b16 %v3608
    %v4842 = vunpack.c.h.b16 %v3608
    %v4843 = vunpack.c.l.b16 %v3609
    %v4844 = vunpack.c.h.b16 %v3609
    %v4845 = vunpack.c.l.b16 %v3610
    %v4846 = vunpack.c.l.b16 %v3611
    %v4847 = vunpack.c.h.b16 %v3611
    %v4848 = vunpack.c.l.b16 %v3612
    %v4849 = vunpack.c.h.b16 %v3612
    %v4850 = vunpack.c.l.b16 %v3613
    %v4851 = vunpack.c.h.b16 %v3613
    %v4852 = vunpack.c.l.b16 %v3614
    %v4853 = vunpack.c.l.b16 %v3615
    %v4854 = vunpack.c.h.b16 %v3615
    %v4855 = vunpack.c.l.b16 %v3616
    %v4856 = vunpack.c.h.b16 %v3616
    %v4857 = vunpack.c.l.b16 %v3617
    %v4858 = vunpack.c.h.b16 %v3617
    %v4859 = vunpack.c.l.b16 %v3618
    %v4860 = vunpack.c.l.b16 %v3619
    %v4861 = vunpack.c.h.b16 %v3619
    %v4862 = vunpack.c.l.b16 %v3620
    %v4863 = vunpack.c.h.b16 %v3620
    %v4864 = vunpack.c.l.b16 %v3621
    %v4865 = vunpack.c.h.b16 %v3621
    %v4866 = vunpack.c.l.b16 %v3622
    %v4867 = vunpack.c.l.b16 %v3623
    %v4868 = vunpack.c.h.b16 %v3623
    %v4869 = vunpack.c.l.b16 %v3624
    %v4870 = vunpack.c.h.b16 %v3624
    %v4871 = vunpack.c.l.b16 %v3625
    %v4872 = vunpack.c.h.b16 %v3625
    %v4873 = vunpack.c.l.b16 %v3626
    %v4874 = vunpack.c.l.b16 %v3627
    %v4875 = vunpack.c.h.b16 %v3627
    %v4876 = vunpack.c.l.b16 %v3628
    %v4877 = vunpack.c.h.b16 %v3628
    %v4878 = vunpack.c.l.b16 %v3629
    %v4879 = vunpack.c.h.b16 %v3629
    %v4880 = vunpack.c.l.b16 %v3630
    %v4881 = vunpack.c.l.b16 %v3631
    %v4882 = vunpack.c.h.b16 %v3631
    %v4883 = vunpack.c.l.b16 %v3632
    %v4884 = vunpack.c.h.b16 %v3632
    %v4885 = vunpack.c.l.b16 %v3633
    %v4886 = vunpack.c.h.b16 %v3633
    %v4887 = vunpack.c.l.b16 %v3634
    %v4888 = vunpack.c.l.b16 %v3635
    %v4889 = vunpack.c.h.b16 %v3635
    %v4890 = vunpack.c.l.b16 %v3636
    %v4891 = vunpack.c.h.b16 %v3636
    %v4892 = vunpack.c.l.b16 %v3637
    %v4893 = vunpack.c.h.b16 %v3637
    %v4894 = vunpack.c.l.b16 %v3638
    %v4895 = vunpack.c.l.b16 %v3639
    %v4896 = vunpack.c.h.b16 %v3639
    %v4897 = vunpack.c.l.b16 %v3640
    %v4898 = vunpack.c.h.b16 %v3640
    %v4899 = vunpack.c.l.b16 %v3641
    %v4900 = vunpack.c.h.b16 %v3641
    %v4901 = vunpack.c.l.b16 %v3642
    %v4902 = vunpack.c.l.b16 %v3643
    %v4903 = vunpack.c.h.b16 %v3643
    %v4904 = vunpack.c.l.b16 %v3644
    %v4905 = vunpack.c.h.b16 %v3644
    %v4906 = vunpack.c.l.b16 %v3645
    %v4907 = vunpack.c.h.b16 %v3645
    %v4908 = vunpack.c.l.b16 %v3646
    %v4909 = vunpack.c.l.b16 %v3647
    %v4910 = vunpack.c.h.b16 %v3647
    %v4911 = vunpack.c.l.b16 %v3648
    %v4912 = vunpack.c.h.b16 %v3648
    %v4913 = vunpack.c.l.b16 %v3649
    %v4914 = vunpack.c.h.b16 %v3649
    %v4915 = vunpack.c.l.b16 %v3650
    %v4916 = vunpack.c.l.b16 %v3651
    %v4917 = vunpack.c.h.b16 %v3651
    %v4918 = vunpack.c.l.b16 %v3652
    %v4919 = vunpack.c.h.b16 %v3652
    %v4920 = vunpack.c.l.b16 %v3653
    %v4921 = vunpack.c.h.b16 %v3653
    %v4922 = vunpack.c.l.b16 %v3654
    %v4923 = vunpack.c.l.b16 %v3655
    %v4924 = vunpack.c.h.b16 %v3655
    %v4925 = vunpack.c.l.b16 %v3656
    %v4926 = vunpack.c.h.b16 %v3656
    %v4927 = vunpack.c.l.b16 %v3657
    %v4928 = vunpack.c.h.b16 %v3657
    %v4929 = vunpack.c.l.b16 %v3658
    %v4930 = vunpack.c.l.b16 %v3659
    %v4931 = vunpack.c.h.b16 %v3659
    %v4932 = vunpack.c.l.b16 %v3660
    %v4933 = vunpack.c.h.b16 %v3660
    %v4934 = vunpack.c.l.b16 %v3661
    %v4935 = vunpack.c.h.b16 %v3661
    %v4936 = vunpack.c.l.b16 %v3662
    %v4937 = vunpack.c.l.b16 %v3663
    %v4938 = vunpack.c.h.b16 %v3663
    %v4939 = vunpack.c.l.b16 %v3664
    %v4940 = vunpack.c.h.b16 %v3664
    %v4941 = vunpack.c.l.b16 %v3665
    %v4942 = vunpack.c.h.b16 %v3665
    %v4943 = vunpack.c.l.b16 %v3666
    %v4944 = vunpack.c.l.b16 %v3667
    %v4945 = vunpack.c.h.b16 %v3667
    %v4946 = vunpack.c.l.b16 %v3668
    %v4947 = vunpack.c.h.b16 %v3668
    %v4948 = vunpack.c.l.b16 %v3669
    %v4949 = vunpack.c.h.b16 %v3669
    %v4950 = vunpack.c.l.b16 %v3670
    %v4951 = vunpack.c.l.b16 %v3671
    %v4952 = vunpack.c.h.b16 %v3671
    %v4953 = vunpack.c.l.b16 %v3672
    %v4954 = vunpack.c.h.b16 %v3672
    %v4955 = vunpack.c.l.b16 %v3673
    %v4956 = vunpack.c.h.b16 %v3673
    %v4957 = vunpack.c.l.b16 %v3674
    %v4958 = vunpack.c.l.b16 %v3675
    %v4959 = vunpack.c.h.b16 %v3675
    %v4960 = vunpack.c.l.b16 %v3676
    %v4961 = vunpack.c.h.b16 %v3676
    %v4962 = vunpack.c.l.b16 %v3677
    %v4963 = vunpack.c.h.b16 %v3677
    %v4964 = vunpack.c.l.b16 %v3678
    %v4965 = vunpack.c.l.b16 %v3679
    %v4966 = vunpack.c.h.b16 %v3679
    %v4967 = vunpack.c.l.b16 %v3680
    %v4968 = vunpack.c.h.b16 %v3680
    %v4969 = vunpack.c.l.b16 %v3681
    %v4970 = vunpack.c.h.b16 %v3681
    %v4971 = vunpack.c.l.b16 %v3682
    %v4972 = vunpack.c.l.b16 %v3683
    %v4973 = vunpack.c.h.b16 %v3683
    %v4974 = vunpack.c.l.b16 %v3684
    %v4975 = vunpack.c.h.b16 %v3684
    %v4976 = vunpack.c.l.b16 %v3685
    %v4977 = vunpack.c.h.b16 %v3685
    %v4978 = vunpack.c.l.b16 %v3686
    %v4979 = vunpack.c.l.b16 %v3687
    %v4980 = vunpack.c.h.b16 %v3687
    %v4981 = vunpack.c.l.b16 %v3688
    %v4982 = vunpack.c.h.b16 %v3688
    %v4983 = vunpack.c.l.b16 %v3689
    %v4984 = vunpack.c.h.b16 %v3689
    %v4985 = vunpack.c.l.b16 %v3690
    %v4986 = vunpack.c.l.b16 %v3691
    %v4987 = vunpack.c.h.b16 %v3691
    %v4988 = vunpack.c.l.b16 %v3692
    %v4989 = vunpack.c.h.b16 %v3692
    %v4990 = vunpack.c.l.b16 %v3693
    %v4991 = vunpack.c.h.b16 %v3693
    %v4992 = vunpack.c.l.b16 %v3694
    %v4993 = vunpack.c.l.b16 %v3695
    %v4994 = vunpack.c.h.b16 %v3695
    %v4995 = vunpack.c.l.b16 %v3696
    %v4996 = vunpack.c.h.b16 %v3696
    %v4997 = vunpack.c.l.b16 %v3697
    %v4998 = vunpack.c.h.b16 %v3697
    %v4999 = vunpack.c.l.b16 %v3698
    %v5000 = vunpack.c.l.b16 %v3699
    %v5001 = vunpack.c.h.b16 %v3699
    %v5002 = vunpack.c.l.b16 %v3700
    %v5003 = vunpack.c.h.b16 %v3700
    %v5004 = vunpack.c.l.b16 %v3701
    %v5005 = vunpack.c.h.b16 %v3701
    %v5006 = vunpack.c.l.b16 %v3702
    %v5007 = vunpack.c.l.b16 %v3703
    %v5008 = vunpack.c.h.b16 %v3703
    %v5009 = vunpack.c.l.b16 %v3704
    %v5010 = vunpack.c.h.b16 %v3704
    %v5011 = vunpack.c.l.b16 %v3705
    %v5012 = vunpack.c.h.b16 %v3705
    %v5013 = vunpack.c.l.b16 %v3706
    %v5014 = vunpack.c.l.b16 %v3707
    %v5015 = vunpack.c.h.b16 %v3707
    %v5016 = vunpack.c.l.b16 %v3708
    %v5017 = vunpack.c.h.b16 %v3708
    %v5018 = vunpack.c.l.b16 %v3709
    %v5019 = vunpack.c.h.b16 %v3709
    %v5020 = vunpack.c.l.b16 %v3710
    %v5021 = vunpack.c.l.b16 %v3711
    %v5022 = vunpack.c.h.b16 %v3711
    %v5023 = vunpack.c.l.b16 %v3712
    %v5024 = vunpack.c.h.b16 %v3712
    %v5025 = vunpack.c.l.b16 %v3713
    %v5026 = vunpack.c.h.b16 %v3713
    %v5027 = vunpack.c.l.b16 %v3714
    %v5028 = vunpack.c.l.b16 %v3715
    %v5029 = vunpack.c.h.b16 %v3715
    %v5030 = vunpack.c.l.b16 %v3716
    %v5031 = vunpack.c.h.b16 %v3716
    %v5032 = vunpack.c.l.b16 %v3717
    %v5033 = vunpack.c.h.b16 %v3717
    %v5034 = vunpack.c.l.b16 %v3718
    %v5035 = vunpack.c.l.b16 %v3719
    %v5036 = vunpack.c.h.b16 %v3719
    %v5037 = vunpack.c.l.b16 %v3720
    %v5038 = vunpack.c.h.b16 %v3720
    %v5039 = vunpack.c.l.b16 %v3721
    %v5040 = vunpack.c.h.b16 %v3721
    %v5041 = vunpack.c.l.b16 %v3722
    %v5042 = vunpack.c.l.b16 %v3723
    %v5043 = vunpack.c.h.b16 %v3723
    %v5044 = vunpack.c.l.b16 %v3724
    %v5045 = vunpack.c.h.b16 %v3724
    %v5046 = vunpack.c.l.b16 %v3725
    %v5047 = vunpack.c.h.b16 %v3725
    %v5048 = vunpack.c.l.b16 %v3726
    %v5049 = vunpack.c.l.b16 %v3727
    %v5050 = vunpack.c.h.b16 %v3727
    %v5051 = vunpack.c.l.b16 %v3728
    %v5052 = vunpack.c.h.b16 %v3728
    %v5053 = vunpack.c.l.b16 %v3729
    %v5054 = vunpack.c.h.b16 %v3729
    %v5055 = vunpack.c.l.b16 %v3730
    %v5056 = vunpack.c.l.b16 %v3731
    %v5057 = vunpack.c.h.b16 %v3731
    %v5058 = vunpack.c.l.b16 %v3732
    %v5059 = vunpack.c.h.b16 %v3732
    %v5060 = vunpack.c.l.b16 %v3733
    %v5061 = vunpack.c.h.b16 %v3733
    %v5062 = vunpack.c.l.b16 %v3734
    %v5063 = vunpack.c.l.b16 %v3735
    %v5064 = vunpack.c.h.b16 %v3735
    %v5065 = vunpack.c.l.b16 %v3736
    %v5066 = vunpack.c.h.b16 %v3736
    %v5067 = vunpack.c.l.b16 %v3737
    %v5068 = vunpack.c.h.b16 %v3737
    %v5069 = vunpack.c.l.b16 %v3738
    %v5070 = vunpack.c.l.b16 %v3739
    %v5071 = vunpack.c.h.b16 %v3739
    %v5072 = vunpack.c.l.b16 %v3740
    %v5073 = vunpack.c.h.b16 %v3740
    %v5074 = vunpack.c.l.b16 %v3741
    %v5075 = vunpack.c.h.b16 %v3741
    %v5076 = vunpack.c.l.b16 %v3742
    %v5077 = vunpack.c.l.b16 %v3743
    %v5078 = vunpack.c.h.b16 %v3743
    %v5079 = vunpack.c.l.b16 %v3744
    %v5080 = vunpack.c.h.b16 %v3744
    %v5081 = vunpack.c.l.b16 %v3745
    %v5082 = vunpack.c.h.b16 %v3745
    %v5083 = vunpack.c.l.b16 %v3746
    %v5084 = vunpack.c.l.b16 %v3747
    %v5085 = vunpack.c.h.b16 %v3747
    %v5086 = vunpack.c.l.b16 %v3748
    %v5087 = vunpack.c.h.b16 %v3748
    %v5088 = vunpack.c.l.b16 %v3749
    %v5089 = vunpack.c.h.b16 %v3749
    %v5090 = vunpack.c.l.b16 %v3750
    %v5091 = vunpack.c.l.b16 %v3751
    %v5092 = vunpack.c.h.b16 %v3751
    %v5093 = vunpack.c.l.b16 %v3752
    %v5094 = vunpack.c.h.b16 %v3752
    %v5095 = vunpack.c.l.b16 %v3753
    %v5096 = vunpack.c.h.b16 %v3753
    %v5097 = vunpack.c.l.b16 %v3754
    %v5098 = vunpack.c.l.b16 %v3755
    %v5099 = vunpack.c.h.b16 %v3755
    %v5100 = vunpack.c.l.b16 %v3756
    %v5101 = vunpack.c.h.b16 %v3756
    %v5102 = vunpack.c.l.b16 %v3757
    %v5103 = vunpack.c.h.b16 %v3757
    %v5104 = vunpack.c.l.b16 %v3758
    %v5105 = vunpack.c.l.b16 %v3759
    %v5106 = vunpack.c.h.b16 %v3759
    %v5107 = vunpack.c.l.b16 %v3760
    %v5108 = vunpack.c.h.b16 %v3760
    %v5109 = vunpack.c.l.b16 %v3761
    %v5110 = vunpack.c.h.b16 %v3761
    %v5111 = vunpack.c.l.b16 %v3762
    %v5112 = vunpack.c.l.b16 %v3763
    %v5113 = vunpack.c.h.b16 %v3763
    %v5114 = vunpack.c.l.b16 %v3764
    %v5115 = vunpack.c.h.b16 %v3764
    %v5116 = vunpack.c.l.b16 %v3765
    %v5117 = vunpack.c.h.b16 %v3765
    %v5118 = vunpack.c.l.b16 %v3766
    %v5119 = vunpack.c.l.b16 %v3767
    %v5120 = vunpack.c.h.b16 %v3767
    %v5121 = vunpack.c.l.b16 %v3768
    %v5122 = vunpack.c.h.b16 %v3768
    %v5123 = vunpack.c.l.b16 %v3769
    %v5124 = vunpack.c.h.b16 %v3769
    %v5125 = vunpack.c.l.b16 %v3770
    %v5126 = vunpack.c.l.b16 %v3771
    %v5127 = vunpack.c.h.b16 %v3771
    %v5128 = vunpack.c.l.b16 %v3772
    %v5129 = vunpack.c.h.b16 %v3772
    %v5130 = vunpack.c.l.b16 %v3773
    %v5131 = vunpack.c.h.b16 %v3773
    %v5132 = vunpack.c.l.b16 %v3774
    %v5133 = vunpack.c.l.b16 %v3775
    %v5134 = vunpack.c.h.b16 %v3775
    %v5135 = vunpack.c.l.b16 %v3776
    %v5136 = vunpack.c.h.b16 %v3776
    %v5137 = vunpack.c.l.b16 %v3777
    %v5138 = vunpack.c.h.b16 %v3777
    %v5139 = vunpack.c.l.b16 %v3778
    %v5140 = vunpack.c.l.b16 %v3779
    %v5141 = vunpack.c.h.b16 %v3779
    %v5142 = vunpack.c.l.b16 %v3780
    %v5143 = vunpack.c.h.b16 %v3780
    %v5144 = vunpack.c.l.b16 %v3781
    %v5145 = vunpack.c.h.b16 %v3781
    %v5146 = vunpack.c.l.b16 %v3782
    %v5147 = vunpack.c.l.b16 %v3783
    %v5148 = vunpack.c.h.b16 %v3783
    %v5149 = vunpack.c.l.b16 %v3784
    %v5150 = vunpack.c.h.b16 %v3784
    %v5151 = vunpack.c.l.b16 %v3785
    %v5152 = vunpack.c.h.b16 %v3785
    %v5153 = vunpack.c.l.b16 %v3786
    %v5154 = vunpack.c.l.b16 %v3787
    %v5155 = vunpack.c.h.b16 %v3787
    %v5156 = vunpack.c.l.b16 %v3788
    %v5157 = vunpack.c.h.b16 %v3788
    %v5158 = vunpack.c.l.b16 %v3789
    %v5159 = vunpack.c.h.b16 %v3789
    %v5160 = vunpack.c.l.b16 %v3790
    %v5161 = vunpack.c.l.b16 %v3791
    %v5162 = vunpack.c.h.b16 %v3791
    %v5163 = vunpack.c.l.b16 %v3792
    %v5164 = vunpack.c.h.b16 %v3792
    %v5165 = vunpack.c.l.b16 %v3793
    %v5166 = vunpack.c.h.b16 %v3793
    %v5167 = vunpack.c.l.b16 %v3794
    %v5168 = vunpack.c.l.b16 %v3795
    %v5169 = vunpack.c.h.b16 %v3795
    %v5170 = vunpack.c.l.b16 %v3796
    %v5171 = vunpack.c.h.b16 %v3796
    %v5172 = vunpack.c.l.b16 %v3797
    %v5173 = vunpack.c.h.b16 %v3797
    %v5174 = vunpack.c.l.b16 %v3798
    %v5175 = vunpack.c.l.b16 %v3799
    %v5176 = vunpack.c.h.b16 %v3799
    %v5177 = vunpack.c.l.b16 %v3800
    %v5178 = vunpack.c.h.b16 %v3800
    %v5179 = vunpack.c.l.b16 %v3801
    %v5180 = vunpack.c.h.b16 %v3801
    %v5181 = vunpack.c.l.b16 %v3802
    %v5182 = vunpack.c.l.b16 %v3803
    %v5183 = vunpack.c.h.b16 %v3803
    %v5184 = vunpack.c.l.b16 %v3804
    %v5185 = vunpack.c.h.b16 %v3804
    %v5186 = vunpack.c.l.b16 %v3805
    %v5187 = vunpack.c.h.b16 %v3805
    %v5188 = vunpack.c.l.b16 %v3806
    %v5189 = vunpack.c.l.b16 %v3807
    %v5190 = vunpack.c.h.b16 %v3807
    %v5191 = vunpack.c.l.b16 %v3808
    %v5192 = vunpack.c.h.b16 %v3808
    %v5193 = vunpack.c.l.b16 %v3809
    %v5194 = vunpack.c.h.b16 %v3809
    %v5195 = vunpack.c.l.b16 %v3810
    %v5196 = vunpack.c.l.b16 %v3811
    %v5197 = vunpack.c.h.b16 %v3811
    %v5198 = vunpack.c.l.b16 %v3812
    %v5199 = vunpack.c.h.b16 %v3812
    %v5200 = vunpack.c.l.b16 %v3813
    %v5201 = vunpack.c.h.b16 %v3813
    %v5202 = vunpack.c.l.b16 %v3814
    %v5203 = vunpack.c.l.b16 %v3815
    %v5204 = vunpack.c.h.b16 %v3815
    %v5205 = vunpack.c.l.b16 %v3816
    %v5206 = vunpack.c.h.b16 %v3816
    %v5207 = vunpack.c.l.b16 %v3817
    %v5208 = vunpack.c.h.b16 %v3817
    %v5209 = vunpack.c.l.b16 %v3818
    %v5210 = vunpack.c.l.b16 %v3819
    %v5211 = vunpack.c.h.b16 %v3819
    %v5212 = vunpack.c.l.b16 %v3820
    %v5213 = vunpack.c.h.b16 %v3820
    %v5214 = vunpack.c.l.b16 %v3821
    %v5215 = vunpack.c.h.b16 %v3821
    %v5216 = vunpack.c.l.b16 %v3822
    %v5217 = vunpack.c.l.b16 %v3823
    %v5218 = vunpack.c.h.b16 %v3823
    %v5219 = vunpack.c.l.b16 %v3824
    %v5220 = vunpack.c.h.b16 %v3824
    %v5221 = vunpack.c.l.b16 %v3825
    %v5222 = vunpack.c.h.b16 %v3825
    %v5223 = vunpack.c.l.b16 %v3826
    %v5224 = vunpack.c.l.b16 %v3827
    %v5225 = vunpack.c.h.b16 %v3827
    %v5226 = vunpack.c.l.b16 %v3828
    %v5227 = vunpack.c.h.b16 %v3828
    %v5228 = vunpack.c.l.b16 %v3829
    %v5229 = vunpack.c.h.b16 %v3829
    %v5230 = vunpack.c.l.b16 %v3830
    %v5231 = vunpack.c.l.b16 %v3831
    %v5232 = vunpack.c.h.b16 %v3831
    %v5233 = vunpack.c.l.b16 %v3832
    %v5234 = vunpack.c.h.b16 %v3832
    %v5235 = vunpack.c.l.b16 %v3833
    %v5236 = vunpack.c.h.b16 %v3833
    %v5237 = vunpack.c.l.b16 %v3834
    %v5238 = vunpack.c.l.b16 %v3835
    %v5239 = vunpack.c.h.b16 %v3835
    %v5240 = vunpack.c.l.b16 %v3836
    %v5241 = vunpack.c.h.b16 %v3836
    %v5242 = vunpack.c.l.b16 %v3837
    %v5243 = vunpack.c.h.b16 %v3837
    %v5244 = vunpack.c.l.b16 %v3838
    %v5245 = vunpack.c.l.b16 %v3839
    %v5246 = vunpack.c.h.b16 %v3839
    %v5247 = vunpack.c.l.b16 %v3840
    %v5248 = vunpack.c.h.b16 %v3840
    %v5249 = vunpack.c.l.b16 %v3841
    %v5250 = vunpack.c.h.b16 %v3841
    %v5251 = vunpack.c.l.b16 %v3842
    %v5252 = vunpack.c.l.b16 %v3843
    %v5253 = vunpack.c.h.b16 %v3843
    %v5254 = vunpack.c.l.b16 %v3844
    %v5255 = vunpack.c.h.b16 %v3844
    %v5256 = vunpack.c.l.b16 %v3845
    %v5257 = vunpack.c.h.b16 %v3845
    %v5258 = vunpack.c.l.b16 %v3846
    %v5259 = vunpack.c.l.b16 %v3847
    %v5260 = vunpack.c.h.b16 %v3847
    %v5261 = vunpack.c.l.b16 %v3848
    %v5262 = vunpack.c.h.b16 %v3848
    %v5263 = vunpack.c.l.b16 %v3849
    %v5264 = vunpack.c.h.b16 %v3849
    %v5265 = vunpack.c.l.b16 %v3850
    %v5266 = vunpack.c.l.b16 %v3851
    %v5267 = vunpack.c.h.b16 %v3851
    %v5268 = vunpack.c.l.b16 %v3852
    %v5269 = vunpack.c.h.b16 %v3852
    %v5270 = vunpack.c.l.b16 %v3853
    %v5271 = vunpack.c.h.b16 %v3853
    %v5272 = vunpack.c.l.b16 %v3854
    %v5273 = vunpack.c.l.b16 %v3855
    %v5274 = vunpack.c.h.b16 %v3855
    %v5275 = vunpack.c.l.b16 %v3856
    %v5276 = vunpack.c.h.b16 %v3856
    %v5277 = vunpack.c.l.b16 %v3857
    %v5278 = vunpack.c.h.b16 %v3857
    %v5279 = vunpack.c.l.b16 %v3858
    %v5280 = vunpack.c.l.b16 %v3859
    %v5281 = vunpack.c.h.b16 %v3859
    %v5282 = vunpack.c.l.b16 %v3860
    %v5283 = vunpack.c.h.b16 %v3860
    %v5284 = vunpack.c.l.b16 %v3861
    %v5285 = vunpack.c.h.b16 %v3861
    %v5286 = vunpack.c.l.b16 %v3862
    %v5287 = vpack.c.b16 %v4398, %v4391
    %v5288 = vpack.c.b16 %v4399, %v4392
    %v5289 = vpack.c.b16 %v4400, %v4393
    %v5290 = vpack.c.b16 %v4401, %v4394
    %v5291 = vpack.c.b16 %v4402, %v4395
    %v5292 = vpack.c.b16 %v4403, %v4396
    %v5293 = vpack.c.b16 %v4404, %v4397
    %v5294 = vpack.c.b16 %v4412, %v4405
    %v5295 = vpack.c.b16 %v4413, %v4406
    %v5296 = vpack.c.b16 %v4414, %v4407
    %v5297 = vpack.c.b16 %v4415, %v4408
    %v5298 = vpack.c.b16 %v4416, %v4409
    %v5299 = vpack.c.b16 %v4417, %v4410
    %v5300 = vpack.c.b16 %v4418, %v4411
    %v5301 = vpack.c.b16 %v4426, %v4419
    %v5302 = vpack.c.b16 %v4427, %v4420
    %v5303 = vpack.c.b16 %v4428, %v4421
    %v5304 = vpack.c.b16 %v4429, %v4422
    %v5305 = vpack.c.b16 %v4430, %v4423
    %v5306 = vpack.c.b16 %v4431, %v4424
    %v5307 = vpack.c.b16 %v4432, %v4425
    %v5308 = vpack.c.b16 %v4440, %v4433
    %v5309 = vpack.c.b16 %v4441, %v4434
    %v5310 = vpack.c.b16 %v4442, %v4435
    %v5311 = vpack.c.b16 %v4443, %v4436
    %v5312 = vpack.c.b16 %v4444, %v4437
    %v5313 = vpack.c.b16 %v4445, %v4438
    %v5314 = vpack.c.b16 %v4446, %v4439
    %v5315 = vpack.c.b16 %v4454, %v4447
    %v5316 = vpack.c.b16 %v4455, %v4448
    %v5317 = vpack.c.b16 %v4456, %v4449
    %v5318 = vpack.c.b16 %v4457, %v4450
    %v5319 = vpack.c.b16 %v4458, %v4451
    %v5320 = vpack.c.b16 %v4459, %v4452
    %v5321 = vpack.c.b16 %v4460, %v4453
    %v5322 = vpack.c.b16 %v4468, %v4461
    %v5323 = vpack.c.b16 %v4469, %v4462
    %v5324 = vpack.c.b16 %v4470, %v4463
    %v5325 = vpack.c.b16 %v4471, %v4464
    %v5326 = vpack.c.b16 %v4472, %v4465
    %v5327 = vpack.c.b16 %v4473, %v4466
    %v5328 = vpack.c.b16 %v4474, %v4467
    %v5329 = vpack.c.b16 %v4482, %v4475
    %v5330 = vpack.c.b16 %v4483, %v4476
    %v5331 = vpack.c.b16 %v4484, %v4477
    %v5332 = vpack.c.b16 %v4485, %v4478
    %v5333 = vpack.c.b16 %v4486, %v4479
    %v5334 = vpack.c.b16 %v4487, %v4480
    %v5335 = vpack.c.b16 %v4488, %v4481
    %v5336 = vpack.c.b16 %v4496, %v4489
    %v5337 = vpack.c.b16 %v4497, %v4490
    %v5338 = vpack.c.b16 %v4498, %v4491
    %v5339 = vpack.c.b16 %v4499, %v4492
    %v5340 = vpack.c.b16 %v4500, %v4493
    %v5341 = vpack.c.b16 %v4501, %v4494
    %v5342 = vpack.c.b16 %v4502, %v4495
    %v5343 = vpack.c.b16 %v4510, %v4503
    %v5344 = vpack.c.b16 %v4511, %v4504
    %v5345 = vpack.c.b16 %v4512, %v4505
    %v5346 = vpack.c.b16 %v4513, %v4506
    %v5347 = vpack.c.b16 %v4514, %v4507
    %v5348 = vpack.c.b16 %v4515, %v4508
    %v5349 = vpack.c.b16 %v4516, %v4509
    %v5350 = vpack.c.b16 %v4524, %v4517
    %v5351 = vpack.c.b16 %v4525, %v4518
    %v5352 = vpack.c.b16 %v4526, %v4519
    %v5353 = vpack.c.b16 %v4527, %v4520
    %v5354 = vpack.c.b16 %v4528, %v4521
    %v5355 = vpack.c.b16 %v4529, %v4522
    %v5356 = vpack.c.b16 %v4530, %v4523
    %v5357 = vpack.c.b16 %v4538, %v4531
    %v5358 = vpack.c.b16 %v4539, %v4532
    %v5359 = vpack.c.b16 %v4540, %v4533
    %v5360 = vpack.c.b16 %v4541, %v4534
    %v5361 = vpack.c.b16 %v4542, %v4535
    %v5362 = vpack.c.b16 %v4543, %v4536
    %v5363 = vpack.c.b16 %v4544, %v4537
    %v5364 = vpack.c.b16 %v4552, %v4545
    %v5365 = vpack.c.b16 %v4553, %v4546
    %v5366 = vpack.c.b16 %v4554, %v4547
    %v5367 = vpack.c.b16 %v4555, %v4548
    %v5368 = vpack.c.b16 %v4556, %v4549
    %v5369 = vpack.c.b16 %v4557, %v4550
    %v5370 = vpack.c.b16 %v4558, %v4551
    %v5371 = vpack.c.b16 %v4566, %v4559
    %v5372 = vpack.c.b16 %v4567, %v4560
    %v5373 = vpack.c.b16 %v4568, %v4561
    %v5374 = vpack.c.b16 %v4569, %v4562
    %v5375 = vpack.c.b16 %v4570, %v4563
    %v5376 = vpack.c.b16 %v4571, %v4564
    %v5377 = vpack.c.b16 %v4572, %v4565
    %v5378 = vpack.c.b16 %v4580, %v4573
    %v5379 = vpack.c.b16 %v4581, %v4574
    %v5380 = vpack.c.b16 %v4582, %v4575
    %v5381 = vpack.c.b16 %v4583, %v4576
    %v5382 = vpack.c.b16 %v4584, %v4577
    %v5383 = vpack.c.b16 %v4585, %v4578
    %v5384 = vpack.c.b16 %v4586, %v4579
    %v5385 = vpack.c.b16 %v4594, %v4587
    %v5386 = vpack.c.b16 %v4595, %v4588
    %v5387 = vpack.c.b16 %v4596, %v4589
    %v5388 = vpack.c.b16 %v4597, %v4590
    %v5389 = vpack.c.b16 %v4598, %v4591
    %v5390 = vpack.c.b16 %v4599, %v4592
    %v5391 = vpack.c.b16 %v4600, %v4593
    %v5392 = vpack.c.b16 %v4608, %v4601
    %v5393 = vpack.c.b16 %v4609, %v4602
    %v5394 = vpack.c.b16 %v4610, %v4603
    %v5395 = vpack.c.b16 %v4611, %v4604
    %v5396 = vpack.c.b16 %v4612, %v4605
    %v5397 = vpack.c.b16 %v4613, %v4606
    %v5398 = vpack.c.b16 %v4614, %v4607
    %v5399 = vpack.c.b16 %v4622, %v4615
    %v5400 = vpack.c.b16 %v4623, %v4616
    %v5401 = vpack.c.b16 %v4624, %v4617
    %v5402 = vpack.c.b16 %v4625, %v4618
    %v5403 = vpack.c.b16 %v4626, %v4619
    %v5404 = vpack.c.b16 %v4627, %v4620
    %v5405 = vpack.c.b16 %v4628, %v4621
    %v5406 = vpack.c.b16 %v4636, %v4629
    %v5407 = vpack.c.b16 %v4637, %v4630
    %v5408 = vpack.c.b16 %v4638, %v4631
    %v5409 = vpack.c.b16 %v4639, %v4632
    %v5410 = vpack.c.b16 %v4640, %v4633
    %v5411 = vpack.c.b16 %v4641, %v4634
    %v5412 = vpack.c.b16 %v4642, %v4635
    %v5413 = vpack.c.b16 %v4650, %v4643
    %v5414 = vpack.c.b16 %v4651, %v4644
    %v5415 = vpack.c.b16 %v4652, %v4645
    %v5416 = vpack.c.b16 %v4653, %v4646
    %v5417 = vpack.c.b16 %v4654, %v4647
    %v5418 = vpack.c.b16 %v4655, %v4648
    %v5419 = vpack.c.b16 %v4656, %v4649
    %v5420 = vpack.c.b16 %v4664, %v4657
    %v5421 = vpack.c.b16 %v4665, %v4658
    %v5422 = vpack.c.b16 %v4666, %v4659
    %v5423 = vpack.c.b16 %v4667, %v4660
    %v5424 = vpack.c.b16 %v4668, %v4661
    %v5425 = vpack.c.b16 %v4669, %v4662
    %v5426 = vpack.c.b16 %v4670, %v4663
    %v5427 = vpack.c.b16 %v4678, %v4671
    %v5428 = vpack.c.b16 %v4679, %v4672
    %v5429 = vpack.c.b16 %v4680, %v4673
    %v5430 = vpack.c.b16 %v4681, %v4674
    %v5431 = vpack.c.b16 %v4682, %v4675
    %v5432 = vpack.c.b16 %v4683, %v4676
    %v5433 = vpack.c.b16 %v4684, %v4677
    %v5434 = vpack.c.b16 %v4692, %v4685
    %v5435 = vpack.c.b16 %v4693, %v4686
    %v5436 = vpack.c.b16 %v4694, %v4687
    %v5437 = vpack.c.b16 %v4695, %v4688
    %v5438 = vpack.c.b16 %v4696, %v4689
    %v5439 = vpack.c.b16 %v4697, %v4690
    %v5440 = vpack.c.b16 %v4698, %v4691
    %v5441 = vpack.c.b16 %v4706, %v4699
    %v5442 = vpack.c.b16 %v4707, %v4700
    %v5443 = vpack.c.b16 %v4708, %v4701
    %v5444 = vpack.c.b16 %v4709, %v4702
    %v5445 = vpack.c.b16 %v4710, %v4703
    %v5446 = vpack.c.b16 %v4711, %v4704
    %v5447 = vpack.c.b16 %v4712, %v4705
    %v5448 = vpack.c.b16 %v4720, %v4713
    %v5449 = vpack.c.b16 %v4721, %v4714
    %v5450 = vpack.c.b16 %v4722, %v4715
    %v5451 = vpack.c.b16 %v4723, %v4716
    %v5452 = vpack.c.b16 %v4724, %v4717
    %v5453 = vpack.c.b16 %v4725, %v4718
    %v5454 = vpack.c.b16 %v4726, %v4719
    %v5455 = vpack.c.b16 %v4734, %v4727
    %v5456 = vpack.c.b16 %v4735, %v4728
    %v5457 = vpack.c.b16 %v4736, %v4729
    %v5458 = vpack.c.b16 %v4737, %v4730
    %v5459 = vpack.c.b16 %v4738, %v4731
    %v5460 = vpack.c.b16 %v4739, %v4732
    %v5461 = vpack.c.b16 %v4740, %v4733
    %v5462 = vpack.c.b16 %v4748, %v4741
    %v5463 = vpack.c.b16 %v4749, %v4742
    %v5464 = vpack.c.b16 %v4750, %v4743
    %v5465 = vpack.c.b16 %v4751, %v4744
    %v5466 = vpack.c.b16 %v4752, %v4745
    %v5467 = vpack.c.b16 %v4753, %v4746
    %v5468 = vpack.c.b16 %v4754, %v4747
    %v5469 = vpack.c.b16 %v4762, %v4755
    %v5470 = vpack.c.b16 %v4763, %v4756
    %v5471 = vpack.c.b16 %v4764, %v4757
    %v5472 = vpack.c.b16 %v4765, %v4758
    %v5473 = vpack.c.b16 %v4766, %v4759
    %v5474 = vpack.c.b16 %v4767, %v4760
    %v5475 = vpack.c.b16 %v4768, %v4761
    %v5476 = vpack.c.b16 %v4776, %v4769
    %v5477 = vpack.c.b16 %v4777, %v4770
    %v5478 = vpack.c.b16 %v4778, %v4771
    %v5479 = vpack.c.b16 %v4779, %v4772
    %v5480 = vpack.c.b16 %v4780, %v4773
    %v5481 = vpack.c.b16 %v4781, %v4774
    %v5482 = vpack.c.b16 %v4782, %v4775
    %v5483 = vpack.c.b16 %v4790, %v4783
    %v5484 = vpack.c.b16 %v4791, %v4784
    %v5485 = vpack.c.b16 %v4792, %v4785
    %v5486 = vpack.c.b16 %v4793, %v4786
    %v5487 = vpack.c.b16 %v4794, %v4787
    %v5488 = vpack.c.b16 %v4795, %v4788
    %v5489 = vpack.c.b16 %v4796, %v4789
    %v5490 = vpack.c.b16 %v4804, %v4797
    %v5491 = vpack.c.b16 %v4805, %v4798
    %v5492 = vpack.c.b16 %v4806, %v4799
    %v5493 = vpack.c.b16 %v4807, %v4800
    %v5494 = vpack.c.b16 %v4808, %v4801
    %v5495 = vpack.c.b16 %v4809, %v4802
    %v5496 = vpack.c.b16 %v4810, %v4803
    %v5497 = vpack.c.b16 %v4818, %v4811
    %v5498 = vpack.c.b16 %v4819, %v4812
    %v5499 = vpack.c.b16 %v4820, %v4813
    %v5500 = vpack.c.b16 %v4821, %v4814
    %v5501 = vpack.c.b16 %v4822, %v4815
    %v5502 = vpack.c.b16 %v4823, %v4816
    %v5503 = vpack.c.b16 %v4824, %v4817
    %v5504 = vpack.c.b16 %v4832, %v4825
    %v5505 = vpack.c.b16 %v4833, %v4826
    %v5506 = vpack.c.b16 %v4834, %v4827
    %v5507 = vpack.c.b16 %v4835, %v4828
    %v5508 = vpack.c.b16 %v4836, %v4829
    %v5509 = vpack.c.b16 %v4837, %v4830
    %v5510 = vpack.c.b16 %v4838, %v4831
    %v5511 = vpack.c.b16 %v4846, %v4839
    %v5512 = vpack.c.b16 %v4847, %v4840
    %v5513 = vpack.c.b16 %v4848, %v4841
    %v5514 = vpack.c.b16 %v4849, %v4842
    %v5515 = vpack.c.b16 %v4850, %v4843
    %v5516 = vpack.c.b16 %v4851, %v4844
    %v5517 = vpack.c.b16 %v4852, %v4845
    %v5518 = vpack.c.b16 %v4860, %v4853
    %v5519 = vpack.c.b16 %v4861, %v4854
    %v5520 = vpack.c.b16 %v4862, %v4855
    %v5521 = vpack.c.b16 %v4863, %v4856
    %v5522 = vpack.c.b16 %v4864, %v4857
    %v5523 = vpack.c.b16 %v4865, %v4858
    %v5524 = vpack.c.b16 %v4866, %v4859
    %v5525 = vpack.c.b16 %v4874, %v4867
    %v5526 = vpack.c.b16 %v4875, %v4868
    %v5527 = vpack.c.b16 %v4876, %v4869
    %v5528 = vpack.c.b16 %v4877, %v4870
    %v5529 = vpack.c.b16 %v4878, %v4871
    %v5530 = vpack.c.b16 %v4879, %v4872
    %v5531 = vpack.c.b16 %v4880, %v4873
    %v5532 = vpack.c.b16 %v4888, %v4881
    %v5533 = vpack.c.b16 %v4889, %v4882
    %v5534 = vpack.c.b16 %v4890, %v4883
    %v5535 = vpack.c.b16 %v4891, %v4884
    %v5536 = vpack.c.b16 %v4892, %v4885
    %v5537 = vpack.c.b16 %v4893, %v4886
    %v5538 = vpack.c.b16 %v4894, %v4887
    %v5539 = vpack.c.b16 %v4902, %v4895
    %v5540 = vpack.c.b16 %v4903, %v4896
    %v5541 = vpack.c.b16 %v4904, %v4897
    %v5542 = vpack.c.b16 %v4905, %v4898
    %v5543 = vpack.c.b16 %v4906, %v4899
    %v5544 = vpack.c.b16 %v4907, %v4900
    %v5545 = vpack.c.b16 %v4908, %v4901
    %v5546 = vpack.c.b16 %v4916, %v4909
    %v5547 = vpack.c.b16 %v4917, %v4910
    %v5548 = vpack.c.b16 %v4918, %v4911
    %v5549 = vpack.c.b16 %v4919, %v4912
    %v5550 = vpack.c.b16 %v4920, %v4913
    %v5551 = vpack.c.b16 %v4921, %v4914
    %v5552 = vpack.c.b16 %v4922, %v4915
    %v5553 = vpack.c.b16 %v4930, %v4923
    %v5554 = vpack.c.b16 %v4931, %v4924
    %v5555 = vpack.c.b16 %v4932, %v4925
    %v5556 = vpack.c.b16 %v4933, %v4926
    %v5557 = vpack.c.b16 %v4934, %v4927
    %v5558 = vpack.c.b16 %v4935, %v4928
    %v5559 = vpack.c.b16 %v4936, %v4929
    %v5560 = vpack.c.b16 %v4944, %v4937
    %v5561 = vpack.c.b16 %v4945, %v4938
    %v5562 = vpack.c.b16 %v4946, %v4939
    %v5563 = vpack.c.b16 %v4947, %v4940
    %v5564 = vpack.c.b16 %v4948, %v4941
    %v5565 = vpack.c.b16 %v4949, %v4942
    %v5566 = vpack.c.b16 %v4950, %v4943
    %v5567 = vpack.c.b16 %v4958, %v4951
    %v5568 = vpack.c.b16 %v4959, %v4952
    %v5569 = vpack.c.b16 %v4960, %v4953
    %v5570 = vpack.c.b16 %v4961, %v4954
    %v5571 = vpack.c.b16 %v4962, %v4955
    %v5572 = vpack.c.b16 %v4963, %v4956
    %v5573 = vpack.c.b16 %v4964, %v4957
    %v5574 = vpack.c.b16 %v4972, %v4965
    %v5575 = vpack.c.b16 %v4973, %v4966
    %v5576 = vpack.c.b16 %v4974, %v4967
    %v5577 = vpack.c.b16 %v4975, %v4968
    %v5578 = vpack.c.b16 %v4976, %v4969
    %v5579 = vpack.c.b16 %v4977, %v4970
    %v5580 = vpack.c.b16 %v4978, %v4971
    %v5581 = vpack.c.b16 %v4986, %v4979
    %v5582 = vpack.c.b16 %v4987, %v4980
    %v5583 = vpack.c.b16 %v4988, %v4981
    %v5584 = vpack.c.b16 %v4989, %v4982
    %v5585 = vpack.c.b16 %v4990, %v4983
    %v5586 = vpack.c.b16 %v4991, %v4984
    %v5587 = vpack.c.b16 %v4992, %v4985
    %v5588 = vpack.c.b16 %v5000, %v4993
    %v5589 = vpack.c.b16 %v5001, %v4994
    %v5590 = vpack.c.b16 %v5002, %v4995
    %v5591 = vpack.c.b16 %v5003, %v4996
    %v5592 = vpack.c.b16 %v5004, %v4997
    %v5593 = vpack.c.b16 %v5005, %v4998
    %v5594 = vpack.c.b16 %v5006, %v4999
    %v5595 = vpack.c.b16 %v5014, %v5007
    %v5596 = vpack.c.b16 %v5015, %v5008
    %v5597 = vpack.c.b16 %v5016, %v5009
    %v5598 = vpack.c.b16 %v5017, %v5010
    %v5599 = vpack.c.b16 %v5018, %v5011
    %v5600 = vpack.c.b16 %v5019, %v5012
    %v5601 = vpack.c.b16 %v5020, %v5013
    %v5602 = vpack.c.b16 %v5028, %v5021
    %v5603 = vpack.c.b16 %v5029, %v5022
    %v5604 = vpack.c.b16 %v5030, %v5023
    %v5605 = vpack.c.b16 %v5031, %v5024
    %v5606 = vpack.c.b16 %v5032, %v5025
    %v5607 = vpack.c.b16 %v5033, %v5026
    %v5608 = vpack.c.b16 %v5034, %v5027
    %v5609 = vpack.c.b16 %v5042, %v5035
    %v5610 = vpack.c.b16 %v5043, %v5036
    %v5611 = vpack.c.b16 %v5044, %v5037
    %v5612 = vpack.c.b16 %v5045, %v5038
    %v5613 = vpack.c.b16 %v5046, %v5039
    %v5614 = vpack.c.b16 %v5047, %v5040
    %v5615 = vpack.c.b16 %v5048, %v5041
    %v5616 = vpack.c.b16 %v5056, %v5049
    %v5617 = vpack.c.b16 %v5057, %v5050
    %v5618 = vpack.c.b16 %v5058, %v5051
    %v5619 = vpack.c.b16 %v5059, %v5052
    %v5620 = vpack.c.b16 %v5060, %v5053
    %v5621 = vpack.c.b16 %v5061, %v5054
    %v5622 = vpack.c.b16 %v5062, %v5055
    %v5623 = vpack.c.b16 %v5070, %v5063
    %v5624 = vpack.c.b16 %v5071, %v5064
    %v5625 = vpack.c.b16 %v5072, %v5065
    %v5626 = vpack.c.b16 %v5073, %v5066
    %v5627 = vpack.c.b16 %v5074, %v5067
    %v5628 = vpack.c.b16 %v5075, %v5068
    %v5629 = vpack.c.b16 %v5076, %v5069
    %v5630 = vpack.c.b16 %v5084, %v5077
    %v5631 = vpack.c.b16 %v5085, %v5078
    %v5632 = vpack.c.b16 %v5086, %v5079
    %v5633 = vpack.c.b16 %v5087, %v5080
    %v5634 = vpack.c.b16 %v5088, %v5081
    %v5635 = vpack.c.b16 %v5089, %v5082
    %v5636 = vpack.c.b16 %v5090, %v5083
    %v5637 = vpack.c.b16 %v5098, %v5091
    %v5638 = vpack.c.b16 %v5099, %v5092
    %v5639 = vpack.c.b16 %v5100, %v5093
    %v5640 = vpack.c.b16 %v5101, %v5094
    %v5641 = vpack.c.b16 %v5102, %v5095
    %v5642 = vpack.c.b16 %v5103, %v5096
    %v5643 = vpack.c.b16 %v5104, %v5097
    %v5644 = vpack.c.b16 %v5112, %v5105
    %v5645 = vpack.c.b16 %v5113, %v5106
    %v5646 = vpack.c.b16 %v5114, %v5107
    %v5647 = vpack.c.b16 %v5115, %v5108
    %v5648 = vpack.c.b16 %v5116, %v5109
    %v5649 = vpack.c.b16 %v5117, %v5110
    %v5650 = vpack.c.b16 %v5118, %v5111
    %v5651 = vpack.c.b16 %v5126, %v5119
    %v5652 = vpack.c.b16 %v5127, %v5120
    %v5653 = vpack.c.b16 %v5128, %v5121
    %v5654 = vpack.c.b16 %v5129, %v5122
    %v5655 = vpack.c.b16 %v5130, %v5123
    %v5656 = vpack.c.b16 %v5131, %v5124
    %v5657 = vpack.c.b16 %v5132, %v5125
    %v5658 = vpack.c.b16 %v5140, %v5133
    %v5659 = vpack.c.b16 %v5141, %v5134
    %v5660 = vpack.c.b16 %v5142, %v5135
    %v5661 = vpack.c.b16 %v5143, %v5136
    %v5662 = vpack.c.b16 %v5144, %v5137
    %v5663 = vpack.c.b16 %v5145, %v5138
    %v5664 = vpack.c.b16 %v5146, %v5139
    %v5665 = vpack.c.b16 %v5154, %v5147
    %v5666 = vpack.c.b16 %v5155, %v5148
    %v5667 = vpack.c.b16 %v5156, %v5149
    %v5668 = vpack.c.b16 %v5157, %v5150
    %v5669 = vpack.c.b16 %v5158, %v5151
    %v5670 = vpack.c.b16 %v5159, %v5152
    %v5671 = vpack.c.b16 %v5160, %v5153
    %v5672 = vpack.c.b16 %v5168, %v5161
    %v5673 = vpack.c.b16 %v5169, %v5162
    %v5674 = vpack.c.b16 %v5170, %v5163
    %v5675 = vpack.c.b16 %v5171, %v5164
    %v5676 = vpack.c.b16 %v5172, %v5165
    %v5677 = vpack.c.b16 %v5173, %v5166
    %v5678 = vpack.c.b16 %v5174, %v5167
    %v5679 = vpack.c.b16 %v5182, %v5175
    %v5680 = vpack.c.b16 %v5183, %v5176
    %v5681 = vpack.c.b16 %v5184, %v5177
    %v5682 = vpack.c.b16 %v5185, %v5178
    %v5683 = vpack.c.b16 %v5186, %v5179
    %v5684 = vpack.c.b16 %v5187, %v5180
    %v5685 = vpack.c.b16 %v5188, %v5181
    %v5686 = vpack.c.b16 %v5196, %v5189
    %v5687 = vpack.c.b16 %v5197, %v5190
    %v5688 = vpack.c.b16 %v5198, %v5191
    %v5689 = vpack.c.b16 %v5199, %v5192
    %v5690 = vpack.c.b16 %v5200, %v5193
    %v5691 = vpack.c.b16 %v5201, %v5194
    %v5692 = vpack.c.b16 %v5202, %v5195
    %v5693 = vpack.c.b16 %v5210, %v5203
    %v5694 = vpack.c.b16 %v5211, %v5204
    %v5695 = vpack.c.b16 %v5212, %v5205
    %v5696 = vpack.c.b16 %v5213, %v5206
    %v5697 = vpack.c.b16 %v5214, %v5207
    %v5698 = vpack.c.b16 %v5215, %v5208
    %v5699 = vpack.c.b16 %v5216, %v5209
    %v5700 = vpack.c.b16 %v5224, %v5217
    %v5701 = vpack.c.b16 %v5225, %v5218
    %v5702 = vpack.c.b16 %v5226, %v5219
    %v5703 = vpack.c.b16 %v5227, %v5220
    %v5704 = vpack.c.b16 %v5228, %v5221
    %v5705 = vpack.c.b16 %v5229, %v5222
    %v5706 = vpack.c.b16 %v5230, %v5223
    %v5707 = vpack.c.b16 %v5238, %v5231
    %v5708 = vpack.c.b16 %v5239, %v5232
    %v5709 = vpack.c.b16 %v5240, %v5233
    %v5710 = vpack.c.b16 %v5241, %v5234
    %v5711 = vpack.c.b16 %v5242, %v5235
    %v5712 = vpack.c.b16 %v5243, %v5236
    %v5713 = vpack.c.b16 %v5244, %v5237
    %v5714 = vpack.c.b16 %v5252, %v5245
    %v5715 = vpack.c.b16 %v5253, %v5246
    %v5716 = vpack.c.b16 %v5254, %v5247
    %v5717 = vpack.c.b16 %v5255, %v5248
    %v5718 = vpack.c.b16 %v5256, %v5249
    %v5719 = vpack.c.b16 %v5257, %v5250
    %v5720 = vpack.c.b16 %v5258, %v5251
    %v5721 = vpack.c.b16 %v5266, %v5259
    %v5722 = vpack.c.b16 %v5267, %v5260
    %v5723 = vpack.c.b16 %v5268, %v5261
    %v5724 = vpack.c.b16 %v5269, %v5262
    %v5725 = vpack.c.b16 %v5270, %v5263
    %v5726 = vpack.c.b16 %v5271, %v5264
    %v5727 = vpack.c.b16 %v5272, %v5265
    %v5728 = vpack.c.b16 %v5280, %v5273
    %v5729 = vpack.c.b16 %v5281, %v5274
    %v5730 = vpack.c.b16 %v5282, %v5275
    %v5731 = vpack.c.b16 %v5283, %v5276
    %v5732 = vpack.c.b16 %v5284, %v5277
    %v5733 = vpack.c.b16 %v5285, %v5278
    %v5734 = vpack.c.b16 %v5286, %v5279
    %6183 = vmatpush.bf16.msra.mxu0 %v5336
    %6184 = vmatpush.bf16.msra.mxu0 %v5329
    %6185 = vmatpush.bf16.msra.mxu0 %v5322
    %6186 = vmatpush.bf16.msra.mxu0 %v5315
    %6187 = vmatpush.bf16.msra.mxu0 %v5308
    %6188 = vmatpush.bf16.msra.mxu0 %v5301
    %6189 = vmatpush.bf16.msra.mxu0 %v5294
    %6190 = vmatpush.bf16.msra.mxu0 %v5287
    %6191 = vmatmul.bf16.gmra.mxu0 %v3343
    %v6192 = vpop.f32.mrf.mxu0
    %v6193 = vadd.f32 %v3865, %v6192
    %v6194 = vpop.f32.mrf.mxu0
    %6195 = vdwg.mxu0
    %6196 = vmatpush.bf16.msra.mxu0 %v5392
    %6197 = vmatpush.bf16.msra.mxu0 %v5385
    %6198 = vmatpush.bf16.msra.mxu0 %v5378
    %6199 = vmatpush.bf16.msra.mxu0 %v5371
    %6200 = vmatpush.bf16.msra.mxu0 %v5364
    %6201 = vmatpush.bf16.msra.mxu0 %v5357
    %6202 = vmatpush.bf16.msra.mxu0 %v5350
    %6203 = vmatpush.bf16.msra.mxu0 %v5343
    %6204 = vmatmul.bf16.gmra.mxu0 %v3344
    %v6205 = vpop.f32.mrf.mxu0
    %v6206 = vadd.f32 %v6193, %v6205
    %v6207 = vpop.f32.mrf.mxu0
    %6208 = vdwg.mxu0
    %6209 = vmatpush.bf16.msra.mxu0 %v5448
    %6210 = vmatpush.bf16.msra.mxu0 %v5441
    %6211 = vmatpush.bf16.msra.mxu0 %v5434
    %6212 = vmatpush.bf16.msra.mxu0 %v5427
    %6213 = vmatpush.bf16.msra.mxu0 %v5420
    %6214 = vmatpush.bf16.msra.mxu0 %v5413
    %6215 = vmatpush.bf16.msra.mxu0 %v5406
    %6216 = vmatpush.bf16.msra.mxu0 %v5399
    %6217 = vmatmul.bf16.gmra.mxu0 %v3345
    %v6218 = vpop.f32.mrf.mxu0
    %v6219 = vadd.f32 %v6206, %v6218
    %v6220 = vpop.f32.mrf.mxu0
    %6221 = vdwg.mxu0
    %6222 = vmatpush.bf16.msra.mxu0 %v5504
    %6223 = vmatpush.bf16.msra.mxu0 %v5497
    %6224 = vmatpush.bf16.msra.mxu0 %v5490
    %6225 = vmatpush.bf16.msra.mxu0 %v5483
    %6226 = vmatpush.bf16.msra.mxu0 %v5476
    %6227 = vmatpush.bf16.msra.mxu0 %v5469
    %6228 = vmatpush.bf16.msra.mxu0 %v5462
    %6229 = vmatpush.bf16.msra.mxu0 %v5455
    %6230 = vmatmul.bf16.gmra.mxu0 %v3346
    %v6231 = vpop.f32.mrf.mxu0
    %v6232 = vadd.f32 %v6219, %v6231
    %v6233 = vpop.f32.mrf.mxu0
    %6234 = vdwg.mxu0
    %6235 = vmatpush.bf16.msra.mxu0 %v5560
    %6236 = vmatpush.bf16.msra.mxu0 %v5553
    %6237 = vmatpush.bf16.msra.mxu0 %v5546
    %6238 = vmatpush.bf16.msra.mxu0 %v5539
    %6239 = vmatpush.bf16.msra.mxu0 %v5532
    %6240 = vmatpush.bf16.msra.mxu0 %v5525
    %6241 = vmatpush.bf16.msra.mxu0 %v5518
    %6242 = vmatpush.bf16.msra.mxu0 %v5511
    %6243 = vmatmul.bf16.gmra.mxu0 %v3347
    %v6244 = vpop.f32.mrf.mxu0
    %v6245 = vadd.f32 %v6232, %v6244
    %v6246 = vpop.f32.mrf.mxu0
    %6247 = vdwg.mxu0
    %6248 = vmatpush.bf16.msra.mxu0 %v5616
    %6249 = vmatpush.bf16.msra.mxu0 %v5609
    %6250 = vmatpush.bf16.msra.mxu0 %v5602
    %6251 = vmatpush.bf16.msra.mxu0 %v5595
    %6252 = vmatpush.bf16.msra.mxu0 %v5588
    %6253 = vmatpush.bf16.msra.mxu0 %v5581
    %6254 = vmatpush.bf16.msra.mxu0 %v5574
    %6255 = vmatpush.bf16.msra.mxu0 %v5567
    %6256 = vmatmul.bf16.gmra.mxu0 %v3348
    %v6257 = vpop.f32.mrf.mxu0
    %v6258 = vadd.f32 %v6245, %v6257
    %v6259 = vpop.f32.mrf.mxu0
    %6260 = vdwg.mxu0
    %6261 = vmatpush.bf16.msra.mxu0 %v5672
    %6262 = vmatpush.bf16.msra.mxu0 %v5665
    %6263 = vmatpush.bf16.msra.mxu0 %v5658
    %6264 = vmatpush.bf16.msra.mxu0 %v5651
    %6265 = vmatpush.bf16.msra.mxu0 %v5644
    %6266 = vmatpush.bf16.msra.mxu0 %v5637
    %6267 = vmatpush.bf16.msra.mxu0 %v5630
    %6268 = vmatpush.bf16.msra.mxu0 %v5623
    %6269 = vmatmul.bf16.gmra.mxu0 %v3349
    %v6270 = vpop.f32.mrf.mxu0
    %v6271 = vadd.f32 %v6258, %v6270
    %v6272 = vpop.f32.mrf.mxu0
    %6273 = vdwg.mxu0
    %6274 = vmatpush.bf16.msra.mxu0 %v5728
    %6275 = vmatpush.bf16.msra.mxu0 %v5721
    %6276 = vmatpush.bf16.msra.mxu0 %v5714
    %6277 = vmatpush.bf16.msra.mxu0 %v5707
    %6278 = vmatpush.bf16.msra.mxu0 %v5700
    %6279 = vmatpush.bf16.msra.mxu0 %v5693
    %6280 = vmatpush.bf16.msra.mxu0 %v5686
    %6281 = vmatpush.bf16.msra.mxu0 %v5679
    %6282 = vmatmul.bf16.gmra.mxu0 %v3350
    %v6283 = vpop.f32.mrf.mxu0
    %v6284 = vadd.f32 %v6271, %v6283
    %v6285 = vpop.f32.mrf.mxu0
    %6286 = vdwg.mxu0
    %6287 = vmatpush.bf16.msra.mxu0 %v5337
    %6288 = vmatpush.bf16.msra.mxu0 %v5330
    %6289 = vmatpush.bf16.msra.mxu0 %v5323
    %6290 = vmatpush.bf16.msra.mxu0 %v5316
    %6291 = vmatpush.bf16.msra.mxu0 %v5309
    %6292 = vmatpush.bf16.msra.mxu0 %v5302
    %6293 = vmatpush.bf16.msra.mxu0 %v5295
    %6294 = vmatpush.bf16.msra.mxu0 %v5288
    %6295 = vmatmul.bf16.gmra.mxu0 %v3343
    %v6296 = vpop.f32.mrf.mxu0
    %v6297 = vadd.f32 %v3866, %v6296
    %v6298 = vpop.f32.mrf.mxu0
    %6299 = vdwg.mxu0
    %6300 = vmatpush.bf16.msra.mxu0 %v5393
    %6301 = vmatpush.bf16.msra.mxu0 %v5386
    %6302 = vmatpush.bf16.msra.mxu0 %v5379
    %6303 = vmatpush.bf16.msra.mxu0 %v5372
    %6304 = vmatpush.bf16.msra.mxu0 %v5365
    %6305 = vmatpush.bf16.msra.mxu0 %v5358
    %6306 = vmatpush.bf16.msra.mxu0 %v5351
    %6307 = vmatpush.bf16.msra.mxu0 %v5344
    %6308 = vmatmul.bf16.gmra.mxu0 %v3344
    %v6309 = vpop.f32.mrf.mxu0
    %v6310 = vadd.f32 %v6297, %v6309
    %v6311 = vpop.f32.mrf.mxu0
    %6312 = vdwg.mxu0
    %6313 = vmatpush.bf16.msra.mxu0 %v5449
    %6314 = vmatpush.bf16.msra.mxu0 %v5442
    %6315 = vmatpush.bf16.msra.mxu0 %v5435
    %6316 = vmatpush.bf16.msra.mxu0 %v5428
    %6317 = vmatpush.bf16.msra.mxu0 %v5421
    %6318 = vmatpush.bf16.msra.mxu0 %v5414
    %6319 = vmatpush.bf16.msra.mxu0 %v5407
    %6320 = vmatpush.bf16.msra.mxu0 %v5400
    %6321 = vmatmul.bf16.gmra.mxu0 %v3345
    %v6322 = vpop.f32.mrf.mxu0
    %v6323 = vadd.f32 %v6310, %v6322
    %v6324 = vpop.f32.mrf.mxu0
    %6325 = vdwg.mxu0
    %6326 = vmatpush.bf16.msra.mxu0 %v5505
    %6327 = vmatpush.bf16.msra.mxu0 %v5498
    %6328 = vmatpush.bf16.msra.mxu0 %v5491
    %6329 = vmatpush.bf16.msra.mxu0 %v5484
    %6330 = vmatpush.bf16.msra.mxu0 %v5477
    %6331 = vmatpush.bf16.msra.mxu0 %v5470
    %6332 = vmatpush.bf16.msra.mxu0 %v5463
    %6333 = vmatpush.bf16.msra.mxu0 %v5456
    %6334 = vmatmul.bf16.gmra.mxu0 %v3346
    %v6335 = vpop.f32.mrf.mxu0
    %v6336 = vadd.f32 %v6323, %v6335
    %v6337 = vpop.f32.mrf.mxu0
    %6338 = vdwg.mxu0
    %6339 = vmatpush.bf16.msra.mxu0 %v5561
    %6340 = vmatpush.bf16.msra.mxu0 %v5554
    %6341 = vmatpush.bf16.msra.mxu0 %v5547
    %6342 = vmatpush.bf16.msra.mxu0 %v5540
    %6343 = vmatpush.bf16.msra.mxu0 %v5533
    %6344 = vmatpush.bf16.msra.mxu0 %v5526
    %6345 = vmatpush.bf16.msra.mxu0 %v5519
    %6346 = vmatpush.bf16.msra.mxu0 %v5512
    %6347 = vmatmul.bf16.gmra.mxu0 %v3347
    %v6348 = vpop.f32.mrf.mxu0
    %v6349 = vadd.f32 %v6336, %v6348
    %v6350 = vpop.f32.mrf.mxu0
    %6351 = vdwg.mxu0
    %6352 = vmatpush.bf16.msra.mxu0 %v5617
    %6353 = vmatpush.bf16.msra.mxu0 %v5610
    %6354 = vmatpush.bf16.msra.mxu0 %v5603
    %6355 = vmatpush.bf16.msra.mxu0 %v5596
    %6356 = vmatpush.bf16.msra.mxu0 %v5589
    %6357 = vmatpush.bf16.msra.mxu0 %v5582
    %6358 = vmatpush.bf16.msra.mxu0 %v5575
    %6359 = vmatpush.bf16.msra.mxu0 %v5568
    %6360 = vmatmul.bf16.gmra.mxu0 %v3348
    %v6361 = vpop.f32.mrf.mxu0
    %v6362 = vadd.f32 %v6349, %v6361
    %v6363 = vpop.f32.mrf.mxu0
    %6364 = vdwg.mxu0
    %6365 = vmatpush.bf16.msra.mxu0 %v5673
    %6366 = vmatpush.bf16.msra.mxu0 %v5666
    %6367 = vmatpush.bf16.msra.mxu0 %v5659
    %6368 = vmatpush.bf16.msra.mxu0 %v5652
    %6369 = vmatpush.bf16.msra.mxu0 %v5645
    %6370 = vmatpush.bf16.msra.mxu0 %v5638
    %6371 = vmatpush.bf16.msra.mxu0 %v5631
    %6372 = vmatpush.bf16.msra.mxu0 %v5624
    %6373 = vmatmul.bf16.gmra.mxu0 %v3349
    %v6374 = vpop.f32.mrf.mxu0
    %v6375 = vadd.f32 %v6362, %v6374
    %v6376 = vpop.f32.mrf.mxu0
    %6377 = vdwg.mxu0
    %6378 = vmatpush.bf16.msra.mxu0 %v5729
    %6379 = vmatpush.bf16.msra.mxu0 %v5722
    %6380 = vmatpush.bf16.msra.mxu0 %v5715
    %6381 = vmatpush.bf16.msra.mxu0 %v5708
    %6382 = vmatpush.bf16.msra.mxu0 %v5701
    %6383 = vmatpush.bf16.msra.mxu0 %v5694
    %6384 = vmatpush.bf16.msra.mxu0 %v5687
    %6385 = vmatpush.bf16.msra.mxu0 %v5680
    %6386 = vmatmul.bf16.gmra.mxu0 %v3350
    %v6387 = vpop.f32.mrf.mxu0
    %v6388 = vadd.f32 %v6375, %v6387
    %v6389 = vpop.f32.mrf.mxu0
    %6390 = vdwg.mxu0
    %6391 = vmatpush.bf16.msra.mxu0 %v5338
    %6392 = vmatpush.bf16.msra.mxu0 %v5331
    %6393 = vmatpush.bf16.msra.mxu0 %v5324
    %6394 = vmatpush.bf16.msra.mxu0 %v5317
    %6395 = vmatpush.bf16.msra.mxu0 %v5310
    %6396 = vmatpush.bf16.msra.mxu0 %v5303
    %6397 = vmatpush.bf16.msra.mxu0 %v5296
    %6398 = vmatpush.bf16.msra.mxu0 %v5289
    %6399 = vmatmul.bf16.gmra.mxu0 %v3343
    %v6400 = vpop.f32.mrf.mxu0
    %v6401 = vadd.f32 %v3867, %v6400
    %v6402 = vpop.f32.mrf.mxu0
    %6403 = vdwg.mxu0
    %6404 = vmatpush.bf16.msra.mxu0 %v5394
    %6405 = vmatpush.bf16.msra.mxu0 %v5387
    %6406 = vmatpush.bf16.msra.mxu0 %v5380
    %6407 = vmatpush.bf16.msra.mxu0 %v5373
    %6408 = vmatpush.bf16.msra.mxu0 %v5366
    %6409 = vmatpush.bf16.msra.mxu0 %v5359
    %6410 = vmatpush.bf16.msra.mxu0 %v5352
    %6411 = vmatpush.bf16.msra.mxu0 %v5345
    %6412 = vmatmul.bf16.gmra.mxu0 %v3344
    %v6413 = vpop.f32.mrf.mxu0
    %v6414 = vadd.f32 %v6401, %v6413
    %v6415 = vpop.f32.mrf.mxu0
    %6416 = vdwg.mxu0
    %6417 = vmatpush.bf16.msra.mxu0 %v5450
    %6418 = vmatpush.bf16.msra.mxu0 %v5443
    %6419 = vmatpush.bf16.msra.mxu0 %v5436
    %6420 = vmatpush.bf16.msra.mxu0 %v5429
    %6421 = vmatpush.bf16.msra.mxu0 %v5422
    %6422 = vmatpush.bf16.msra.mxu0 %v5415
    %6423 = vmatpush.bf16.msra.mxu0 %v5408
    %6424 = vmatpush.bf16.msra.mxu0 %v5401
    %6425 = vmatmul.bf16.gmra.mxu0 %v3345
    %v6426 = vpop.f32.mrf.mxu0
    %v6427 = vadd.f32 %v6414, %v6426
    %v6428 = vpop.f32.mrf.mxu0
    %6429 = vdwg.mxu0
    %6430 = vmatpush.bf16.msra.mxu0 %v5506
    %6431 = vmatpush.bf16.msra.mxu0 %v5499
    %6432 = vmatpush.bf16.msra.mxu0 %v5492
    %6433 = vmatpush.bf16.msra.mxu0 %v5485
    %6434 = vmatpush.bf16.msra.mxu0 %v5478
    %6435 = vmatpush.bf16.msra.mxu0 %v5471
    %6436 = vmatpush.bf16.msra.mxu0 %v5464
    %6437 = vmatpush.bf16.msra.mxu0 %v5457
    %6438 = vmatmul.bf16.gmra.mxu0 %v3346
    %v6439 = vpop.f32.mrf.mxu0
    %v6440 = vadd.f32 %v6427, %v6439
    %v6441 = vpop.f32.mrf.mxu0
    %6442 = vdwg.mxu0
    %6443 = vmatpush.bf16.msra.mxu0 %v5562
    %6444 = vmatpush.bf16.msra.mxu0 %v5555
    %6445 = vmatpush.bf16.msra.mxu0 %v5548
    %6446 = vmatpush.bf16.msra.mxu0 %v5541
    %6447 = vmatpush.bf16.msra.mxu0 %v5534
    %6448 = vmatpush.bf16.msra.mxu0 %v5527
    %6449 = vmatpush.bf16.msra.mxu0 %v5520
    %6450 = vmatpush.bf16.msra.mxu0 %v5513
    %6451 = vmatmul.bf16.gmra.mxu0 %v3347
    %v6452 = vpop.f32.mrf.mxu0
    %v6453 = vadd.f32 %v6440, %v6452
    %v6454 = vpop.f32.mrf.mxu0
    %6455 = vdwg.mxu0
    %6456 = vmatpush.bf16.msra.mxu0 %v5618
    %6457 = vmatpush.bf16.msra.mxu0 %v5611
    %6458 = vmatpush.bf16.msra.mxu0 %v5604
    %6459 = vmatpush.bf16.msra.mxu0 %v5597
    %6460 = vmatpush.bf16.msra.mxu0 %v5590
    %6461 = vmatpush.bf16.msra.mxu0 %v5583
    %6462 = vmatpush.bf16.msra.mxu0 %v5576
    %6463 = vmatpush.bf16.msra.mxu0 %v5569
    %6464 = vmatmul.bf16.gmra.mxu0 %v3348
    %v6465 = vpop.f32.mrf.mxu0
    %v6466 = vadd.f32 %v6453, %v6465
    %v6467 = vpop.f32.mrf.mxu0
    %6468 = vdwg.mxu0
    %6469 = vmatpush.bf16.msra.mxu0 %v5674
    %6470 = vmatpush.bf16.msra.mxu0 %v5667
    %6471 = vmatpush.bf16.msra.mxu0 %v5660
    %6472 = vmatpush.bf16.msra.mxu0 %v5653
    %6473 = vmatpush.bf16.msra.mxu0 %v5646
    %6474 = vmatpush.bf16.msra.mxu0 %v5639
    %6475 = vmatpush.bf16.msra.mxu0 %v5632
    %6476 = vmatpush.bf16.msra.mxu0 %v5625
    %6477 = vmatmul.bf16.gmra.mxu0 %v3349
    %v6478 = vpop.f32.mrf.mxu0
    %v6479 = vadd.f32 %v6466, %v6478
    %v6480 = vpop.f32.mrf.mxu0
    %6481 = vdwg.mxu0
    %6482 = vmatpush.bf16.msra.mxu0 %v5730
    %6483 = vmatpush.bf16.msra.mxu0 %v5723
    %6484 = vmatpush.bf16.msra.mxu0 %v5716
    %6485 = vmatpush.bf16.msra.mxu0 %v5709
    %6486 = vmatpush.bf16.msra.mxu0 %v5702
    %6487 = vmatpush.bf16.msra.mxu0 %v5695
    %6488 = vmatpush.bf16.msra.mxu0 %v5688
    %6489 = vmatpush.bf16.msra.mxu0 %v5681
    %6490 = vmatmul.bf16.gmra.mxu0 %v3350
    %v6491 = vpop.f32.mrf.mxu0
    %v6492 = vadd.f32 %v6479, %v6491
    %v6493 = vpop.f32.mrf.mxu0
    %6494 = vdwg.mxu0
    %6495 = vmatpush.bf16.msra.mxu0 %v5339
    %6496 = vmatpush.bf16.msra.mxu0 %v5332
    %6497 = vmatpush.bf16.msra.mxu0 %v5325
    %6498 = vmatpush.bf16.msra.mxu0 %v5318
    %6499 = vmatpush.bf16.msra.mxu0 %v5311
    %6500 = vmatpush.bf16.msra.mxu0 %v5304
    %6501 = vmatpush.bf16.msra.mxu0 %v5297
    %6502 = vmatpush.bf16.msra.mxu0 %v5290
    %6503 = vmatmul.bf16.gmra.mxu0 %v3343
    %v6504 = vpop.f32.mrf.mxu0
    %v6505 = vadd.f32 %v3868, %v6504
    %v6506 = vpop.f32.mrf.mxu0
    %6507 = vdwg.mxu0
    %6508 = vmatpush.bf16.msra.mxu0 %v5395
    %6509 = vmatpush.bf16.msra.mxu0 %v5388
    %6510 = vmatpush.bf16.msra.mxu0 %v5381
    %6511 = vmatpush.bf16.msra.mxu0 %v5374
    %6512 = vmatpush.bf16.msra.mxu0 %v5367
    %6513 = vmatpush.bf16.msra.mxu0 %v5360
    %6514 = vmatpush.bf16.msra.mxu0 %v5353
    %6515 = vmatpush.bf16.msra.mxu0 %v5346
    %6516 = vmatmul.bf16.gmra.mxu0 %v3344
    %v6517 = vpop.f32.mrf.mxu0
    %v6518 = vadd.f32 %v6505, %v6517
    %v6519 = vpop.f32.mrf.mxu0
    %6520 = vdwg.mxu0
    %6521 = vmatpush.bf16.msra.mxu0 %v5451
    %6522 = vmatpush.bf16.msra.mxu0 %v5444
    %6523 = vmatpush.bf16.msra.mxu0 %v5437
    %6524 = vmatpush.bf16.msra.mxu0 %v5430
    %6525 = vmatpush.bf16.msra.mxu0 %v5423
    %6526 = vmatpush.bf16.msra.mxu0 %v5416
    %6527 = vmatpush.bf16.msra.mxu0 %v5409
    %6528 = vmatpush.bf16.msra.mxu0 %v5402
    %6529 = vmatmul.bf16.gmra.mxu0 %v3345
    %v6530 = vpop.f32.mrf.mxu0
    %v6531 = vadd.f32 %v6518, %v6530
    %v6532 = vpop.f32.mrf.mxu0
    %6533 = vdwg.mxu0
    %6534 = vmatpush.bf16.msra.mxu0 %v5507
    %6535 = vmatpush.bf16.msra.mxu0 %v5500
    %6536 = vmatpush.bf16.msra.mxu0 %v5493
    %6537 = vmatpush.bf16.msra.mxu0 %v5486
    %6538 = vmatpush.bf16.msra.mxu0 %v5479
    %6539 = vmatpush.bf16.msra.mxu0 %v5472
    %6540 = vmatpush.bf16.msra.mxu0 %v5465
    %6541 = vmatpush.bf16.msra.mxu0 %v5458
    %6542 = vmatmul.bf16.gmra.mxu0 %v3346
    %v6543 = vpop.f32.mrf.mxu0
    %v6544 = vadd.f32 %v6531, %v6543
    %v6545 = vpop.f32.mrf.mxu0
    %6546 = vdwg.mxu0
    %6547 = vmatpush.bf16.msra.mxu0 %v5563
    %6548 = vmatpush.bf16.msra.mxu0 %v5556
    %6549 = vmatpush.bf16.msra.mxu0 %v5549
    %6550 = vmatpush.bf16.msra.mxu0 %v5542
    %6551 = vmatpush.bf16.msra.mxu0 %v5535
    %6552 = vmatpush.bf16.msra.mxu0 %v5528
    %6553 = vmatpush.bf16.msra.mxu0 %v5521
    %6554 = vmatpush.bf16.msra.mxu0 %v5514
    %6555 = vmatmul.bf16.gmra.mxu0 %v3347
    %v6556 = vpop.f32.mrf.mxu0
    %v6557 = vadd.f32 %v6544, %v6556
    %v6558 = vpop.f32.mrf.mxu0
    %6559 = vdwg.mxu0
    %6560 = vmatpush.bf16.msra.mxu0 %v5619
    %6561 = vmatpush.bf16.msra.mxu0 %v5612
    %6562 = vmatpush.bf16.msra.mxu0 %v5605
    %6563 = vmatpush.bf16.msra.mxu0 %v5598
    %6564 = vmatpush.bf16.msra.mxu0 %v5591
    %6565 = vmatpush.bf16.msra.mxu0 %v5584
    %6566 = vmatpush.bf16.msra.mxu0 %v5577
    %6567 = vmatpush.bf16.msra.mxu0 %v5570
    %6568 = vmatmul.bf16.gmra.mxu0 %v3348
    %v6569 = vpop.f32.mrf.mxu0
    %v6570 = vadd.f32 %v6557, %v6569
    %v6571 = vpop.f32.mrf.mxu0
    %6572 = vdwg.mxu0
    %6573 = vmatpush.bf16.msra.mxu0 %v5675
    %6574 = vmatpush.bf16.msra.mxu0 %v5668
    %6575 = vmatpush.bf16.msra.mxu0 %v5661
    %6576 = vmatpush.bf16.msra.mxu0 %v5654
    %6577 = vmatpush.bf16.msra.mxu0 %v5647
    %6578 = vmatpush.bf16.msra.mxu0 %v5640
    %6579 = vmatpush.bf16.msra.mxu0 %v5633
    %6580 = vmatpush.bf16.msra.mxu0 %v5626
    %6581 = vmatmul.bf16.gmra.mxu0 %v3349
    %v6582 = vpop.f32.mrf.mxu0
    %v6583 = vadd.f32 %v6570, %v6582
    %v6584 = vpop.f32.mrf.mxu0
    %6585 = vdwg.mxu0
    %6586 = vmatpush.bf16.msra.mxu0 %v5731
    %6587 = vmatpush.bf16.msra.mxu0 %v5724
    %6588 = vmatpush.bf16.msra.mxu0 %v5717
    %6589 = vmatpush.bf16.msra.mxu0 %v5710
    %6590 = vmatpush.bf16.msra.mxu0 %v5703
    %6591 = vmatpush.bf16.msra.mxu0 %v5696
    %6592 = vmatpush.bf16.msra.mxu0 %v5689
    %6593 = vmatpush.bf16.msra.mxu0 %v5682
    %6594 = vmatmul.bf16.gmra.mxu0 %v3350
    %v6595 = vpop.f32.mrf.mxu0
    %v6596 = vadd.f32 %v6583, %v6595
    %v6597 = vpop.f32.mrf.mxu0
    %6598 = vdwg.mxu0
    %6599 = vmatpush.bf16.msra.mxu0 %v5340
    %6600 = vmatpush.bf16.msra.mxu0 %v5333
    %6601 = vmatpush.bf16.msra.mxu0 %v5326
    %6602 = vmatpush.bf16.msra.mxu0 %v5319
    %6603 = vmatpush.bf16.msra.mxu0 %v5312
    %6604 = vmatpush.bf16.msra.mxu0 %v5305
    %6605 = vmatpush.bf16.msra.mxu0 %v5298
    %6606 = vmatpush.bf16.msra.mxu0 %v5291
    %6607 = vmatmul.bf16.gmra.mxu0 %v3343
    %v6608 = vpop.f32.mrf.mxu0
    %v6609 = vadd.f32 %v3869, %v6608
    %v6610 = vpop.f32.mrf.mxu0
    %6611 = vdwg.mxu0
    %6612 = vmatpush.bf16.msra.mxu0 %v5396
    %6613 = vmatpush.bf16.msra.mxu0 %v5389
    %6614 = vmatpush.bf16.msra.mxu0 %v5382
    %6615 = vmatpush.bf16.msra.mxu0 %v5375
    %6616 = vmatpush.bf16.msra.mxu0 %v5368
    %6617 = vmatpush.bf16.msra.mxu0 %v5361
    %6618 = vmatpush.bf16.msra.mxu0 %v5354
    %6619 = vmatpush.bf16.msra.mxu0 %v5347
    %6620 = vmatmul.bf16.gmra.mxu0 %v3344
    %v6621 = vpop.f32.mrf.mxu0
    %v6622 = vadd.f32 %v6609, %v6621
    %v6623 = vpop.f32.mrf.mxu0
    %6624 = vdwg.mxu0
    %6625 = vmatpush.bf16.msra.mxu0 %v5452
    %6626 = vmatpush.bf16.msra.mxu0 %v5445
    %6627 = vmatpush.bf16.msra.mxu0 %v5438
    %6628 = vmatpush.bf16.msra.mxu0 %v5431
    %6629 = vmatpush.bf16.msra.mxu0 %v5424
    %6630 = vmatpush.bf16.msra.mxu0 %v5417
    %6631 = vmatpush.bf16.msra.mxu0 %v5410
    %6632 = vmatpush.bf16.msra.mxu0 %v5403
    %6633 = vmatmul.bf16.gmra.mxu0 %v3345
    %v6634 = vpop.f32.mrf.mxu0
    %v6635 = vadd.f32 %v6622, %v6634
    %v6636 = vpop.f32.mrf.mxu0
    %6637 = vdwg.mxu0
    %6638 = vmatpush.bf16.msra.mxu0 %v5508
    %6639 = vmatpush.bf16.msra.mxu0 %v5501
    %6640 = vmatpush.bf16.msra.mxu0 %v5494
    %6641 = vmatpush.bf16.msra.mxu0 %v5487
    %6642 = vmatpush.bf16.msra.mxu0 %v5480
    %6643 = vmatpush.bf16.msra.mxu0 %v5473
    %6644 = vmatpush.bf16.msra.mxu0 %v5466
    %6645 = vmatpush.bf16.msra.mxu0 %v5459
    %6646 = vmatmul.bf16.gmra.mxu0 %v3346
    %v6647 = vpop.f32.mrf.mxu0
    %v6648 = vadd.f32 %v6635, %v6647
    %v6649 = vpop.f32.mrf.mxu0
    %6650 = vdwg.mxu0
    %6651 = vmatpush.bf16.msra.mxu0 %v5564
    %6652 = vmatpush.bf16.msra.mxu0 %v5557
    %6653 = vmatpush.bf16.msra.mxu0 %v5550
    %6654 = vmatpush.bf16.msra.mxu0 %v5543
    %6655 = vmatpush.bf16.msra.mxu0 %v5536
    %6656 = vmatpush.bf16.msra.mxu0 %v5529
    %6657 = vmatpush.bf16.msra.mxu0 %v5522
    %6658 = vmatpush.bf16.msra.mxu0 %v5515
    %6659 = vmatmul.bf16.gmra.mxu0 %v3347
    %v6660 = vpop.f32.mrf.mxu0
    %v6661 = vadd.f32 %v6648, %v6660
    %v6662 = vpop.f32.mrf.mxu0
    %6663 = vdwg.mxu0
    %6664 = vmatpush.bf16.msra.mxu0 %v5620
    %6665 = vmatpush.bf16.msra.mxu0 %v5613
    %6666 = vmatpush.bf16.msra.mxu0 %v5606
    %6667 = vmatpush.bf16.msra.mxu0 %v5599
    %6668 = vmatpush.bf16.msra.mxu0 %v5592
    %6669 = vmatpush.bf16.msra.mxu0 %v5585
    %6670 = vmatpush.bf16.msra.mxu0 %v5578
    %6671 = vmatpush.bf16.msra.mxu0 %v5571
    %6672 = vmatmul.bf16.gmra.mxu0 %v3348
    %v6673 = vpop.f32.mrf.mxu0
    %v6674 = vadd.f32 %v6661, %v6673
    %v6675 = vpop.f32.mrf.mxu0
    %6676 = vdwg.mxu0
    %6677 = vmatpush.bf16.msra.mxu0 %v5676
    %6678 = vmatpush.bf16.msra.mxu0 %v5669
    %6679 = vmatpush.bf16.msra.mxu0 %v5662
    %6680 = vmatpush.bf16.msra.mxu0 %v5655
    %6681 = vmatpush.bf16.msra.mxu0 %v5648
    %6682 = vmatpush.bf16.msra.mxu0 %v5641
    %6683 = vmatpush.bf16.msra.mxu0 %v5634
    %6684 = vmatpush.bf16.msra.mxu0 %v5627
    %6685 = vmatmul.bf16.gmra.mxu0 %v3349
    %v6686 = vpop.f32.mrf.mxu0
    %v6687 = vadd.f32 %v6674, %v6686
    %v6688 = vpop.f32.mrf.mxu0
    %6689 = vdwg.mxu0
    %6690 = vmatpush.bf16.msra.mxu0 %v5732
    %6691 = vmatpush.bf16.msra.mxu0 %v5725
    %6692 = vmatpush.bf16.msra.mxu0 %v5718
    %6693 = vmatpush.bf16.msra.mxu0 %v5711
    %6694 = vmatpush.bf16.msra.mxu0 %v5704
    %6695 = vmatpush.bf16.msra.mxu0 %v5697
    %6696 = vmatpush.bf16.msra.mxu0 %v5690
    %6697 = vmatpush.bf16.msra.mxu0 %v5683
    %6698 = vmatmul.bf16.gmra.mxu0 %v3350
    %v6699 = vpop.f32.mrf.mxu0
    %v6700 = vadd.f32 %v6687, %v6699
    %v6701 = vpop.f32.mrf.mxu0
    %6702 = vdwg.mxu0
    %6703 = vmatpush.bf16.msra.mxu0 %v5341
    %6704 = vmatpush.bf16.msra.mxu0 %v5334
    %6705 = vmatpush.bf16.msra.mxu0 %v5327
    %6706 = vmatpush.bf16.msra.mxu0 %v5320
    %6707 = vmatpush.bf16.msra.mxu0 %v5313
    %6708 = vmatpush.bf16.msra.mxu0 %v5306
    %6709 = vmatpush.bf16.msra.mxu0 %v5299
    %6710 = vmatpush.bf16.msra.mxu0 %v5292
    %6711 = vmatmul.bf16.gmra.mxu0 %v3343
    %v6712 = vpop.f32.mrf.mxu0
    %v6713 = vadd.f32 %v3870, %v6712
    %v6714 = vpop.f32.mrf.mxu0
    %6715 = vdwg.mxu0
    %6716 = vmatpush.bf16.msra.mxu0 %v5397
    %6717 = vmatpush.bf16.msra.mxu0 %v5390
    %6718 = vmatpush.bf16.msra.mxu0 %v5383
    %6719 = vmatpush.bf16.msra.mxu0 %v5376
    %6720 = vmatpush.bf16.msra.mxu0 %v5369
    %6721 = vmatpush.bf16.msra.mxu0 %v5362
    %6722 = vmatpush.bf16.msra.mxu0 %v5355
    %6723 = vmatpush.bf16.msra.mxu0 %v5348
    %6724 = vmatmul.bf16.gmra.mxu0 %v3344
    %v6725 = vpop.f32.mrf.mxu0
    %v6726 = vadd.f32 %v6713, %v6725
    %v6727 = vpop.f32.mrf.mxu0
    %6728 = vdwg.mxu0
    %6729 = vmatpush.bf16.msra.mxu0 %v5453
    %6730 = vmatpush.bf16.msra.mxu0 %v5446
    %6731 = vmatpush.bf16.msra.mxu0 %v5439
    %6732 = vmatpush.bf16.msra.mxu0 %v5432
    %6733 = vmatpush.bf16.msra.mxu0 %v5425
    %6734 = vmatpush.bf16.msra.mxu0 %v5418
    %6735 = vmatpush.bf16.msra.mxu0 %v5411
    %6736 = vmatpush.bf16.msra.mxu0 %v5404
    %6737 = vmatmul.bf16.gmra.mxu0 %v3345
    %v6738 = vpop.f32.mrf.mxu0
    %v6739 = vadd.f32 %v6726, %v6738
    %v6740 = vpop.f32.mrf.mxu0
    %6741 = vdwg.mxu0
    %6742 = vmatpush.bf16.msra.mxu0 %v5509
    %6743 = vmatpush.bf16.msra.mxu0 %v5502
    %6744 = vmatpush.bf16.msra.mxu0 %v5495
    %6745 = vmatpush.bf16.msra.mxu0 %v5488
    %6746 = vmatpush.bf16.msra.mxu0 %v5481
    %6747 = vmatpush.bf16.msra.mxu0 %v5474
    %6748 = vmatpush.bf16.msra.mxu0 %v5467
    %6749 = vmatpush.bf16.msra.mxu0 %v5460
    %6750 = vmatmul.bf16.gmra.mxu0 %v3346
    %v6751 = vpop.f32.mrf.mxu0
    %v6752 = vadd.f32 %v6739, %v6751
    %v6753 = vpop.f32.mrf.mxu0
    %6754 = vdwg.mxu0
    %6755 = vmatpush.bf16.msra.mxu0 %v5565
    %6756 = vmatpush.bf16.msra.mxu0 %v5558
    %6757 = vmatpush.bf16.msra.mxu0 %v5551
    %6758 = vmatpush.bf16.msra.mxu0 %v5544
    %6759 = vmatpush.bf16.msra.mxu0 %v5537
    %6760 = vmatpush.bf16.msra.mxu0 %v5530
    %6761 = vmatpush.bf16.msra.mxu0 %v5523
    %6762 = vmatpush.bf16.msra.mxu0 %v5516
    %6763 = vmatmul.bf16.gmra.mxu0 %v3347
    %v6764 = vpop.f32.mrf.mxu0
    %v6765 = vadd.f32 %v6752, %v6764
    %v6766 = vpop.f32.mrf.mxu0
    %6767 = vdwg.mxu0
    %6768 = vmatpush.bf16.msra.mxu0 %v5621
    %6769 = vmatpush.bf16.msra.mxu0 %v5614
    %6770 = vmatpush.bf16.msra.mxu0 %v5607
    %6771 = vmatpush.bf16.msra.mxu0 %v5600
    %6772 = vmatpush.bf16.msra.mxu0 %v5593
    %6773 = vmatpush.bf16.msra.mxu0 %v5586
    %6774 = vmatpush.bf16.msra.mxu0 %v5579
    %6775 = vmatpush.bf16.msra.mxu0 %v5572
    %6776 = vmatmul.bf16.gmra.mxu0 %v3348
    %v6777 = vpop.f32.mrf.mxu0
    %v6778 = vadd.f32 %v6765, %v6777
    %v6779 = vpop.f32.mrf.mxu0
    %6780 = vdwg.mxu0
    %6781 = vmatpush.bf16.msra.mxu0 %v5677
    %6782 = vmatpush.bf16.msra.mxu0 %v5670
    %6783 = vmatpush.bf16.msra.mxu0 %v5663
    %6784 = vmatpush.bf16.msra.mxu0 %v5656
    %6785 = vmatpush.bf16.msra.mxu0 %v5649
    %6786 = vmatpush.bf16.msra.mxu0 %v5642
    %6787 = vmatpush.bf16.msra.mxu0 %v5635
    %6788 = vmatpush.bf16.msra.mxu0 %v5628
    %6789 = vmatmul.bf16.gmra.mxu0 %v3349
    %v6790 = vpop.f32.mrf.mxu0
    %v6791 = vadd.f32 %v6778, %v6790
    %v6792 = vpop.f32.mrf.mxu0
    %6793 = vdwg.mxu0
    %6794 = vmatpush.bf16.msra.mxu0 %v5733
    %6795 = vmatpush.bf16.msra.mxu0 %v5726
    %6796 = vmatpush.bf16.msra.mxu0 %v5719
    %6797 = vmatpush.bf16.msra.mxu0 %v5712
    %6798 = vmatpush.bf16.msra.mxu0 %v5705
    %6799 = vmatpush.bf16.msra.mxu0 %v5698
    %6800 = vmatpush.bf16.msra.mxu0 %v5691
    %6801 = vmatpush.bf16.msra.mxu0 %v5684
    %6802 = vmatmul.bf16.gmra.mxu0 %v3350
    %v6803 = vpop.f32.mrf.mxu0
    %v6804 = vadd.f32 %v6791, %v6803
    %v6805 = vpop.f32.mrf.mxu0
    %6806 = vdwg.mxu0
    %6807 = vmatpush.bf16.msra.mxu0 %v5342
    %6808 = vmatpush.bf16.msra.mxu0 %v5335
    %6809 = vmatpush.bf16.msra.mxu0 %v5328
    %6810 = vmatpush.bf16.msra.mxu0 %v5321
    %6811 = vmatpush.bf16.msra.mxu0 %v5314
    %6812 = vmatpush.bf16.msra.mxu0 %v5307
    %6813 = vmatpush.bf16.msra.mxu0 %v5300
    %6814 = vmatpush.bf16.msra.mxu0 %v5293
    %6815 = vmatmul.bf16.gmra.mxu0 %v3343
    %v6816 = vpop.f32.mrf.mxu0
    %v6817 = vadd.f32 %v3871, %v6816
    %v6818 = vpop.f32.mrf.mxu0
    %6819 = vdwg.mxu0
    %6820 = vmatpush.bf16.msra.mxu0 %v5398
    %6821 = vmatpush.bf16.msra.mxu0 %v5391
    %6822 = vmatpush.bf16.msra.mxu0 %v5384
    %6823 = vmatpush.bf16.msra.mxu0 %v5377
    %6824 = vmatpush.bf16.msra.mxu0 %v5370
    %6825 = vmatpush.bf16.msra.mxu0 %v5363
    %6826 = vmatpush.bf16.msra.mxu0 %v5356
    %6827 = vmatpush.bf16.msra.mxu0 %v5349
    %6828 = vmatmul.bf16.gmra.mxu0 %v3344
    %v6829 = vpop.f32.mrf.mxu0
    %v6830 = vadd.f32 %v6817, %v6829
    %v6831 = vpop.f32.mrf.mxu0
    %6832 = vdwg.mxu0
    %6833 = vmatpush.bf16.msra.mxu0 %v5454
    %6834 = vmatpush.bf16.msra.mxu0 %v5447
    %6835 = vmatpush.bf16.msra.mxu0 %v5440
    %6836 = vmatpush.bf16.msra.mxu0 %v5433
    %6837 = vmatpush.bf16.msra.mxu0 %v5426
    %6838 = vmatpush.bf16.msra.mxu0 %v5419
    %6839 = vmatpush.bf16.msra.mxu0 %v5412
    %6840 = vmatpush.bf16.msra.mxu0 %v5405
    %6841 = vmatmul.bf16.gmra.mxu0 %v3345
    %v6842 = vpop.f32.mrf.mxu0
    %v6843 = vadd.f32 %v6830, %v6842
    %v6844 = vpop.f32.mrf.mxu0
    %6845 = vdwg.mxu0
    %6846 = vmatpush.bf16.msra.mxu0 %v5510
    %6847 = vmatpush.bf16.msra.mxu0 %v5503
    %6848 = vmatpush.bf16.msra.mxu0 %v5496
    %6849 = vmatpush.bf16.msra.mxu0 %v5489
    %6850 = vmatpush.bf16.msra.mxu0 %v5482
    %6851 = vmatpush.bf16.msra.mxu0 %v5475
    %6852 = vmatpush.bf16.msra.mxu0 %v5468
    %6853 = vmatpush.bf16.msra.mxu0 %v5461
    %6854 = vmatmul.bf16.gmra.mxu0 %v3346
    %v6855 = vpop.f32.mrf.mxu0
    %v6856 = vadd.f32 %v6843, %v6855
    %v6857 = vpop.f32.mrf.mxu0
    %6858 = vdwg.mxu0
    %6859 = vmatpush.bf16.msra.mxu0 %v5566
    %6860 = vmatpush.bf16.msra.mxu0 %v5559
    %6861 = vmatpush.bf16.msra.mxu0 %v5552
    %6862 = vmatpush.bf16.msra.mxu0 %v5545
    %6863 = vmatpush.bf16.msra.mxu0 %v5538
    %6864 = vmatpush.bf16.msra.mxu0 %v5531
    %6865 = vmatpush.bf16.msra.mxu0 %v5524
    %6866 = vmatpush.bf16.msra.mxu0 %v5517
    %6867 = vmatmul.bf16.gmra.mxu0 %v3347
    %v6868 = vpop.f32.mrf.mxu0
    %v6869 = vadd.f32 %v6856, %v6868
    %v6870 = vpop.f32.mrf.mxu0
    %6871 = vdwg.mxu0
    %6872 = vmatpush.bf16.msra.mxu0 %v5622
    %6873 = vmatpush.bf16.msra.mxu0 %v5615
    %6874 = vmatpush.bf16.msra.mxu0 %v5608
    %6875 = vmatpush.bf16.msra.mxu0 %v5601
    %6876 = vmatpush.bf16.msra.mxu0 %v5594
    %6877 = vmatpush.bf16.msra.mxu0 %v5587
    %6878 = vmatpush.bf16.msra.mxu0 %v5580
    %6879 = vmatpush.bf16.msra.mxu0 %v5573
    %6880 = vmatmul.bf16.gmra.mxu0 %v3348
    %v6881 = vpop.f32.mrf.mxu0
    %v6882 = vadd.f32 %v6869, %v6881
    %v6883 = vpop.f32.mrf.mxu0
    %6884 = vdwg.mxu0
    %6885 = vmatpush.bf16.msra.mxu0 %v5678
    %6886 = vmatpush.bf16.msra.mxu0 %v5671
    %6887 = vmatpush.bf16.msra.mxu0 %v5664
    %6888 = vmatpush.bf16.msra.mxu0 %v5657
    %6889 = vmatpush.bf16.msra.mxu0 %v5650
    %6890 = vmatpush.bf16.msra.mxu0 %v5643
    %6891 = vmatpush.bf16.msra.mxu0 %v5636
    %6892 = vmatpush.bf16.msra.mxu0 %v5629
    %6893 = vmatmul.bf16.gmra.mxu0 %v3349
    %v6894 = vpop.f32.mrf.mxu0
    %v6895 = vadd.f32 %v6882, %v6894
    %v6896 = vpop.f32.mrf.mxu0
    %6897 = vdwg.mxu0
    %6898 = vmatpush.bf16.msra.mxu0 %v5734
    %6899 = vmatpush.bf16.msra.mxu0 %v5727
    %6900 = vmatpush.bf16.msra.mxu0 %v5720
    %6901 = vmatpush.bf16.msra.mxu0 %v5713
    %6902 = vmatpush.bf16.msra.mxu0 %v5706
    %6903 = vmatpush.bf16.msra.mxu0 %v5699
    %6904 = vmatpush.bf16.msra.mxu0 %v5692
    %6905 = vmatpush.bf16.msra.mxu0 %v5685
    %6906 = vmatmul.bf16.gmra.mxu0 %v3350
    %v6907 = vpop.f32.mrf.mxu0
    %v6908 = vadd.f32 %v6895, %v6907
    %v6909 = vpop.f32.mrf.mxu0
    %6910 = vdwg.mxu0
    %v6911 = vtanh.pop %v6284
    %v6912 = vtanh.pop %v6388
    %v6913 = vtanh.pop %v6492
    %v6914 = vtanh.pop %v6596
    %v6915 = vtanh.pop %v6700
    %v6916 = vtanh.pop %v6804
    %v6917 = vtanh.pop %v6908
    %v6925 = vrot.slane %v6912, 6
    %v6926 = vrot.slane %v6913, 4
    %v6927 = vrot.slane %v6914, 2
    %v6928 = vrot.slane %v6916, 6
    %v6929 = vrot.slane %v6917, 4
    %v6930 = vsel %vm399, %v6911, %v6925
    %vm6931 = vcmask 1045508
    %v6932 = vsel %vm6931, %v6926, %v6927
    %vm6933 = vcmask 1043456
    %v6934 = vsel %vm6933, %v6930, %v6932
    %v6935 = vsel %vm399, %v6915, %v6928
    %v6936 = vsel %vm6933, %v6935, %v6929
    %6939 = vst [vmem:[%s11] sm:$0xff] %v6934
    %6940 = vst [vmem:[%s11 + $0x8] sm:$0x3f] %v6936
    // Predicated region
    $region86: #{_gen_forward.1} parent=1 // pred_check
      _
    $region87: #{_gen_forward.1} parent=1 // pred_check_branch
      %6942 = sbr.rel (0) target = $region89
    $region88: #{_gen_forward.1} parent=1 // pred_region
      _
    $region89: #{_gen_forward.1} parent=1 // pred_fallthru
      _
    // Predicated region
    $region90: #{_gen_forward.1} parent=1 // pred_check
      _
    $region91: #{_gen_forward.1} parent=1 // pred_check_branch
      %6944 = sbr.rel (0) target = $region93
    $region92: #{_gen_forward.1} parent=1 // pred_region
      _
    $region93: #{_gen_forward.1} parent=1 // pred_fallthru
      _
    %6945 = vsyncpa [#allocation3], 1
    %6946 = vsyncpa [#allocation5], 1
    %6947 = vsyncpa [#allocation8], 1
    %6948 = vsyncpa [#allocation11], 1
    %6949 = vsyncpa [#allocation14], 1
    %6950 = vsyncpa [#allocation17], 1

</llo_original>
